<compile_context>
chip_gen: v7x
topology: tpu7x:2x2x1
jax: 0.10.0
libtpu: 0.0.40
codegen_flags: <defaults>
</compile_context>

<pallas_src>
import functools
import math

import jax
import jax.numpy as jnp
from jax.experimental import pallas as pl
from jax.experimental.pallas import tpu as pltpu

# ----------------------------- model config ---------------------------------
VOCAB        = 128
D_MODEL      = 128
N_HEADS      = 4
D_HEAD       = 32
D_INNER      = N_HEADS * D_HEAD          # 128
D_FF         = 256
N_ENC_LAYERS = 2
N_DEC_LAYERS = 2
REL_BUCKETS  = 32
REL_MAX_DIST = 128
EPS          = 1e-6
NEG          = -1e9
SCALE        = D_MODEL ** -0.5           # tied-embedding lm-head scaling (T5)
PAD_ID       = 0
DEC_START_ID = 0
IGNORE_INDEX = -100
MAX_ROW_TILE = 256                       # feedback: 128-256 row tiles


# --------------------------- shared math helpers -----------------------------
def _rmsnorm(x, g):
    # T5 LayerNorm: RMSNorm, no mean subtraction, no bias (f32 elementwise).
    return x * jax.lax.rsqrt(jnp.mean(x * x, axis=-1, keepdims=True) + EPS) * g


def _bf16_dot(x, w):
    # bf16 MXU operands, f32 accumulation (w is stored bf16).
    return jnp.dot(x.astype(jnp.bfloat16), w, preferred_element_type=jnp.float32)


def _mha(q, k, v, bias, mask):
    """In-kernel multi-head attention.  q/k/v: (Tq|Tk, H*Dh) f32 slabs,
    bias: (H, Tq, Tk) or None, mask: (1, Tk) additive or None.
    T5 uses no 1/sqrt(d) scaling.  Returns merged (Tq, H*Dh)."""
    outs = []
    for h in range(N_HEADS):
        sl = slice(h * D_HEAD, (h + 1) * D_HEAD)
        s = jax.lax.dot_general(q[:, sl].astype(jnp.bfloat16),
                                k[:, sl].astype(jnp.bfloat16),
                                (((1,), (1,)), ((), ())),
                                preferred_element_type=jnp.float32)
        if bias is not None:
            s = s + bias[h]
        if mask is not None:
            s = s + mask
        m = jnp.max(s, axis=-1, keepdims=True)
        p = jnp.exp(s - m)
        denom = jnp.sum(p, axis=-1, keepdims=True)
        o = jnp.dot(p.astype(jnp.bfloat16), v[:, sl].astype(jnp.bfloat16),
                    preferred_element_type=jnp.float32)
        outs.append(o * pl.reciprocal(denom, approx=True))   # EUP, not VALU
    return jnp.concatenate(outs, axis=-1)


# ------------------------------- kernels -------------------------------------
def _enc_layer_kernel(h_ref, mask_ref, bias_ref, ln_attn_ref, wqkv_ref, wo_ref,
                      ln_ff_ref, wi_ref, wo_ff_ref, o_ref):
    # One full encoder layer for one batch element; all weights VMEM-resident.
    h = h_ref[...]                                          # (Te, D) f32
    # --- self-attention ---
    normed = _rmsnorm(h, ln_attn_ref[...])
    qkv = _bf16_dot(normed, wqkv_ref[...])                  # (Te, 3*Din)
    q = qkv[:, :D_INNER]
    k = qkv[:, D_INNER:2 * D_INNER]
    v = qkv[:, 2 * D_INNER:]
    a = _mha(q, k, v, bias_ref[...], mask_ref[...])
    h = h + _bf16_dot(a, wo_ref[...])
    # --- feed-forward (DenseReluDense) ---
    normed = _rmsnorm(h, ln_ff_ref[...])
    ff = jnp.maximum(_bf16_dot(normed, wi_ref[...]), 0.0)
    h = h + _bf16_dot(ff, wo_ff_ref[...])
    o_ref[...] = h.astype(o_ref.dtype)


def _dec_layer_kernel(hd_ref, ench_ref, encmask_ref, selfbias_ref,
                      enc_final_ln_ref, ln_self_ref, sa_wqkv_ref, sa_wo_ref,
                      ln_cross_ref, ca_wq_ref, ca_wkv_ref, ca_wo_ref,
                      ln_ff_ref, wi_ref, wo_ff_ref, o_ref):
    # One full decoder layer for one batch element (self-attn + cross-attn +
    # FFN).  The encoder final RMSNorm is fused in front of the cross kv proj.
    h = hd_ref[...]                                         # (Td, D) f32
    # --- masked self-attention (rel-pos + causal bias, no padding mask) ---
    normed = _rmsnorm(h, ln_self_ref[...])
    qkv = _bf16_dot(normed, sa_wqkv_ref[...])
    q = qkv[:, :D_INNER]
    k = qkv[:, D_INNER:2 * D_INNER]
    v = qkv[:, 2 * D_INNER:]
    a = _mha(q, k, v, selfbias_ref[...], None)
    h = h + _bf16_dot(a, sa_wo_ref[...])
    # --- cross-attention over (final-normed) encoder states ---
    normed = _rmsnorm(h, ln_cross_ref[...])
    q = _bf16_dot(normed, ca_wq_ref[...])
    enc_h = _rmsnorm(ench_ref[...], enc_final_ln_ref[...])  # fused encoder final LN
    kv = _bf16_dot(enc_h, ca_wkv_ref[...])
    k = kv[:, :D_INNER]
    v = kv[:, D_INNER:]
    a = _mha(q, k, v, None, encmask_ref[...])               # padding mask only
    h = h + _bf16_dot(a, ca_wo_ref[...])
    # --- feed-forward ---
    normed = _rmsnorm(h, ln_ff_ref[...])
    ff = jnp.maximum(_bf16_dot(normed, wi_ref[...]), 0.0)
    h = h + _bf16_dot(ff, wo_ff_ref[...])
    o_ref[...] = h.astype(o_ref.dtype)


def _lm_head_kernel(x_ref, labels_ref, g_ref, embt_ref, logits_ref, nll_ref):
    # Fused: final RMSNorm -> tied-embedding lm head (lane-dense (tb, V)
    # logits) -> per-token cross-entropy (ignore_index = -100).
    x = x_ref[...]
    normed = _rmsnorm(x, g_ref[...]) * SCALE
    logits = _bf16_dot(normed, embt_ref[...])
    logits_ref[...] = logits.astype(logits_ref.dtype)
    m = jnp.max(logits, axis=-1, keepdims=True)
    lse = jnp.log(jnp.sum(jnp.exp(logits - m), axis=-1, keepdims=True)) + m
    labels = labels_ref[...]                                 # (tb, 1) int32
    col = jax.lax.broadcasted_iota(jnp.int32, logits.shape, 1)
    label_logit = jnp.sum(jnp.where(col == labels, logits, 0.0),
                          axis=-1, keepdims=True)
    valid = labels != IGNORE_INDEX
    nll_ref[...] = jnp.where(valid, lse - label_logit, 0.0).astype(nll_ref.dtype)


# ------------------------------ pallas wrappers -------------------------------
def _row_tile(n):
    """Largest multiple-of-8 divisor of n <= MAX_ROW_TILE, preferring >=2 grid
    steps (v7x megacore)."""
    if n % 8 != 0:
        return n
    cap = min(MAX_ROW_TILE, n // 2) if n >= 16 else n
    cap -= cap % 8
    for tb in range(cap, 7, -8):
        if n % tb == 0:
            return tb
    return n


_WEIGHT = lambda shape: pl.BlockSpec(shape, lambda b: (0, 0))   # VMEM-resident


def pallas_encoder_layer(h, mask, bias, lp):
    B, T, D = h.shape
    H = bias.shape[0]
    flops = B * (2 * T * D * 3 * D_INNER + 4 * T * T * D_INNER
                 + 2 * T * D_INNER * D + 4 * T * D * D_FF)
    return pl.pallas_call(
        _enc_layer_kernel,
        out_shape=jax.ShapeDtypeStruct((B, T, D), jnp.float32),
        grid=(B,),
        in_specs=[
            pl.BlockSpec((None, T, D), lambda b: (b, 0, 0)),
            pl.BlockSpec((None, 1, T), lambda b: (b, 0, 0)),
            pl.BlockSpec((H, T, T), lambda b: (0, 0, 0)),
            _WEIGHT((1, D)),
            _WEIGHT((D, 3 * D_INNER)),
            _WEIGHT((D_INNER, D)),
            _WEIGHT((1, D)),
            _WEIGHT((D, D_FF)),
            _WEIGHT((D_FF, D)),
        ],
        out_specs=pl.BlockSpec((None, T, D), lambda b: (b, 0, 0)),
        compiler_params=pltpu.CompilerParams(dimension_semantics=("parallel",)),
        cost_estimate=pl.CostEstimate(
            flops=flops,
            transcendentals=B * (N_HEADS * T * T + 2 * T),
            bytes_accessed=8 * B * T * D + B * 4 * T
            + 4 * H * T * T + 2 * (D * 3 * D_INNER + D_INNER * D + 2 * D * D_FF)),
    )(h, mask, bias, lp["ln_attn"], lp["wqkv"], lp["wo"],
      lp["ln_ff"], lp["wi"], lp["wo_ff"])


def pallas_decoder_layer(hd, enc_h, enc_mask, self_bias, enc_final_ln, lp):
    B, Td, D = hd.shape
    Te = enc_h.shape[1]
    H = self_bias.shape[0]
    flops = B * (2 * Td * D * 3 * D_INNER + 4 * Td * Td * D_INNER
                 + 4 * Td * D_INNER * D + 2 * Td * D * D_INNER
                 + 4 * Te * D * D_INNER + 4 * Td * Te * D_INNER
                 + 4 * Td * D * D_FF)
    return pl.pallas_call(
        _dec_layer_kernel,
        out_shape=jax.ShapeDtypeStruct((B, Td, D), jnp.float32),
        grid=(B,),
        in_specs=[
            pl.BlockSpec((None, Td, D), lambda b: (b, 0, 0)),
            pl.BlockSpec((None, Te, D), lambda b: (b, 0, 0)),
            pl.BlockSpec((None, 1, Te), lambda b: (b, 0, 0)),
            pl.BlockSpec((H, Td, Td), lambda b: (0, 0, 0)),
            _WEIGHT((1, D)),
            _WEIGHT((1, D)),
            _WEIGHT((D, 3 * D_INNER)),
            _WEIGHT((D_INNER, D)),
            _WEIGHT((1, D)),
            _WEIGHT((D, D_INNER)),
            _WEIGHT((D, 2 * D_INNER)),
            _WEIGHT((D_INNER, D)),
            _WEIGHT((1, D)),
            _WEIGHT((D, D_FF)),
            _WEIGHT((D_FF, D)),
        ],
        out_specs=pl.BlockSpec((None, Td, D), lambda b: (b, 0, 0)),
        compiler_params=pltpu.CompilerParams(dimension_semantics=("parallel",)),
        cost_estimate=pl.CostEstimate(
            flops=flops,
            transcendentals=B * (N_HEADS * (Td * Td + Td * Te) + 4 * Td + Te),
            bytes_accessed=8 * B * Td * D + 4 * B * Te * D + 4 * B * Te
            + 4 * H * Td * Td
            + 2 * (D * 3 * D_INNER + 3 * D_INNER * D + 3 * D * D_INNER
                   + 2 * D * D_FF)),
    )(hd, enc_h, enc_mask, self_bias, enc_final_ln, lp["ln_self"],
      lp["sa_wqkv"], lp["sa_wo"], lp["ln_cross"], lp["ca_wq"], lp["ca_wkv"],
      lp["ca_wo"], lp["ln_ff"], lp["wi"], lp["wo_ff"])


def pallas_lm_head(x, labels2d, g, emb_t):
    n, d = x.shape
    v = emb_t.shape[1]
    tb = _row_tile(n)
    logits, nll = pl.pallas_call(
        _lm_head_kernel,
        out_shape=(jax.ShapeDtypeStruct((n, v), jnp.float32),
                   jax.ShapeDtypeStruct((n, 1), jnp.float32)),
        grid=(n // tb,),
        in_specs=[pl.BlockSpec((tb, d), lambda i: (i, 0)),
                  pl.BlockSpec((tb, 1), lambda i: (i, 0)),
                  pl.BlockSpec((1, d), lambda i: (0, 0)),
                  pl.BlockSpec((d, v), lambda i: (0, 0))],
        out_specs=(pl.BlockSpec((tb, v), lambda i: (i, 0)),
                   pl.BlockSpec((tb, 1), lambda i: (i, 0))),
        compiler_params=pltpu.CompilerParams(
            dimension_semantics=("parallel",),
            vmem_limit_bytes=32 * 1024 * 1024),        # guard when V scales up
        cost_estimate=pl.CostEstimate(flops=2 * n * d * v + 4 * n * d,
                                      transcendentals=n * v + n,
                                      bytes_accessed=4 * (n * d + n * v + 2 * n)
                                      + 2 * d * v),
    )(x, labels2d, g, emb_t)
    return logits, nll[:, 0]


# ----------------------- pure-JAX reference backend ---------------------------
# Mirrors the kernels exactly (same bf16 MXU operands, f32 accumulation); the
# only intentional difference is exact division vs. pl.reciprocal(approx=True).
def _ref_mha(q, k, v, bias, mask):
    outs = []
    for h in range(N_HEADS):
        sl = slice(h * D_HEAD, (h + 1) * D_HEAD)
        s = jnp.einsum("qd,kd->qk", q[:, sl].astype(jnp.bfloat16),
                       k[:, sl].astype(jnp.bfloat16),
                       preferred_element_type=jnp.float32)
        if bias is not None:
            s = s + bias[h]
        if mask is not None:
            s = s + mask
        p = jax.nn.softmax(s, axis=-1)
        outs.append(jnp.dot(p.astype(jnp.bfloat16), v[:, sl].astype(jnp.bfloat16),
                            preferred_element_type=jnp.float32))
    return jnp.concatenate(outs, axis=-1)


def ref_encoder_layer(h, mask, bias, lp):
    def one(hb, mb):
        x = _rmsnorm(hb, lp["ln_attn"])
        qkv = _bf16_dot(x, lp["wqkv"])
        q, k, v = (qkv[:, :D_INNER], qkv[:, D_INNER:2 * D_INNER],
                   qkv[:, 2 * D_INNER:])
        hb = hb + _bf16_dot(_ref_mha(q, k, v, bias, mb), lp["wo"])
        x = _rmsnorm(hb, lp["ln_ff"])
        return hb + _bf16_dot(jnp.maximum(_bf16_dot(x, lp["wi"]), 0.0),
                              lp["wo_ff"])
    return jax.vmap(one)(h, mask)


def ref_decoder_layer(hd, enc_h, enc_mask, self_bias, enc_final_ln, lp):
    def one(hb, eb, mb):
        x = _rmsnorm(hb, lp["ln_self"])
        qkv = _bf16_dot(x, lp["sa_wqkv"])
        q, k, v = (qkv[:, :D_INNER], qkv[:, D_INNER:2 * D_INNER],
                   qkv[:, 2 * D_INNER:])
        hb = hb + _bf16_dot(_ref_mha(q, k, v, self_bias, None), lp["sa_wo"])
        x = _rmsnorm(hb, lp["ln_cross"])
        q = _bf16_dot(x, lp["ca_wq"])
        kv = _bf16_dot(_rmsnorm(eb, enc_final_ln), lp["ca_wkv"])
        k, v = kv[:, :D_INNER], kv[:, D_INNER:]
        hb = hb + _bf16_dot(_ref_mha(q, k, v, None, mb), lp["ca_wo"])
        x = _rmsnorm(hb, lp["ln_ff"])
        return hb + _bf16_dot(jnp.maximum(_bf16_dot(x, lp["wi"]), 0.0),
                              lp["wo_ff"])
    return jax.vmap(one)(hd, enc_h, enc_mask)


def ref_lm_head(x, labels2d, g, emb_t):
    normed = _rmsnorm(x, g) * SCALE
    logits = _bf16_dot(normed, emb_t)
    lse = jax.scipy.special.logsumexp(logits, axis=-1, keepdims=True)
    lbl = labels2d[:, 0]
    picked = jnp.take_along_axis(logits, jnp.maximum(lbl, 0)[:, None], axis=-1)
    nll = jnp.where(lbl[:, None] != IGNORE_INDEX, lse - picked, 0.0)
    return logits, nll[:, 0]


# ------------------------------ model plumbing --------------------------------
def _relative_position_bucket(rel_pos, bidirectional, num_buckets, max_distance):
    buckets = jnp.zeros_like(rel_pos)
    if bidirectional:
        num_buckets //= 2
        buckets = buckets + (rel_pos > 0).astype(jnp.int32) * num_buckets
        rel_pos = jnp.abs(rel_pos)
    else:
        rel_pos = -jnp.minimum(rel_pos, 0)
    max_exact = num_buckets // 2
    is_small = rel_pos < max_exact
    rel_large = max_exact + (
        jnp.log(jnp.maximum(rel_pos, 1).astype(jnp.float32) / max_exact)
        / math.log(max_distance / max_exact) * (num_buckets - max_exact)
    ).astype(jnp.int32)
    rel_large = jnp.minimum(rel_large, num_buckets - 1)
    return buckets + jnp.where(is_small, rel_pos, rel_large)


def _position_bias(table, q_len, k_len, bidirectional):
    rel = jnp.arange(k_len)[None, :] - jnp.arange(q_len)[:, None]
    buckets = _relative_position_bucket(rel, bidirectional, REL_BUCKETS, REL_MAX_DIST)
    values = jnp.take(table, buckets, axis=0)            # (q, k, H)
    return jnp.transpose(values, (2, 0, 1))              # (H, q, k)


def _shift_right(labels):
    start = jnp.full((labels.shape[0], 1), DEC_START_ID, labels.dtype)
    shifted = jnp.concatenate([start, labels[:, :-1]], axis=1)
    return jnp.where(shifted == IGNORE_INDEX, PAD_ID, shifted)


def generator_forward(params, input_ids, attention_mask, labels, use_pallas=True):
    """T5-style Generator.forward: returns (loss, logits)."""
    enc_layer = pallas_encoder_layer if use_pallas else ref_encoder_layer
    dec_layer = pallas_decoder_layer if use_pallas else ref_decoder_layer
    lm_head = pallas_lm_head if use_pallas else ref_lm_head

    B, Te = input_ids.shape
    Td = labels.shape[1]
    emb = params["embedding"]

    # ---------------- encoder ----------------
    enc_bias = _position_bias(params["enc_rel_bias"], Te, Te, True)      # (H,Te,Te)
    enc_mask = ((1.0 - attention_mask.astype(jnp.float32)) * NEG).reshape(B, 1, Te)
    h = jnp.take(emb, input_ids, axis=0)                                  # (B,Te,D)
    for lp in params["encoder"]:
        h = enc_layer(h, enc_mask, enc_bias, lp)

    # ---------------- decoder (teacher forcing) ----------------
    dec_ids = _shift_right(labels)
    hd = jnp.take(emb, dec_ids, axis=0)                                   # (B,Td,D)
    causal = jnp.where(jnp.arange(Td)[None, :] > jnp.arange(Td)[:, None], NEG, 0.0)
    dec_bias = _position_bias(params["dec_rel_bias"], Td, Td, False) + causal[None]
    for lp in params["decoder"]:
        hd = dec_layer(hd, h, enc_mask, dec_bias, params["enc_final_ln"], lp)

    # -------- final RMSNorm + tied lm head + cross-entropy (ignore -100) -----
    labels_flat = labels.reshape(B * Td, 1).astype(jnp.int32)
    logits_flat, nll = lm_head(hd.reshape(B * Td, D_MODEL), labels_flat,
                               params["dec_final_ln"], params["emb_t"])
    logits = logits_flat.reshape(B, Td, VOCAB)
    n_valid = jnp.sum((labels_flat[:, 0] != IGNORE_INDEX).astype(jnp.float32))
    loss = jnp.sum(nll) / jnp.maximum(n_valid, 1.0)
    return loss, logits


# ------------------------------- init / main ----------------------------------
def init_params(key):
    keys = iter(jax.random.split(key, 64))
    nk = lambda: next(keys)
    dense = lambda shape, scale=0.05: scale * jax.random.normal(nk(), shape, jnp.float32)
    w = lambda shape: dense(shape).astype(jnp.bfloat16)       # bf16 MXU weights
    ones = lambda: jnp.ones((1, D_MODEL), jnp.float32)        # f32 LN weights
    emb = dense((VOCAB, D_MODEL), 1.0)
    params = {
        "embedding": emb,
        "emb_t": emb.T.astype(jnp.bfloat16),                  # tied lm head (D, V)
        "enc_rel_bias": dense((REL_BUCKETS, N_HEADS), 0.1),
        "dec_rel_bias": dense((REL_BUCKETS, N_HEADS), 0.1),
        "enc_final_ln": ones(),
        "dec_final_ln": ones(),
        "encoder": [],
        "decoder": [],
    }
    for _ in range(N_ENC_LAYERS):
        params["encoder"].append({
            "ln_attn": ones(),
            "wqkv": w((D_MODEL, 3 * D_INNER)),                # pre-concatenated q|k|v
            "wo": w((D_INNER, D_MODEL)),
            "ln_ff": ones(),
            "wi": w((D_MODEL, D_FF)), "wo_ff": w((D_FF, D_MODEL)),
        })
    for _ in range(N_DEC_LAYERS):
        params["decoder"].append({
            "ln_self": ones(),
            "sa_wqkv": w((D_MODEL, 3 * D_INNER)),             # pre-concatenated q|k|v
            "sa_wo": w((D_INNER, D_MODEL)),
            "ln_cross": ones(),
            "ca_wq": w((D_MODEL, D_INNER)),
            "ca_wkv": w((D_MODEL, 2 * D_INNER)),              # pre-concatenated k|v
            "ca_wo": w((D_INNER, D_MODEL)),
            "ln_ff": ones(),
            "wi": w((D_MODEL, D_FF)), "wo_ff": w((D_FF, D_MODEL)),
        })
    return params


if __name__ == "__main__":
    key = jax.random.PRNGKey(0)
    k_params, k_ids, k_labels = jax.random.split(key, 3)

    batch, enc_seq, dec_seq = 2, 16, 8
    params = init_params(k_params)

    input_ids = jax.random.randint(k_ids, (batch, enc_seq), 0, VOCAB, dtype=jnp.int32)
    attention_mask = jnp.ones((batch, enc_seq), jnp.int32).at[1, 12:].set(0)
    labels = jax.random.randint(k_labels, (batch, dec_seq), 0, VOCAB, dtype=jnp.int32)
    labels = labels.at[1, 6:].set(IGNORE_INDEX)              # padded target positions

    fwd = jax.jit(functools.partial(generator_forward, use_pallas=True))
    loss, logits = fwd(params, input_ids, attention_mask, labels)
    loss, logits = jax.block_until_ready((loss, logits))

    ref_loss, ref_logits = generator_forward(params, input_ids, attention_mask,
                                             labels, use_pallas=False)

    # Tolerance accounts for pl.reciprocal(approx=True) in the kernel softmax;
    # everything else (bf16 MXU operands, f32 accumulation) matches the ref.
    assert logits.shape == (batch, dec_seq, VOCAB), logits.shape
    assert jnp.allclose(logits, ref_logits, atol=3e-2, rtol=3e-2), (
        float(jnp.max(jnp.abs(logits - ref_logits))))
    assert jnp.allclose(loss, ref_loss, atol=3e-2, rtol=3e-2), (
        float(loss), float(ref_loss))

    print("KERNEL_OK")
</pallas_src>

<mosaic_0001>
module attributes {stable_mosaic.version = 11 : i64} {
  func.func @_enc_layer_kernel(%arg0: i32, %arg1: memref<1x16x128xf32, #tpu.memory_space<vmem>>, %arg2: memref<1x1x16xf32, #tpu.memory_space<vmem>>, %arg3: memref<4x16x16xf32, #tpu.memory_space<vmem>>, %arg4: memref<1x128xf32, #tpu.memory_space<vmem>>, %arg5: memref<128x384xbf16, #tpu.memory_space<vmem>>, %arg6: memref<128x128xbf16, #tpu.memory_space<vmem>>, %arg7: memref<1x128xf32, #tpu.memory_space<vmem>>, %arg8: memref<128x256xbf16, #tpu.memory_space<vmem>>, %arg9: memref<256x128xbf16, #tpu.memory_space<vmem>>, %arg10: memref<1x16x128xf32, #tpu.memory_space<vmem>>) attributes {dimension_semantics = [#tpu.dimension_semantics<parallel>], iteration_bounds = array<i64: 2>, scalar_prefetch = 0 : i64, scratch_operands = 0 : i64, tpu.core_type = #tpu.core_type<tc>, window_params = [{transform_indices = @transform_0, window_bounds = array<i64: 1, 16, 128>}, {transform_indices = @transform_1, window_bounds = array<i64: 1, 1, 16>}, {pipeline_mode = #tpu.pipeline_mode<synchronous>, transform_indices = @transform_2, window_bounds = array<i64: 4, 16, 16>}, {pipeline_mode = #tpu.pipeline_mode<synchronous>, transform_indices = @transform_3, window_bounds = array<i64: 1, 128>}, {pipeline_mode = #tpu.pipeline_mode<synchronous>, transform_indices = @transform_4, window_bounds = array<i64: 128, 384>}, {pipeline_mode = #tpu.pipeline_mode<synchronous>, transform_indices = @transform_5, window_bounds = array<i64: 128, 128>}, {pipeline_mode = #tpu.pipeline_mode<synchronous>, transform_indices = @transform_6, window_bounds = array<i64: 1, 128>}, {pipeline_mode = #tpu.pipeline_mode<synchronous>, transform_indices = @transform_7, window_bounds = array<i64: 128, 256>}, {pipeline_mode = #tpu.pipeline_mode<synchronous>, transform_indices = @transform_8, window_bounds = array<i64: 256, 128>}, {transform_indices = @transform_9, window_bounds = array<i64: 1, 16, 128>}]} {
    %c0 = arith.constant 0 : index
    %c0_0 = arith.constant 0 : index
    %c0_1 = arith.constant 0 : index
    %0 = vector.load %arg1[%c0, %c0_0, %c0_1] : memref<1x16x128xf32, #tpu.memory_space<vmem>>, vector<1x16x128xf32>
    %1 = vector.shape_cast %0 : vector<1x16x128xf32> to vector<16x128xf32>
    %c0_2 = arith.constant 0 : index
    %c0_3 = arith.constant 0 : index
    %2 = vector.load %arg4[%c0_2, %c0_3] : memref<1x128xf32, #tpu.memory_space<vmem>>, vector<1x128xf32>
    %3 = arith.mulf %1, %1 : vector<16x128xf32>
    %cst = arith.constant dense<0.000000e+00> : vector<16xf32>
    %4 = vector.multi_reduction <add>, %3, %cst [1] : vector<16x128xf32> to vector<16xf32>
    %5 = vector.shape_cast %4 : vector<16xf32> to vector<16x1xf32>
    %cst_4 = arith.constant 1.280000e+02 : f32
    %6 = vector.broadcast %cst_4 : f32 to vector<16x1xf32>
    %7 = arith.divf %5, %6 : vector<16x1xf32>
    %cst_5 = arith.constant 9.99999997E-7 : f32
    %8 = vector.broadcast %cst_5 : f32 to vector<16x1xf32>
    %9 = arith.addf %7, %8 : vector<16x1xf32>
    %10 = math.rsqrt %9 : vector<16x1xf32>
    %11 = vector.broadcast %10 : vector<16x1xf32> to vector<16x128xf32>
    %12 = arith.mulf %1, %11 : vector<16x128xf32>
    %13 = vector.broadcast %2 : vector<1x128xf32> to vector<16x128xf32>
    %14 = arith.mulf %12, %13 : vector<16x128xf32>
    %c0_6 = arith.constant 0 : index
    %c0_7 = arith.constant 0 : index
    %15 = vector.load %arg5[%c0_6, %c0_7] : memref<128x384xbf16, #tpu.memory_space<vmem>>, vector<128x384xbf16>
    %16 = arith.truncf %14 : vector<16x128xf32> to vector<16x128xbf16>
    %cst_8 = arith.constant dense<0.000000e+00> : vector<16x384xf32>
    %17 = tpu.matmul %16, %15, %cst_8 {dimension_numbers = #tpu.dot_dimension_numbers<[1], [0], [0], [1], [0, 0, 1, 1], [], []>} : vector<16x128xbf16>, vector<128x384xbf16>, vector<16x384xf32> -> vector<16x384xf32>
    %18 = vector.extract_strided_slice %17 {offsets = [0, 0], sizes = [16, 128], strides = [1, 1]} : vector<16x384xf32> to vector<16x128xf32>
    %19 = vector.extract_strided_slice %17 {offsets = [0, 128], sizes = [16, 128], strides = [1, 1]} : vector<16x384xf32> to vector<16x128xf32>
    %20 = vector.extract_strided_slice %17 {offsets = [0, 256], sizes = [16, 128], strides = [1, 1]} : vector<16x384xf32> to vector<16x128xf32>
    %c0_9 = arith.constant 0 : index
    %c0_10 = arith.constant 0 : index
    %c0_11 = arith.constant 0 : index
    %21 = vector.load %arg3[%c0_9, %c0_10, %c0_11] : memref<4x16x16xf32, #tpu.memory_space<vmem>>, vector<4x16x16xf32>
    %c0_12 = arith.constant 0 : index
    %c0_13 = arith.constant 0 : index
    %c0_14 = arith.constant 0 : index
    %22 = vector.load %arg2[%c0_12, %c0_13, %c0_14] : memref<1x1x16xf32, #tpu.memory_space<vmem>>, vector<1x1x16xf32>
    %23 = vector.shape_cast %22 : vector<1x1x16xf32> to vector<1x16xf32>
    %24 = vector.extract_strided_slice %18 {offsets = [0, 0], sizes = [16, 32], strides = [1, 1]} : vector<16x128xf32> to vector<16x32xf32>
    %25 = arith.truncf %24 : vector<16x32xf32> to vector<16x32xbf16>
    %26 = vector.extract_strided_slice %19 {offsets = [0, 0], sizes = [16, 32], strides = [1, 1]} : vector<16x128xf32> to vector<16x32xf32>
    %27 = arith.truncf %26 : vector<16x32xf32> to vector<16x32xbf16>
    %cst_15 = arith.constant dense<0.000000e+00> : vector<16x16xf32>
    %28 = tpu.matmul %25, %27, %cst_15 {dimension_numbers = #tpu.dot_dimension_numbers<[1], [1], [0], [0], [0, 0, 1, 0], [], []>} : vector<16x32xbf16>, vector<16x32xbf16>, vector<16x16xf32> -> vector<16x16xf32>
    %29 = vector.extract_strided_slice %21 {offsets = [0, 0, 0], sizes = [1, 16, 16], strides = [1, 1, 1]} : vector<4x16x16xf32> to vector<1x16x16xf32>
    %30 = vector.shape_cast %29 : vector<1x16x16xf32> to vector<16x16xf32>
    %31 = arith.addf %28, %30 : vector<16x16xf32>
    %32 = vector.broadcast %23 : vector<1x16xf32> to vector<16x16xf32>
    %33 = arith.addf %31, %32 : vector<16x16xf32>
    %cst_16 = arith.constant dense<0xFF800000> : vector<16xf32>
    %34 = vector.multi_reduction <maximumf>, %33, %cst_16 [1] : vector<16x16xf32> to vector<16xf32>
    %35 = vector.shape_cast %34 : vector<16xf32> to vector<16x1xf32>
    %36 = vector.broadcast %35 : vector<16x1xf32> to vector<16x16xf32>
    %37 = arith.subf %33, %36 : vector<16x16xf32>
    %38 = math.exp %37 : vector<16x16xf32>
    %cst_17 = arith.constant dense<0.000000e+00> : vector<16xf32>
    %39 = vector.multi_reduction <add>, %38, %cst_17 [1] : vector<16x16xf32> to vector<16xf32>
    %40 = vector.shape_cast %39 : vector<16xf32> to vector<16x1xf32>
    %41 = arith.truncf %38 : vector<16x16xf32> to vector<16x16xbf16>
    %42 = vector.extract_strided_slice %20 {offsets = [0, 0], sizes = [16, 32], strides = [1, 1]} : vector<16x128xf32> to vector<16x32xf32>
    %43 = arith.truncf %42 : vector<16x32xf32> to vector<16x32xbf16>
    %cst_18 = arith.constant dense<0.000000e+00> : vector<16x32xf32>
    %44 = tpu.matmul %41, %43, %cst_18 {dimension_numbers = #tpu.dot_dimension_numbers<[1], [0], [0], [1], [0, 0, 1, 1], [], []>} : vector<16x16xbf16>, vector<16x32xbf16>, vector<16x32xf32> -> vector<16x32xf32>
    %45 = tpu.reciprocal %40 {approx = true} : vector<16x1xf32> -> vector<16x1xf32>
    %46 = vector.broadcast %45 : vector<16x1xf32> to vector<16x32xf32>
    %47 = arith.mulf %44, %46 : vector<16x32xf32>
    %48 = vector.extract_strided_slice %18 {offsets = [0, 32], sizes = [16, 32], strides = [1, 1]} : vector<16x128xf32> to vector<16x32xf32>
    %49 = arith.truncf %48 : vector<16x32xf32> to vector<16x32xbf16>
    %50 = vector.extract_strided_slice %19 {offsets = [0, 32], sizes = [16, 32], strides = [1, 1]} : vector<16x128xf32> to vector<16x32xf32>
    %51 = arith.truncf %50 : vector<16x32xf32> to vector<16x32xbf16>
    %cst_19 = arith.constant dense<0.000000e+00> : vector<16x16xf32>
    %52 = tpu.matmul %49, %51, %cst_19 {dimension_numbers = #tpu.dot_dimension_numbers<[1], [1], [0], [0], [0, 0, 1, 0], [], []>} : vector<16x32xbf16>, vector<16x32xbf16>, vector<16x16xf32> -> vector<16x16xf32>
    %53 = vector.extract_strided_slice %21 {offsets = [1, 0, 0], sizes = [1, 16, 16], strides = [1, 1, 1]} : vector<4x16x16xf32> to vector<1x16x16xf32>
    %54 = vector.shape_cast %53 : vector<1x16x16xf32> to vector<16x16xf32>
    %55 = arith.addf %52, %54 : vector<16x16xf32>
    %56 = vector.broadcast %23 : vector<1x16xf32> to vector<16x16xf32>
    %57 = arith.addf %55, %56 : vector<16x16xf32>
    %cst_20 = arith.constant dense<0xFF800000> : vector<16xf32>
    %58 = vector.multi_reduction <maximumf>, %57, %cst_20 [1] : vector<16x16xf32> to vector<16xf32>
    %59 = vector.shape_cast %58 : vector<16xf32> to vector<16x1xf32>
    %60 = vector.broadcast %59 : vector<16x1xf32> to vector<16x16xf32>
    %61 = arith.subf %57, %60 : vector<16x16xf32>
    %62 = math.exp %61 : vector<16x16xf32>
    %cst_21 = arith.constant dense<0.000000e+00> : vector<16xf32>
    %63 = vector.multi_reduction <add>, %62, %cst_21 [1] : vector<16x16xf32> to vector<16xf32>
    %64 = vector.shape_cast %63 : vector<16xf32> to vector<16x1xf32>
    %65 = arith.truncf %62 : vector<16x16xf32> to vector<16x16xbf16>
    %66 = vector.extract_strided_slice %20 {offsets = [0, 32], sizes = [16, 32], strides = [1, 1]} : vector<16x128xf32> to vector<16x32xf32>
    %67 = arith.truncf %66 : vector<16x32xf32> to vector<16x32xbf16>
    %cst_22 = arith.constant dense<0.000000e+00> : vector<16x32xf32>
    %68 = tpu.matmul %65, %67, %cst_22 {dimension_numbers = #tpu.dot_dimension_numbers<[1], [0], [0], [1], [0, 0, 1, 1], [], []>} : vector<16x16xbf16>, vector<16x32xbf16>, vector<16x32xf32> -> vector<16x32xf32>
    %69 = tpu.reciprocal %64 {approx = true} : vector<16x1xf32> -> vector<16x1xf32>
    %70 = vector.broadcast %69 : vector<16x1xf32> to vector<16x32xf32>
    %71 = arith.mulf %68, %70 : vector<16x32xf32>
    %72 = vector.extract_strided_slice %18 {offsets = [0, 64], sizes = [16, 32], strides = [1, 1]} : vector<16x128xf32> to vector<16x32xf32>
    %73 = arith.truncf %72 : vector<16x32xf32> to vector<16x32xbf16>
    %74 = vector.extract_strided_slice %19 {offsets = [0, 64], sizes = [16, 32], strides = [1, 1]} : vector<16x128xf32> to vector<16x32xf32>
    %75 = arith.truncf %74 : vector<16x32xf32> to vector<16x32xbf16>
    %cst_23 = arith.constant dense<0.000000e+00> : vector<16x16xf32>
    %76 = tpu.matmul %73, %75, %cst_23 {dimension_numbers = #tpu.dot_dimension_numbers<[1], [1], [0], [0], [0, 0, 1, 0], [], []>} : vector<16x32xbf16>, vector<16x32xbf16>, vector<16x16xf32> -> vector<16x16xf32>
    %77 = vector.extract_strided_slice %21 {offsets = [2, 0, 0], sizes = [1, 16, 16], strides = [1, 1, 1]} : vector<4x16x16xf32> to vector<1x16x16xf32>
    %78 = vector.shape_cast %77 : vector<1x16x16xf32> to vector<16x16xf32>
    %79 = arith.addf %76, %78 : vector<16x16xf32>
    %80 = vector.broadcast %23 : vector<1x16xf32> to vector<16x16xf32>
    %81 = arith.addf %79, %80 : vector<16x16xf32>
    %cst_24 = arith.constant dense<0xFF800000> : vector<16xf32>
    %82 = vector.multi_reduction <maximumf>, %81, %cst_24 [1] : vector<16x16xf32> to vector<16xf32>
    %83 = vector.shape_cast %82 : vector<16xf32> to vector<16x1xf32>
    %84 = vector.broadcast %83 : vector<16x1xf32> to vector<16x16xf32>
    %85 = arith.subf %81, %84 : vector<16x16xf32>
    %86 = math.exp %85 : vector<16x16xf32>
    %cst_25 = arith.constant dense<0.000000e+00> : vector<16xf32>
    %87 = vector.multi_reduction <add>, %86, %cst_25 [1] : vector<16x16xf32> to vector<16xf32>
    %88 = vector.shape_cast %87 : vector<16xf32> to vector<16x1xf32>
    %89 = arith.truncf %86 : vector<16x16xf32> to vector<16x16xbf16>
    %90 = vector.extract_strided_slice %20 {offsets = [0, 64], sizes = [16, 32], strides = [1, 1]} : vector<16x128xf32> to vector<16x32xf32>
    %91 = arith.truncf %90 : vector<16x32xf32> to vector<16x32xbf16>
    %cst_26 = arith.constant dense<0.000000e+00> : vector<16x32xf32>
    %92 = tpu.matmul %89, %91, %cst_26 {dimension_numbers = #tpu.dot_dimension_numbers<[1], [0], [0], [1], [0, 0, 1, 1], [], []>} : vector<16x16xbf16>, vector<16x32xbf16>, vector<16x32xf32> -> vector<16x32xf32>
    %93 = tpu.reciprocal %88 {approx = true} : vector<16x1xf32> -> vector<16x1xf32>
    %94 = vector.broadcast %93 : vector<16x1xf32> to vector<16x32xf32>
    %95 = arith.mulf %92, %94 : vector<16x32xf32>
    %96 = vector.extract_strided_slice %18 {offsets = [0, 96], sizes = [16, 32], strides = [1, 1]} : vector<16x128xf32> to vector<16x32xf32>
    %97 = arith.truncf %96 : vector<16x32xf32> to vector<16x32xbf16>
    %98 = vector.extract_strided_slice %19 {offsets = [0, 96], sizes = [16, 32], strides = [1, 1]} : vector<16x128xf32> to vector<16x32xf32>
    %99 = arith.truncf %98 : vector<16x32xf32> to vector<16x32xbf16>
    %cst_27 = arith.constant dense<0.000000e+00> : vector<16x16xf32>
    %100 = tpu.matmul %97, %99, %cst_27 {dimension_numbers = #tpu.dot_dimension_numbers<[1], [1], [0], [0], [0, 0, 1, 0], [], []>} : vector<16x32xbf16>, vector<16x32xbf16>, vector<16x16xf32> -> vector<16x16xf32>
    %101 = vector.extract_strided_slice %21 {offsets = [3, 0, 0], sizes = [1, 16, 16], strides = [1, 1, 1]} : vector<4x16x16xf32> to vector<1x16x16xf32>
    %102 = vector.shape_cast %101 : vector<1x16x16xf32> to vector<16x16xf32>
    %103 = arith.addf %100, %102 : vector<16x16xf32>
    %104 = vector.broadcast %23 : vector<1x16xf32> to vector<16x16xf32>
    %105 = arith.addf %103, %104 : vector<16x16xf32>
    %cst_28 = arith.constant dense<0xFF800000> : vector<16xf32>
    %106 = vector.multi_reduction <maximumf>, %105, %cst_28 [1] : vector<16x16xf32> to vector<16xf32>
    %107 = vector.shape_cast %106 : vector<16xf32> to vector<16x1xf32>
    %108 = vector.broadcast %107 : vector<16x1xf32> to vector<16x16xf32>
    %109 = arith.subf %105, %108 : vector<16x16xf32>
    %110 = math.exp %109 : vector<16x16xf32>
    %cst_29 = arith.constant dense<0.000000e+00> : vector<16xf32>
    %111 = vector.multi_reduction <add>, %110, %cst_29 [1] : vector<16x16xf32> to vector<16xf32>
    %112 = vector.shape_cast %111 : vector<16xf32> to vector<16x1xf32>
    %113 = arith.truncf %110 : vector<16x16xf32> to vector<16x16xbf16>
    %114 = vector.extract_strided_slice %20 {offsets = [0, 96], sizes = [16, 32], strides = [1, 1]} : vector<16x128xf32> to vector<16x32xf32>
    %115 = arith.truncf %114 : vector<16x32xf32> to vector<16x32xbf16>
    %cst_30 = arith.constant dense<0.000000e+00> : vector<16x32xf32>
    %116 = tpu.matmul %113, %115, %cst_30 {dimension_numbers = #tpu.dot_dimension_numbers<[1], [0], [0], [1], [0, 0, 1, 1], [], []>} : vector<16x16xbf16>, vector<16x32xbf16>, vector<16x32xf32> -> vector<16x32xf32>
    %117 = tpu.reciprocal %112 {approx = true} : vector<16x1xf32> -> vector<16x1xf32>
    %118 = vector.broadcast %117 : vector<16x1xf32> to vector<16x32xf32>
    %119 = arith.mulf %116, %118 : vector<16x32xf32>
    %120 = tpu.concatenate %47, %71, %95, %119 in 1 : vector<16x32xf32>, vector<16x32xf32>, vector<16x32xf32>, vector<16x32xf32> -> vector<16x128xf32>
    %c0_31 = arith.constant 0 : index
    %c0_32 = arith.constant 0 : index
    %121 = vector.load %arg6[%c0_31, %c0_32] : memref<128x128xbf16, #tpu.memory_space<vmem>>, vector<128x128xbf16>
    %122 = arith.truncf %120 : vector<16x128xf32> to vector<16x128xbf16>
    %cst_33 = arith.constant dense<0.000000e+00> : vector<16x128xf32>
    %123 = tpu.matmul %122, %121, %cst_33 {dimension_numbers = #tpu.dot_dimension_numbers<[1], [0], [0], [1], [0, 0, 1, 1], [], []>} : vector<16x128xbf16>, vector<128x128xbf16>, vector<16x128xf32> -> vector<16x128xf32>
    %124 = arith.addf %1, %123 : vector<16x128xf32>
    %c0_34 = arith.constant 0 : index
    %c0_35 = arith.constant 0 : index
    %125 = vector.load %arg7[%c0_34, %c0_35] : memref<1x128xf32, #tpu.memory_space<vmem>>, vector<1x128xf32>
    %126 = arith.mulf %124, %124 : vector<16x128xf32>
    %cst_36 = arith.constant dense<0.000000e+00> : vector<16xf32>
    %127 = vector.multi_reduction <add>, %126, %cst_36 [1] : vector<16x128xf32> to vector<16xf32>
    %128 = vector.shape_cast %127 : vector<16xf32> to vector<16x1xf32>
    %cst_37 = arith.constant 1.280000e+02 : f32
    %129 = vector.broadcast %cst_37 : f32 to vector<16x1xf32>
    %130 = arith.divf %128, %129 : vector<16x1xf32>
    %cst_38 = arith.constant 9.99999997E-7 : f32
    %131 = vector.broadcast %cst_38 : f32 to vector<16x1xf32>
    %132 = arith.addf %130, %131 : vector<16x1xf32>
    %133 = math.rsqrt %132 : vector<16x1xf32>
    %134 = vector.broadcast %133 : vector<16x1xf32> to vector<16x128xf32>
    %135 = arith.mulf %124, %134 : vector<16x128xf32>
    %136 = vector.broadcast %125 : vector<1x128xf32> to vector<16x128xf32>
    %137 = arith.mulf %135, %136 : vector<16x128xf32>
    %c0_39 = arith.constant 0 : index
    %c0_40 = arith.constant 0 : index
    %138 = vector.load %arg8[%c0_39, %c0_40] : memref<128x256xbf16, #tpu.memory_space<vmem>>, vector<128x256xbf16>
    %139 = arith.truncf %137 : vector<16x128xf32> to vector<16x128xbf16>
    %cst_41 = arith.constant dense<0.000000e+00> : vector<16x256xf32>
    %140 = tpu.matmul %139, %138, %cst_41 {dimension_numbers = #tpu.dot_dimension_numbers<[1], [0], [0], [1], [0, 0, 1, 1], [], []>} : vector<16x128xbf16>, vector<128x256xbf16>, vector<16x256xf32> -> vector<16x256xf32>
    %cst_42 = arith.constant 0.000000e+00 : f32
    %141 = vector.broadcast %cst_42 : f32 to vector<16x256xf32>
    %142 = arith.maximumf %140, %141 : vector<16x256xf32>
    %c0_43 = arith.constant 0 : index
    %c0_44 = arith.constant 0 : index
    %143 = vector.load %arg9[%c0_43, %c0_44] : memref<256x128xbf16, #tpu.memory_space<vmem>>, vector<256x128xbf16>
    %144 = arith.truncf %142 : vector<16x256xf32> to vector<16x256xbf16>
    %cst_45 = arith.constant dense<0.000000e+00> : vector<16x128xf32>
    %145 = tpu.matmul %144, %143, %cst_45 {dimension_numbers = #tpu.dot_dimension_numbers<[1], [0], [0], [1], [0, 0, 1, 1], [], []>} : vector<16x256xbf16>, vector<256x128xbf16>, vector<16x128xf32> -> vector<16x128xf32>
    %146 = arith.addf %124, %145 : vector<16x128xf32>
    %c0_46 = arith.constant 0 : index
    %c0_47 = arith.constant 0 : index
    %c0_48 = arith.constant 0 : index
    %147 = vector.load %arg10[%c0_46, %c0_47, %c0_48] : memref<1x16x128xf32, #tpu.memory_space<vmem>>, vector<1x16x128xf32>
    %148 = vector.shape_cast %147 : vector<1x16x128xf32> to vector<16x128xf32>
    %149 = vector.shape_cast %146 : vector<16x128xf32> to vector<1x16x128xf32>
    tpu.vector_store %arg10[%c0_46, %c0_47, %c0_48], %149 {strides = array<i32>} : memref<1x16x128xf32, #tpu.memory_space<vmem>>, vector<1x16x128xf32>,
    return
  }
  func.func @transform_0(%arg0: i32) -> (i32, i32, i32) {
    %c0_i32 = arith.constant 0 : i32
    %c0_i32_0 = arith.constant 0 : i32
    %c0_i32_1 = arith.constant 0 : i32
    return %arg0, %c0_i32, %c0_i32_0 : i32, i32, i32
  }
  func.func @transform_1(%arg0: i32) -> (i32, i32, i32) {
    %c0_i32 = arith.constant 0 : i32
    %c0_i32_0 = arith.constant 0 : i32
    %c0_i32_1 = arith.constant 0 : i32
    return %arg0, %c0_i32, %c0_i32_0 : i32, i32, i32
  }
  func.func @transform_2(%arg0: i32) -> (i32, i32, i32) {
    %c0_i32 = arith.constant 0 : i32
    %c0_i32_0 = arith.constant 0 : i32
    %c0_i32_1 = arith.constant 0 : i32
    %c0_i32_2 = arith.constant 0 : i32
    return %c0_i32, %c0_i32_0, %c0_i32_1 : i32, i32, i32
  }
  func.func @transform_3(%arg0: i32) -> (i32, i32) {
    %c0_i32 = arith.constant 0 : i32
    %c0_i32_0 = arith.constant 0 : i32
    %c0_i32_1 = arith.constant 0 : i32
    return %c0_i32, %c0_i32_0 : i32, i32
  }
  func.func @transform_4(%arg0: i32) -> (i32, i32) {
    %c0_i32 = arith.constant 0 : i32
    %c0_i32_0 = arith.constant 0 : i32
    %c0_i32_1 = arith.constant 0 : i32
    return %c0_i32, %c0_i32_0 : i32, i32
  }
  func.func @transform_5(%arg0: i32) -> (i32, i32) {
    %c0_i32 = arith.constant 0 : i32
    %c0_i32_0 = arith.constant 0 : i32
    %c0_i32_1 = arith.constant 0 : i32
    return %c0_i32, %c0_i32_0 : i32, i32
  }
  func.func @transform_6(%arg0: i32) -> (i32, i32) {
    %c0_i32 = arith.constant 0 : i32
    %c0_i32_0 = arith.constant 0 : i32
    %c0_i32_1 = arith.constant 0 : i32
    return %c0_i32, %c0_i32_0 : i32, i32
  }
  func.func @transform_7(%arg0: i32) -> (i32, i32) {
    %c0_i32 = arith.constant 0 : i32
    %c0_i32_0 = arith.constant 0 : i32
    %c0_i32_1 = arith.constant 0 : i32
    return %c0_i32, %c0_i32_0 : i32, i32
  }
  func.func @transform_8(%arg0: i32) -> (i32, i32) {
    %c0_i32 = arith.constant 0 : i32
    %c0_i32_0 = arith.constant 0 : i32
    %c0_i32_1 = arith.constant 0 : i32
    return %c0_i32, %c0_i32_0 : i32, i32
  }
  func.func @transform_9(%arg0: i32) -> (i32, i32, i32) {
    %c0_i32 = arith.constant 0 : i32
    %c0_i32_0 = arith.constant 0 : i32
    %c0_i32_1 = arith.constant 0 : i32
    return %arg0, %c0_i32, %c0_i32_0 : i32, i32, i32
  }
}

module attributes {stable_mosaic.version = 11 : i64} {
  func.func @_lm_head_kernel(%arg0: i32, %arg1: memref<8x128xf32, #tpu.memory_space<vmem>>, %arg2: memref<8x1xi32, #tpu.memory_space<vmem>>, %arg3: memref<1x128xf32, #tpu.memory_space<vmem>>, %arg4: memref<128x128xbf16, #tpu.memory_space<vmem>>, %arg5: memref<8x128xf32, #tpu.memory_space<vmem>>, %arg6: memref<8x1xf32, #tpu.memory_space<vmem>>) attributes {dimension_semantics = [#tpu.dimension_semantics<parallel>], iteration_bounds = array<i64: 2>, scalar_prefetch = 0 : i64, scratch_operands = 0 : i64, tpu.core_type = #tpu.core_type<tc>, window_params = [{transform_indices = @transform_0, window_bounds = array<i64: 8, 128>}, {transform_indices = @transform_1, window_bounds = array<i64: 8, 1>}, {pipeline_mode = #tpu.pipeline_mode<synchronous>, transform_indices = @transform_2, window_bounds = array<i64: 1, 128>}, {pipeline_mode = #tpu.pipeline_mode<synchronous>, transform_indices = @transform_3, window_bounds = array<i64: 128, 128>}, {transform_indices = @transform_4, window_bounds = array<i64: 8, 128>}, {transform_indices = @transform_5, window_bounds = array<i64: 8, 1>}]} {
    %c0 = arith.constant 0 : index
    %c0_0 = arith.constant 0 : index
    %0 = vector.load %arg1[%c0, %c0_0] : memref<8x128xf32, #tpu.memory_space<vmem>>, vector<8x128xf32>
    %c0_1 = arith.constant 0 : index
    %c0_2 = arith.constant 0 : index
    %1 = vector.load %arg3[%c0_1, %c0_2] : memref<1x128xf32, #tpu.memory_space<vmem>>, vector<1x128xf32>
    %2 = arith.mulf %0, %0 : vector<8x128xf32>
    %cst = arith.constant dense<0.000000e+00> : vector<8xf32>
    %3 = vector.multi_reduction <add>, %2, %cst [1] : vector<8x128xf32> to vector<8xf32>
    %4 = vector.shape_cast %3 : vector<8xf32> to vector<8x1xf32>
    %cst_3 = arith.constant 1.280000e+02 : f32
    %5 = vector.broadcast %cst_3 : f32 to vector<8x1xf32>
    %6 = arith.divf %4, %5 : vector<8x1xf32>
    %cst_4 = arith.constant 9.99999997E-7 : f32
    %7 = vector.broadcast %cst_4 : f32 to vector<8x1xf32>
    %8 = arith.addf %6, %7 : vector<8x1xf32>
    %9 = math.rsqrt %8 : vector<8x1xf32>
    %10 = vector.broadcast %9 : vector<8x1xf32> to vector<8x128xf32>
    %11 = arith.mulf %0, %10 : vector<8x128xf32>
    %12 = vector.broadcast %1 : vector<1x128xf32> to vector<8x128xf32>
    %13 = arith.mulf %11, %12 : vector<8x128xf32>
    %cst_5 = arith.constant 0.0883883461 : f32
    %14 = vector.broadcast %cst_5 : f32 to vector<8x128xf32>
    %15 = arith.mulf %13, %14 : vector<8x128xf32>
    %c0_6 = arith.constant 0 : index
    %c0_7 = arith.constant 0 : index
    %16 = vector.load %arg4[%c0_6, %c0_7] : memref<128x128xbf16, #tpu.memory_space<vmem>>, vector<128x128xbf16>
    %17 = arith.truncf %15 : vector<8x128xf32> to vector<8x128xbf16>
    %cst_8 = arith.constant dense<0.000000e+00> : vector<8x128xf32>
    %18 = tpu.matmul %17, %16, %cst_8 {dimension_numbers = #tpu.dot_dimension_numbers<[1], [0], [0], [1], [0, 0, 1, 1], [], []>} : vector<8x128xbf16>, vector<128x128xbf16>, vector<8x128xf32> -> vector<8x128xf32>
    %c0_9 = arith.constant 0 : index
    %c0_10 = arith.constant 0 : index
    %19 = vector.load %arg5[%c0_9, %c0_10] : memref<8x128xf32, #tpu.memory_space<vmem>>, vector<8x128xf32>
    tpu.vector_store %arg5[%c0_9, %c0_10], %18 {strides = array<i32>} : memref<8x128xf32, #tpu.memory_space<vmem>>, vector<8x128xf32>,
    %cst_11 = arith.constant dense<0xFF800000> : vector<8xf32>
    %20 = vector.multi_reduction <maximumf>, %18, %cst_11 [1] : vector<8x128xf32> to vector<8xf32>
    %21 = vector.shape_cast %20 : vector<8xf32> to vector<8x1xf32>
    %22 = vector.broadcast %21 : vector<8x1xf32> to vector<8x128xf32>
    %23 = arith.subf %18, %22 : vector<8x128xf32>
    %24 = math.exp %23 : vector<8x128xf32>
    %cst_12 = arith.constant dense<0.000000e+00> : vector<8xf32>
    %25 = vector.multi_reduction <add>, %24, %cst_12 [1] : vector<8x128xf32> to vector<8xf32>
    %26 = vector.shape_cast %25 : vector<8xf32> to vector<8x1xf32>
    %27 = math.log %26 : vector<8x1xf32>
    %28 = arith.addf %27, %21 : vector<8x1xf32>
    %c0_13 = arith.constant 0 : index
    %c0_14 = arith.constant 0 : index
    %29 = vector.load %arg2[%c0_13, %c0_14] : memref<8x1xi32, #tpu.memory_space<vmem>>, vector<8x1xi32>
    %30 = tpu.iota {dimensions = array<i32: 1>} : vector<8x128xi32>
    %31 = vector.broadcast %29 : vector<8x1xi32> to vector<8x128xi32>
    %32 = arith.cmpi eq, %30, %31 : vector<8x128xi32>
    %cst_15 = arith.constant 0.000000e+00 : f32
    %33 = vector.broadcast %cst_15 : f32 to vector<8x128xf32>
    %34 = arith.select %32, %18, %33 : vector<8x128xi1>, vector<8x128xf32>
    %cst_16 = arith.constant dense<0.000000e+00> : vector<8xf32>
    %35 = vector.multi_reduction <add>, %34, %cst_16 [1] : vector<8x128xf32> to vector<8xf32>
    %36 = vector.shape_cast %35 : vector<8xf32> to vector<8x1xf32>
    %c-100_i32 = arith.constant -100 : i32
    %37 = vector.broadcast %c-100_i32 : i32 to vector<8x1xi32>
    %38 = arith.cmpi ne, %29, %37 : vector<8x1xi32>
    %39 = arith.subf %28, %36 : vector<8x1xf32>
    %cst_17 = arith.constant 0.000000e+00 : f32
    %40 = vector.broadcast %cst_17 : f32 to vector<8x1xf32>
    %41 = arith.select %38, %39, %40 : vector<8x1xi1>, vector<8x1xf32>
    %c0_18 = arith.constant 0 : index
    %c0_19 = arith.constant 0 : index
    %42 = vector.load %arg6[%c0_18, %c0_19] : memref<8x1xf32, #tpu.memory_space<vmem>>, vector<8x1xf32>
    tpu.vector_store %arg6[%c0_18, %c0_19], %41 {strides = array<i32>} : memref<8x1xf32, #tpu.memory_space<vmem>>, vector<8x1xf32>,
    return
  }
  func.func @transform_0(%arg0: i32) -> (i32, i32) {
    %c0_i32 = arith.constant 0 : i32
    %c0_i32_0 = arith.constant 0 : i32
    return %arg0, %c0_i32 : i32, i32
  }
  func.func @transform_1(%arg0: i32) -> (i32, i32) {
    %c0_i32 = arith.constant 0 : i32
    %c0_i32_0 = arith.constant 0 : i32
    return %arg0, %c0_i32 : i32, i32
  }
  func.func @transform_2(%arg0: i32) -> (i32, i32) {
    %c0_i32 = arith.constant 0 : i32
    %c0_i32_0 = arith.constant 0 : i32
    %c0_i32_1 = arith.constant 0 : i32
    return %c0_i32, %c0_i32_0 : i32, i32
  }
  func.func @transform_3(%arg0: i32) -> (i32, i32) {
    %c0_i32 = arith.constant 0 : i32
    %c0_i32_0 = arith.constant 0 : i32
    %c0_i32_1 = arith.constant 0 : i32
    return %c0_i32, %c0_i32_0 : i32, i32
  }
  func.func @transform_4(%arg0: i32) -> (i32, i32) {
    %c0_i32 = arith.constant 0 : i32
    %c0_i32_0 = arith.constant 0 : i32
    return %arg0, %c0_i32 : i32, i32
  }
  func.func @transform_5(%arg0: i32) -> (i32, i32) {
    %c0_i32 = arith.constant 0 : i32
    %c0_i32_0 = arith.constant 0 : i32
    return %arg0, %c0_i32 : i32, i32
  }
}

module attributes {stable_mosaic.version = 11 : i64} {
  func.func @_dec_layer_kernel(%arg0: i32, %arg1: memref<1x8x128xf32, #tpu.memory_space<vmem>>, %arg2: memref<1x16x128xf32, #tpu.memory_space<vmem>>, %arg3: memref<1x1x16xf32, #tpu.memory_space<vmem>>, %arg4: memref<4x8x8xf32, #tpu.memory_space<vmem>>, %arg5: memref<1x128xf32, #tpu.memory_space<vmem>>, %arg6: memref<1x128xf32, #tpu.memory_space<vmem>>, %arg7: memref<128x384xbf16, #tpu.memory_space<vmem>>, %arg8: memref<128x128xbf16, #tpu.memory_space<vmem>>, %arg9: memref<1x128xf32, #tpu.memory_space<vmem>>, %arg10: memref<128x128xbf16, #tpu.memory_space<vmem>>, %arg11: memref<128x256xbf16, #tpu.memory_space<vmem>>, %arg12: memref<128x128xbf16, #tpu.memory_space<vmem>>, %arg13: memref<1x128xf32, #tpu.memory_space<vmem>>, %arg14: memref<128x256xbf16, #tpu.memory_space<vmem>>, %arg15: memref<256x128xbf16, #tpu.memory_space<vmem>>, %arg16: memref<1x8x128xf32, #tpu.memory_space<vmem>>) attributes {dimension_semantics = [#tpu.dimension_semantics<parallel>], iteration_bounds = array<i64: 2>, scalar_prefetch = 0 : i64, scratch_operands = 0 : i64, tpu.core_type = #tpu.core_type<tc>, window_params = [{transform_indices = @transform_0, window_bounds = array<i64: 1, 8, 128>}, {transform_indices = @transform_1, window_bounds = array<i64: 1, 16, 128>}, {transform_indices = @transform_2, window_bounds = array<i64: 1, 1, 16>}, {pipeline_mode = #tpu.pipeline_mode<synchronous>, transform_indices = @transform_3, window_bounds = array<i64: 4, 8, 8>}, {pipeline_mode = #tpu.pipeline_mode<synchronous>, transform_indices = @transform_4, window_bounds = array<i64: 1, 128>}, {pipeline_mode = #tpu.pipeline_mode<synchronous>, transform_indices = @transform_5, window_bounds = array<i64: 1, 128>}, {pipeline_mode = #tpu.pipeline_mode<synchronous>, transform_indices = @transform_6, window_bounds = array<i64: 128, 384>}, {pipeline_mode = #tpu.pipeline_mode<synchronous>, transform_indices = @transform_7, window_bounds = array<i64: 128, 128>}, {pipeline_mode = #tpu.pipeline_mode<synchronous>, transform_indices = @transform_8, window_bounds = array<i64: 1, 128>}, {pipeline_mode = #tpu.pipeline_mode<synchronous>, transform_indices = @transform_9, window_bounds = array<i64: 128, 128>}, {pipeline_mode = #tpu.pipeline_mode<synchronous>, transform_indices = @transform_10, window_bounds = array<i64: 128, 256>}, {pipeline_mode = #tpu.pipeline_mode<synchronous>, transform_indices = @transform_11, window_bounds = array<i64: 128, 128>}, {pipeline_mode = #tpu.pipeline_mode<synchronous>, transform_indices = @transform_12, window_bounds = array<i64: 1, 128>}, {pipeline_mode = #tpu.pipeline_mode<synchronous>, transform_indices = @transform_13, window_bounds = array<i64: 128, 256>}, {pipeline_mode = #tpu.pipeline_mode<synchronous>, transform_indices = @transform_14, window_bounds = array<i64: 256, 128>}, {transform_indices = @transform_15, window_bounds = array<i64: 1, 8, 128>}]} {
    %c0 = arith.constant 0 : index
    %c0_0 = arith.constant 0 : index
    %c0_1 = arith.constant 0 : index
    %0 = vector.load %arg1[%c0, %c0_0, %c0_1] : memref<1x8x128xf32, #tpu.memory_space<vmem>>, vector<1x8x128xf32>
    %1 = vector.shape_cast %0 : vector<1x8x128xf32> to vector<8x128xf32>
    %c0_2 = arith.constant 0 : index
    %c0_3 = arith.constant 0 : index
    %2 = vector.load %arg6[%c0_2, %c0_3] : memref<1x128xf32, #tpu.memory_space<vmem>>, vector<1x128xf32>
    %3 = arith.mulf %1, %1 : vector<8x128xf32>
    %cst = arith.constant dense<0.000000e+00> : vector<8xf32>
    %4 = vector.multi_reduction <add>, %3, %cst [1] : vector<8x128xf32> to vector<8xf32>
    %5 = vector.shape_cast %4 : vector<8xf32> to vector<8x1xf32>
    %cst_4 = arith.constant 1.280000e+02 : f32
    %6 = vector.broadcast %cst_4 : f32 to vector<8x1xf32>
    %7 = arith.divf %5, %6 : vector<8x1xf32>
    %cst_5 = arith.constant 9.99999997E-7 : f32
    %8 = vector.broadcast %cst_5 : f32 to vector<8x1xf32>
    %9 = arith.addf %7, %8 : vector<8x1xf32>
    %10 = math.rsqrt %9 : vector<8x1xf32>
    %11 = vector.broadcast %10 : vector<8x1xf32> to vector<8x128xf32>
    %12 = arith.mulf %1, %11 : vector<8x128xf32>
    %13 = vector.broadcast %2 : vector<1x128xf32> to vector<8x128xf32>
    %14 = arith.mulf %12, %13 : vector<8x128xf32>
    %c0_6 = arith.constant 0 : index
    %c0_7 = arith.constant 0 : index
    %15 = vector.load %arg7[%c0_6, %c0_7] : memref<128x384xbf16, #tpu.memory_space<vmem>>, vector<128x384xbf16>
    %16 = arith.truncf %14 : vector<8x128xf32> to vector<8x128xbf16>
    %cst_8 = arith.constant dense<0.000000e+00> : vector<8x384xf32>
    %17 = tpu.matmul %16, %15, %cst_8 {dimension_numbers = #tpu.dot_dimension_numbers<[1], [0], [0], [1], [0, 0, 1, 1], [], []>} : vector<8x128xbf16>, vector<128x384xbf16>, vector<8x384xf32> -> vector<8x384xf32>
    %18 = vector.extract_strided_slice %17 {offsets = [0, 0], sizes = [8, 128], strides = [1, 1]} : vector<8x384xf32> to vector<8x128xf32>
    %19 = vector.extract_strided_slice %17 {offsets = [0, 128], sizes = [8, 128], strides = [1, 1]} : vector<8x384xf32> to vector<8x128xf32>
    %20 = vector.extract_strided_slice %17 {offsets = [0, 256], sizes = [8, 128], strides = [1, 1]} : vector<8x384xf32> to vector<8x128xf32>
    %c0_9 = arith.constant 0 : index
    %c0_10 = arith.constant 0 : index
    %c0_11 = arith.constant 0 : index
    %21 = vector.load %arg4[%c0_9, %c0_10, %c0_11] : memref<4x8x8xf32, #tpu.memory_space<vmem>>, vector<4x8x8xf32>
    %22 = vector.extract_strided_slice %18 {offsets = [0, 0], sizes = [8, 32], strides = [1, 1]} : vector<8x128xf32> to vector<8x32xf32>
    %23 = arith.truncf %22 : vector<8x32xf32> to vector<8x32xbf16>
    %24 = vector.extract_strided_slice %19 {offsets = [0, 0], sizes = [8, 32], strides = [1, 1]} : vector<8x128xf32> to vector<8x32xf32>
    %25 = arith.truncf %24 : vector<8x32xf32> to vector<8x32xbf16>
    %cst_12 = arith.constant dense<0.000000e+00> : vector<8x8xf32>
    %26 = tpu.matmul %23, %25, %cst_12 {dimension_numbers = #tpu.dot_dimension_numbers<[1], [1], [0], [0], [0, 0, 1, 0], [], []>} : vector<8x32xbf16>, vector<8x32xbf16>, vector<8x8xf32> -> vector<8x8xf32>
    %27 = vector.extract_strided_slice %21 {offsets = [0, 0, 0], sizes = [1, 8, 8], strides = [1, 1, 1]} : vector<4x8x8xf32> to vector<1x8x8xf32>
    %28 = vector.shape_cast %27 : vector<1x8x8xf32> to vector<8x8xf32>
    %29 = arith.addf %26, %28 : vector<8x8xf32>
    %cst_13 = arith.constant dense<0xFF800000> : vector<8xf32>
    %30 = vector.multi_reduction <maximumf>, %29, %cst_13 [1] : vector<8x8xf32> to vector<8xf32>
    %31 = vector.shape_cast %30 : vector<8xf32> to vector<8x1xf32>
    %32 = vector.broadcast %31 : vector<8x1xf32> to vector<8x8xf32>
    %33 = arith.subf %29, %32 : vector<8x8xf32>
    %34 = math.exp %33 : vector<8x8xf32>
    %cst_14 = arith.constant dense<0.000000e+00> : vector<8xf32>
    %35 = vector.multi_reduction <add>, %34, %cst_14 [1] : vector<8x8xf32> to vector<8xf32>
    %36 = vector.shape_cast %35 : vector<8xf32> to vector<8x1xf32>
    %37 = arith.truncf %34 : vector<8x8xf32> to vector<8x8xbf16>
    %38 = vector.extract_strided_slice %20 {offsets = [0, 0], sizes = [8, 32], strides = [1, 1]} : vector<8x128xf32> to vector<8x32xf32>
    %39 = arith.truncf %38 : vector<8x32xf32> to vector<8x32xbf16>
    %cst_15 = arith.constant dense<0.000000e+00> : vector<8x32xf32>
    %40 = tpu.matmul %37, %39, %cst_15 {dimension_numbers = #tpu.dot_dimension_numbers<[1], [0], [0], [1], [0, 0, 1, 1], [], []>} : vector<8x8xbf16>, vector<8x32xbf16>, vector<8x32xf32> -> vector<8x32xf32>
    %41 = tpu.reciprocal %36 {approx = true} : vector<8x1xf32> -> vector<8x1xf32>
    %42 = vector.broadcast %41 : vector<8x1xf32> to vector<8x32xf32>
    %43 = arith.mulf %40, %42 : vector<8x32xf32>
    %44 = vector.extract_strided_slice %18 {offsets = [0, 32], sizes = [8, 32], strides = [1, 1]} : vector<8x128xf32> to vector<8x32xf32>
    %45 = arith.truncf %44 : vector<8x32xf32> to vector<8x32xbf16>
    %46 = vector.extract_strided_slice %19 {offsets = [0, 32], sizes = [8, 32], strides = [1, 1]} : vector<8x128xf32> to vector<8x32xf32>
    %47 = arith.truncf %46 : vector<8x32xf32> to vector<8x32xbf16>
    %cst_16 = arith.constant dense<0.000000e+00> : vector<8x8xf32>
    %48 = tpu.matmul %45, %47, %cst_16 {dimension_numbers = #tpu.dot_dimension_numbers<[1], [1], [0], [0], [0, 0, 1, 0], [], []>} : vector<8x32xbf16>, vector<8x32xbf16>, vector<8x8xf32> -> vector<8x8xf32>
    %49 = vector.extract_strided_slice %21 {offsets = [1, 0, 0], sizes = [1, 8, 8], strides = [1, 1, 1]} : vector<4x8x8xf32> to vector<1x8x8xf32>
    %50 = vector.shape_cast %49 : vector<1x8x8xf32> to vector<8x8xf32>
    %51 = arith.addf %48, %50 : vector<8x8xf32>
    %cst_17 = arith.constant dense<0xFF800000> : vector<8xf32>
    %52 = vector.multi_reduction <maximumf>, %51, %cst_17 [1] : vector<8x8xf32> to vector<8xf32>
    %53 = vector.shape_cast %52 : vector<8xf32> to vector<8x1xf32>
    %54 = vector.broadcast %53 : vector<8x1xf32> to vector<8x8xf32>
    %55 = arith.subf %51, %54 : vector<8x8xf32>
    %56 = math.exp %55 : vector<8x8xf32>
    %cst_18 = arith.constant dense<0.000000e+00> : vector<8xf32>
    %57 = vector.multi_reduction <add>, %56, %cst_18 [1] : vector<8x8xf32> to vector<8xf32>
    %58 = vector.shape_cast %57 : vector<8xf32> to vector<8x1xf32>
    %59 = arith.truncf %56 : vector<8x8xf32> to vector<8x8xbf16>
    %60 = vector.extract_strided_slice %20 {offsets = [0, 32], sizes = [8, 32], strides = [1, 1]} : vector<8x128xf32> to vector<8x32xf32>
    %61 = arith.truncf %60 : vector<8x32xf32> to vector<8x32xbf16>
    %cst_19 = arith.constant dense<0.000000e+00> : vector<8x32xf32>
    %62 = tpu.matmul %59, %61, %cst_19 {dimension_numbers = #tpu.dot_dimension_numbers<[1], [0], [0], [1], [0, 0, 1, 1], [], []>} : vector<8x8xbf16>, vector<8x32xbf16>, vector<8x32xf32> -> vector<8x32xf32>
    %63 = tpu.reciprocal %58 {approx = true} : vector<8x1xf32> -> vector<8x1xf32>
    %64 = vector.broadcast %63 : vector<8x1xf32> to vector<8x32xf32>
    %65 = arith.mulf %62, %64 : vector<8x32xf32>
    %66 = vector.extract_strided_slice %18 {offsets = [0, 64], sizes = [8, 32], strides = [1, 1]} : vector<8x128xf32> to vector<8x32xf32>
    %67 = arith.truncf %66 : vector<8x32xf32> to vector<8x32xbf16>
    %68 = vector.extract_strided_slice %19 {offsets = [0, 64], sizes = [8, 32], strides = [1, 1]} : vector<8x128xf32> to vector<8x32xf32>
    %69 = arith.truncf %68 : vector<8x32xf32> to vector<8x32xbf16>
    %cst_20 = arith.constant dense<0.000000e+00> : vector<8x8xf32>
    %70 = tpu.matmul %67, %69, %cst_20 {dimension_numbers = #tpu.dot_dimension_numbers<[1], [1], [0], [0], [0, 0, 1, 0], [], []>} : vector<8x32xbf16>, vector<8x32xbf16>, vector<8x8xf32> -> vector<8x8xf32>
    %71 = vector.extract_strided_slice %21 {offsets = [2, 0, 0], sizes = [1, 8, 8], strides = [1, 1, 1]} : vector<4x8x8xf32> to vector<1x8x8xf32>
    %72 = vector.shape_cast %71 : vector<1x8x8xf32> to vector<8x8xf32>
    %73 = arith.addf %70, %72 : vector<8x8xf32>
    %cst_21 = arith.constant dense<0xFF800000> : vector<8xf32>
    %74 = vector.multi_reduction <maximumf>, %73, %cst_21 [1] : vector<8x8xf32> to vector<8xf32>
    %75 = vector.shape_cast %74 : vector<8xf32> to vector<8x1xf32>
    %76 = vector.broadcast %75 : vector<8x1xf32> to vector<8x8xf32>
    %77 = arith.subf %73, %76 : vector<8x8xf32>
    %78 = math.exp %77 : vector<8x8xf32>
    %cst_22 = arith.constant dense<0.000000e+00> : vector<8xf32>
    %79 = vector.multi_reduction <add>, %78, %cst_22 [1] : vector<8x8xf32> to vector<8xf32>
    %80 = vector.shape_cast %79 : vector<8xf32> to vector<8x1xf32>
    %81 = arith.truncf %78 : vector<8x8xf32> to vector<8x8xbf16>
    %82 = vector.extract_strided_slice %20 {offsets = [0, 64], sizes = [8, 32], strides = [1, 1]} : vector<8x128xf32> to vector<8x32xf32>
    %83 = arith.truncf %82 : vector<8x32xf32> to vector<8x32xbf16>
    %cst_23 = arith.constant dense<0.000000e+00> : vector<8x32xf32>
    %84 = tpu.matmul %81, %83, %cst_23 {dimension_numbers = #tpu.dot_dimension_numbers<[1], [0], [0], [1], [0, 0, 1, 1], [], []>} : vector<8x8xbf16>, vector<8x32xbf16>, vector<8x32xf32> -> vector<8x32xf32>
    %85 = tpu.reciprocal %80 {approx = true} : vector<8x1xf32> -> vector<8x1xf32>
    %86 = vector.broadcast %85 : vector<8x1xf32> to vector<8x32xf32>
    %87 = arith.mulf %84, %86 : vector<8x32xf32>
    %88 = vector.extract_strided_slice %18 {offsets = [0, 96], sizes = [8, 32], strides = [1, 1]} : vector<8x128xf32> to vector<8x32xf32>
    %89 = arith.truncf %88 : vector<8x32xf32> to vector<8x32xbf16>
    %90 = vector.extract_strided_slice %19 {offsets = [0, 96], sizes = [8, 32], strides = [1, 1]} : vector<8x128xf32> to vector<8x32xf32>
    %91 = arith.truncf %90 : vector<8x32xf32> to vector<8x32xbf16>
    %cst_24 = arith.constant dense<0.000000e+00> : vector<8x8xf32>
    %92 = tpu.matmul %89, %91, %cst_24 {dimension_numbers = #tpu.dot_dimension_numbers<[1], [1], [0], [0], [0, 0, 1, 0], [], []>} : vector<8x32xbf16>, vector<8x32xbf16>, vector<8x8xf32> -> vector<8x8xf32>
    %93 = vector.extract_strided_slice %21 {offsets = [3, 0, 0], sizes = [1, 8, 8], strides = [1, 1, 1]} : vector<4x8x8xf32> to vector<1x8x8xf32>
    %94 = vector.shape_cast %93 : vector<1x8x8xf32> to vector<8x8xf32>
    %95 = arith.addf %92, %94 : vector<8x8xf32>
    %cst_25 = arith.constant dense<0xFF800000> : vector<8xf32>
    %96 = vector.multi_reduction <maximumf>, %95, %cst_25 [1] : vector<8x8xf32> to vector<8xf32>
    %97 = vector.shape_cast %96 : vector<8xf32> to vector<8x1xf32>
    %98 = vector.broadcast %97 : vector<8x1xf32> to vector<8x8xf32>
    %99 = arith.subf %95, %98 : vector<8x8xf32>
    %100 = math.exp %99 : vector<8x8xf32>
    %cst_26 = arith.constant dense<0.000000e+00> : vector<8xf32>
    %101 = vector.multi_reduction <add>, %100, %cst_26 [1] : vector<8x8xf32> to vector<8xf32>
    %102 = vector.shape_cast %101 : vector<8xf32> to vector<8x1xf32>
    %103 = arith.truncf %100 : vector<8x8xf32> to vector<8x8xbf16>
    %104 = vector.extract_strided_slice %20 {offsets = [0, 96], sizes = [8, 32], strides = [1, 1]} : vector<8x128xf32> to vector<8x32xf32>
    %105 = arith.truncf %104 : vector<8x32xf32> to vector<8x32xbf16>
    %cst_27 = arith.constant dense<0.000000e+00> : vector<8x32xf32>
    %106 = tpu.matmul %103, %105, %cst_27 {dimension_numbers = #tpu.dot_dimension_numbers<[1], [0], [0], [1], [0, 0, 1, 1], [], []>} : vector<8x8xbf16>, vector<8x32xbf16>, vector<8x32xf32> -> vector<8x32xf32>
    %107 = tpu.reciprocal %102 {approx = true} : vector<8x1xf32> -> vector<8x1xf32>
    %108 = vector.broadcast %107 : vector<8x1xf32> to vector<8x32xf32>
    %109 = arith.mulf %106, %108 : vector<8x32xf32>
    %110 = tpu.concatenate %43, %65, %87, %109 in 1 : vector<8x32xf32>, vector<8x32xf32>, vector<8x32xf32>, vector<8x32xf32> -> vector<8x128xf32>
    %c0_28 = arith.constant 0 : index
    %c0_29 = arith.constant 0 : index
    %111 = vector.load %arg8[%c0_28, %c0_29] : memref<128x128xbf16, #tpu.memory_space<vmem>>, vector<128x128xbf16>
    %112 = arith.truncf %110 : vector<8x128xf32> to vector<8x128xbf16>
    %cst_30 = arith.constant dense<0.000000e+00> : vector<8x128xf32>
    %113 = tpu.matmul %112, %111, %cst_30 {dimension_numbers = #tpu.dot_dimension_numbers<[1], [0], [0], [1], [0, 0, 1, 1], [], []>} : vector<8x128xbf16>, vector<128x128xbf16>, vector<8x128xf32> -> vector<8x128xf32>
    %114 = arith.addf %1, %113 : vector<8x128xf32>
    %c0_31 = arith.constant 0 : index
    %c0_32 = arith.constant 0 : index
    %115 = vector.load %arg9[%c0_31, %c0_32] : memref<1x128xf32, #tpu.memory_space<vmem>>, vector<1x128xf32>
    %116 = arith.mulf %114, %114 : vector<8x128xf32>
    %cst_33 = arith.constant dense<0.000000e+00> : vector<8xf32>
    %117 = vector.multi_reduction <add>, %116, %cst_33 [1] : vector<8x128xf32> to vector<8xf32>
    %118 = vector.shape_cast %117 : vector<8xf32> to vector<8x1xf32>
    %cst_34 = arith.constant 1.280000e+02 : f32
    %119 = vector.broadcast %cst_34 : f32 to vector<8x1xf32>
    %120 = arith.divf %118, %119 : vector<8x1xf32>
    %cst_35 = arith.constant 9.99999997E-7 : f32
    %121 = vector.broadcast %cst_35 : f32 to vector<8x1xf32>
    %122 = arith.addf %120, %121 : vector<8x1xf32>
    %123 = math.rsqrt %122 : vector<8x1xf32>
    %124 = vector.broadcast %123 : vector<8x1xf32> to vector<8x128xf32>
    %125 = arith.mulf %114, %124 : vector<8x128xf32>
    %126 = vector.broadcast %115 : vector<1x128xf32> to vector<8x128xf32>
    %127 = arith.mulf %125, %126 : vector<8x128xf32>
    %c0_36 = arith.constant 0 : index
    %c0_37 = arith.constant 0 : index
    %128 = vector.load %arg10[%c0_36, %c0_37] : memref<128x128xbf16, #tpu.memory_space<vmem>>, vector<128x128xbf16>
    %129 = arith.truncf %127 : vector<8x128xf32> to vector<8x128xbf16>
    %cst_38 = arith.constant dense<0.000000e+00> : vector<8x128xf32>
    %130 = tpu.matmul %129, %128, %cst_38 {dimension_numbers = #tpu.dot_dimension_numbers<[1], [0], [0], [1], [0, 0, 1, 1], [], []>} : vector<8x128xbf16>, vector<128x128xbf16>, vector<8x128xf32> -> vector<8x128xf32>
    %c0_39 = arith.constant 0 : index
    %c0_40 = arith.constant 0 : index
    %c0_41 = arith.constant 0 : index
    %131 = vector.load %arg2[%c0_39, %c0_40, %c0_41] : memref<1x16x128xf32, #tpu.memory_space<vmem>>, vector<1x16x128xf32>
    %132 = vector.shape_cast %131 : vector<1x16x128xf32> to vector<16x128xf32>
    %c0_42 = arith.constant 0 : index
    %c0_43 = arith.constant 0 : index
    %133 = vector.load %arg5[%c0_42, %c0_43] : memref<1x128xf32, #tpu.memory_space<vmem>>, vector<1x128xf32>
    %134 = arith.mulf %132, %132 : vector<16x128xf32>
    %cst_44 = arith.constant dense<0.000000e+00> : vector<16xf32>
    %135 = vector.multi_reduction <add>, %134, %cst_44 [1] : vector<16x128xf32> to vector<16xf32>
    %136 = vector.shape_cast %135 : vector<16xf32> to vector<16x1xf32>
    %cst_45 = arith.constant 1.280000e+02 : f32
    %137 = vector.broadcast %cst_45 : f32 to vector<16x1xf32>
    %138 = arith.divf %136, %137 : vector<16x1xf32>
    %cst_46 = arith.constant 9.99999997E-7 : f32
    %139 = vector.broadcast %cst_46 : f32 to vector<16x1xf32>
    %140 = arith.addf %138, %139 : vector<16x1xf32>
    %141 = math.rsqrt %140 : vector<16x1xf32>
    %142 = vector.broadcast %141 : vector<16x1xf32> to vector<16x128xf32>
    %143 = arith.mulf %132, %142 : vector<16x128xf32>
    %144 = vector.broadcast %133 : vector<1x128xf32> to vector<16x128xf32>
    %145 = arith.mulf %143, %144 : vector<16x128xf32>
    %c0_47 = arith.constant 0 : index
    %c0_48 = arith.constant 0 : index
    %146 = vector.load %arg11[%c0_47, %c0_48] : memref<128x256xbf16, #tpu.memory_space<vmem>>, vector<128x256xbf16>
    %147 = arith.truncf %145 : vector<16x128xf32> to vector<16x128xbf16>
    %cst_49 = arith.constant dense<0.000000e+00> : vector<16x256xf32>
    %148 = tpu.matmul %147, %146, %cst_49 {dimension_numbers = #tpu.dot_dimension_numbers<[1], [0], [0], [1], [0, 0, 1, 1], [], []>} : vector<16x128xbf16>, vector<128x256xbf16>, vector<16x256xf32> -> vector<16x256xf32>
    %149 = vector.extract_strided_slice %148 {offsets = [0, 0], sizes = [16, 128], strides = [1, 1]} : vector<16x256xf32> to vector<16x128xf32>
    %150 = vector.extract_strided_slice %148 {offsets = [0, 128], sizes = [16, 128], strides = [1, 1]} : vector<16x256xf32> to vector<16x128xf32>
    %c0_50 = arith.constant 0 : index
    %c0_51 = arith.constant 0 : index
    %c0_52 = arith.constant 0 : index
    %151 = vector.load %arg3[%c0_50, %c0_51, %c0_52] : memref<1x1x16xf32, #tpu.memory_space<vmem>>, vector<1x1x16xf32>
    %152 = vector.shape_cast %151 : vector<1x1x16xf32> to vector<1x16xf32>
    %153 = vector.extract_strided_slice %130 {offsets = [0, 0], sizes = [8, 32], strides = [1, 1]} : vector<8x128xf32> to vector<8x32xf32>
    %154 = arith.truncf %153 : vector<8x32xf32> to vector<8x32xbf16>
    %155 = vector.extract_strided_slice %149 {offsets = [0, 0], sizes = [16, 32], strides = [1, 1]} : vector<16x128xf32> to vector<16x32xf32>
    %156 = arith.truncf %155 : vector<16x32xf32> to vector<16x32xbf16>
    %cst_53 = arith.constant dense<0.000000e+00> : vector<8x16xf32>
    %157 = tpu.matmul %154, %156, %cst_53 {dimension_numbers = #tpu.dot_dimension_numbers<[1], [1], [0], [0], [0, 0, 1, 0], [], []>} : vector<8x32xbf16>, vector<16x32xbf16>, vector<8x16xf32> -> vector<8x16xf32>
    %158 = vector.broadcast %152 : vector<1x16xf32> to vector<8x16xf32>
    %159 = arith.addf %157, %158 : vector<8x16xf32>
    %cst_54 = arith.constant dense<0xFF800000> : vector<8xf32>
    %160 = vector.multi_reduction <maximumf>, %159, %cst_54 [1] : vector<8x16xf32> to vector<8xf32>
    %161 = vector.shape_cast %160 : vector<8xf32> to vector<8x1xf32>
    %162 = vector.broadcast %161 : vector<8x1xf32> to vector<8x16xf32>
    %163 = arith.subf %159, %162 : vector<8x16xf32>
    %164 = math.exp %163 : vector<8x16xf32>
    %cst_55 = arith.constant dense<0.000000e+00> : vector<8xf32>
    %165 = vector.multi_reduction <add>, %164, %cst_55 [1] : vector<8x16xf32> to vector<8xf32>
    %166 = vector.shape_cast %165 : vector<8xf32> to vector<8x1xf32>
    %167 = arith.truncf %164 : vector<8x16xf32> to vector<8x16xbf16>
    %168 = vector.extract_strided_slice %150 {offsets = [0, 0], sizes = [16, 32], strides = [1, 1]} : vector<16x128xf32> to vector<16x32xf32>
    %169 = arith.truncf %168 : vector<16x32xf32> to vector<16x32xbf16>
    %cst_56 = arith.constant dense<0.000000e+00> : vector<8x32xf32>
    %170 = tpu.matmul %167, %169, %cst_56 {dimension_numbers = #tpu.dot_dimension_numbers<[1], [0], [0], [1], [0, 0, 1, 1], [], []>} : vector<8x16xbf16>, vector<16x32xbf16>, vector<8x32xf32> -> vector<8x32xf32>
    %171 = tpu.reciprocal %166 {approx = true} : vector<8x1xf32> -> vector<8x1xf32>
    %172 = vector.broadcast %171 : vector<8x1xf32> to vector<8x32xf32>
    %173 = arith.mulf %170, %172 : vector<8x32xf32>
    %174 = vector.extract_strided_slice %130 {offsets = [0, 32], sizes = [8, 32], strides = [1, 1]} : vector<8x128xf32> to vector<8x32xf32>
    %175 = arith.truncf %174 : vector<8x32xf32> to vector<8x32xbf16>
    %176 = vector.extract_strided_slice %149 {offsets = [0, 32], sizes = [16, 32], strides = [1, 1]} : vector<16x128xf32> to vector<16x32xf32>
    %177 = arith.truncf %176 : vector<16x32xf32> to vector<16x32xbf16>
    %cst_57 = arith.constant dense<0.000000e+00> : vector<8x16xf32>
    %178 = tpu.matmul %175, %177, %cst_57 {dimension_numbers = #tpu.dot_dimension_numbers<[1], [1], [0], [0], [0, 0, 1, 0], [], []>} : vector<8x32xbf16>, vector<16x32xbf16>, vector<8x16xf32> -> vector<8x16xf32>
    %179 = vector.broadcast %152 : vector<1x16xf32> to vector<8x16xf32>
    %180 = arith.addf %178, %179 : vector<8x16xf32>
    %cst_58 = arith.constant dense<0xFF800000> : vector<8xf32>
    %181 = vector.multi_reduction <maximumf>, %180, %cst_58 [1] : vector<8x16xf32> to vector<8xf32>
    %182 = vector.shape_cast %181 : vector<8xf32> to vector<8x1xf32>
    %183 = vector.broadcast %182 : vector<8x1xf32> to vector<8x16xf32>
    %184 = arith.subf %180, %183 : vector<8x16xf32>
    %185 = math.exp %184 : vector<8x16xf32>
    %cst_59 = arith.constant dense<0.000000e+00> : vector<8xf32>
    %186 = vector.multi_reduction <add>, %185, %cst_59 [1] : vector<8x16xf32> to vector<8xf32>
    %187 = vector.shape_cast %186 : vector<8xf32> to vector<8x1xf32>
    %188 = arith.truncf %185 : vector<8x16xf32> to vector<8x16xbf16>
    %189 = vector.extract_strided_slice %150 {offsets = [0, 32], sizes = [16, 32], strides = [1, 1]} : vector<16x128xf32> to vector<16x32xf32>
    %190 = arith.truncf %189 : vector<16x32xf32> to vector<16x32xbf16>
    %cst_60 = arith.constant dense<0.000000e+00> : vector<8x32xf32>
    %191 = tpu.matmul %188, %190, %cst_60 {dimension_numbers = #tpu.dot_dimension_numbers<[1], [0], [0], [1], [0, 0, 1, 1], [], []>} : vector<8x16xbf16>, vector<16x32xbf16>, vector<8x32xf32> -> vector<8x32xf32>
    %192 = tpu.reciprocal %187 {approx = true} : vector<8x1xf32> -> vector<8x1xf32>
    %193 = vector.broadcast %192 : vector<8x1xf32> to vector<8x32xf32>
    %194 = arith.mulf %191, %193 : vector<8x32xf32>
    %195 = vector.extract_strided_slice %130 {offsets = [0, 64], sizes = [8, 32], strides = [1, 1]} : vector<8x128xf32> to vector<8x32xf32>
    %196 = arith.truncf %195 : vector<8x32xf32> to vector<8x32xbf16>
    %197 = vector.extract_strided_slice %149 {offsets = [0, 64], sizes = [16, 32], strides = [1, 1]} : vector<16x128xf32> to vector<16x32xf32>
    %198 = arith.truncf %197 : vector<16x32xf32> to vector<16x32xbf16>
    %cst_61 = arith.constant dense<0.000000e+00> : vector<8x16xf32>
    %199 = tpu.matmul %196, %198, %cst_61 {dimension_numbers = #tpu.dot_dimension_numbers<[1], [1], [0], [0], [0, 0, 1, 0], [], []>} : vector<8x32xbf16>, vector<16x32xbf16>, vector<8x16xf32> -> vector<8x16xf32>
    %200 = vector.broadcast %152 : vector<1x16xf32> to vector<8x16xf32>
    %201 = arith.addf %199, %200 : vector<8x16xf32>
    %cst_62 = arith.constant dense<0xFF800000> : vector<8xf32>
    %202 = vector.multi_reduction <maximumf>, %201, %cst_62 [1] : vector<8x16xf32> to vector<8xf32>
    %203 = vector.shape_cast %202 : vector<8xf32> to vector<8x1xf32>
    %204 = vector.broadcast %203 : vector<8x1xf32> to vector<8x16xf32>
    %205 = arith.subf %201, %204 : vector<8x16xf32>
    %206 = math.exp %205 : vector<8x16xf32>
    %cst_63 = arith.constant dense<0.000000e+00> : vector<8xf32>
    %207 = vector.multi_reduction <add>, %206, %cst_63 [1] : vector<8x16xf32> to vector<8xf32>
    %208 = vector.shape_cast %207 : vector<8xf32> to vector<8x1xf32>
    %209 = arith.truncf %206 : vector<8x16xf32> to vector<8x16xbf16>
    %210 = vector.extract_strided_slice %150 {offsets = [0, 64], sizes = [16, 32], strides = [1, 1]} : vector<16x128xf32> to vector<16x32xf32>
    %211 = arith.truncf %210 : vector<16x32xf32> to vector<16x32xbf16>
    %cst_64 = arith.constant dense<0.000000e+00> : vector<8x32xf32>
    %212 = tpu.matmul %209, %211, %cst_64 {dimension_numbers = #tpu.dot_dimension_numbers<[1], [0], [0], [1], [0, 0, 1, 1], [], []>} : vector<8x16xbf16>, vector<16x32xbf16>, vector<8x32xf32> -> vector<8x32xf32>
    %213 = tpu.reciprocal %208 {approx = true} : vector<8x1xf32> -> vector<8x1xf32>
    %214 = vector.broadcast %213 : vector<8x1xf32> to vector<8x32xf32>
    %215 = arith.mulf %212, %214 : vector<8x32xf32>
    %216 = vector.extract_strided_slice %130 {offsets = [0, 96], sizes = [8, 32], strides = [1, 1]} : vector<8x128xf32> to vector<8x32xf32>
    %217 = arith.truncf %216 : vector<8x32xf32> to vector<8x32xbf16>
    %218 = vector.extract_strided_slice %149 {offsets = [0, 96], sizes = [16, 32], strides = [1, 1]} : vector<16x128xf32> to vector<16x32xf32>
    %219 = arith.truncf %218 : vector<16x32xf32> to vector<16x32xbf16>
    %cst_65 = arith.constant dense<0.000000e+00> : vector<8x16xf32>
    %220 = tpu.matmul %217, %219, %cst_65 {dimension_numbers = #tpu.dot_dimension_numbers<[1], [1], [0], [0], [0, 0, 1, 0], [], []>} : vector<8x32xbf16>, vector<16x32xbf16>, vector<8x16xf32> -> vector<8x16xf32>
    %221 = vector.broadcast %152 : vector<1x16xf32> to vector<8x16xf32>
    %222 = arith.addf %220, %221 : vector<8x16xf32>
    %cst_66 = arith.constant dense<0xFF800000> : vector<8xf32>
    %223 = vector.multi_reduction <maximumf>, %222, %cst_66 [1] : vector<8x16xf32> to vector<8xf32>
    %224 = vector.shape_cast %223 : vector<8xf32> to vector<8x1xf32>
    %225 = vector.broadcast %224 : vector<8x1xf32> to vector<8x16xf32>
    %226 = arith.subf %222, %225 : vector<8x16xf32>
    %227 = math.exp %226 : vector<8x16xf32>
    %cst_67 = arith.constant dense<0.000000e+00> : vector<8xf32>
    %228 = vector.multi_reduction <add>, %227, %cst_67 [1] : vector<8x16xf32> to vector<8xf32>
    %229 = vector.shape_cast %228 : vector<8xf32> to vector<8x1xf32>
    %230 = arith.truncf %227 : vector<8x16xf32> to vector<8x16xbf16>
    %231 = vector.extract_strided_slice %150 {offsets = [0, 96], sizes = [16, 32], strides = [1, 1]} : vector<16x128xf32> to vector<16x32xf32>
    %232 = arith.truncf %231 : vector<16x32xf32> to vector<16x32xbf16>
    %cst_68 = arith.constant dense<0.000000e+00> : vector<8x32xf32>
    %233 = tpu.matmul %230, %232, %cst_68 {dimension_numbers = #tpu.dot_dimension_numbers<[1], [0], [0], [1], [0, 0, 1, 1], [], []>} : vector<8x16xbf16>, vector<16x32xbf16>, vector<8x32xf32> -> vector<8x32xf32>
    %234 = tpu.reciprocal %229 {approx = true} : vector<8x1xf32> -> vector<8x1xf32>
    %235 = vector.broadcast %234 : vector<8x1xf32> to vector<8x32xf32>
    %236 = arith.mulf %233, %235 : vector<8x32xf32>
    %237 = tpu.concatenate %173, %194, %215, %236 in 1 : vector<8x32xf32>, vector<8x32xf32>, vector<8x32xf32>, vector<8x32xf32> -> vector<8x128xf32>
    %c0_69 = arith.constant 0 : index
    %c0_70 = arith.constant 0 : index
    %238 = vector.load %arg12[%c0_69, %c0_70] : memref<128x128xbf16, #tpu.memory_space<vmem>>, vector<128x128xbf16>
    %239 = arith.truncf %237 : vector<8x128xf32> to vector<8x128xbf16>
    %cst_71 = arith.constant dense<0.000000e+00> : vector<8x128xf32>
    %240 = tpu.matmul %239, %238, %cst_71 {dimension_numbers = #tpu.dot_dimension_numbers<[1], [0], [0], [1], [0, 0, 1, 1], [], []>} : vector<8x128xbf16>, vector<128x128xbf16>, vector<8x128xf32> -> vector<8x128xf32>
    %241 = arith.addf %114, %240 : vector<8x128xf32>
    %c0_72 = arith.constant 0 : index
    %c0_73 = arith.constant 0 : index
    %242 = vector.load %arg13[%c0_72, %c0_73] : memref<1x128xf32, #tpu.memory_space<vmem>>, vector<1x128xf32>
    %243 = arith.mulf %241, %241 : vector<8x128xf32>
    %cst_74 = arith.constant dense<0.000000e+00> : vector<8xf32>
    %244 = vector.multi_reduction <add>, %243, %cst_74 [1] : vector<8x128xf32> to vector<8xf32>
    %245 = vector.shape_cast %244 : vector<8xf32> to vector<8x1xf32>
    %cst_75 = arith.constant 1.280000e+02 : f32
    %246 = vector.broadcast %cst_75 : f32 to vector<8x1xf32>
    %247 = arith.divf %245, %246 : vector<8x1xf32>
    %cst_76 = arith.constant 9.99999997E-7 : f32
    %248 = vector.broadcast %cst_76 : f32 to vector<8x1xf32>
    %249 = arith.addf %247, %248 : vector<8x1xf32>
    %250 = math.rsqrt %249 : vector<8x1xf32>
    %251 = vector.broadcast %250 : vector<8x1xf32> to vector<8x128xf32>
    %252 = arith.mulf %241, %251 : vector<8x128xf32>
    %253 = vector.broadcast %242 : vector<1x128xf32> to vector<8x128xf32>
    %254 = arith.mulf %252, %253 : vector<8x128xf32>
    %c0_77 = arith.constant 0 : index
    %c0_78 = arith.constant 0 : index
    %255 = vector.load %arg14[%c0_77, %c0_78] : memref<128x256xbf16, #tpu.memory_space<vmem>>, vector<128x256xbf16>
    %256 = arith.truncf %254 : vector<8x128xf32> to vector<8x128xbf16>
    %cst_79 = arith.constant dense<0.000000e+00> : vector<8x256xf32>
    %257 = tpu.matmul %256, %255, %cst_79 {dimension_numbers = #tpu.dot_dimension_numbers<[1], [0], [0], [1], [0, 0, 1, 1], [], []>} : vector<8x128xbf16>, vector<128x256xbf16>, vector<8x256xf32> -> vector<8x256xf32>
    %cst_80 = arith.constant 0.000000e+00 : f32
    %258 = vector.broadcast %cst_80 : f32 to vector<8x256xf32>
    %259 = arith.maximumf %257, %258 : vector<8x256xf32>
    %c0_81 = arith.constant 0 : index
    %c0_82 = arith.constant 0 : index
    %260 = vector.load %arg15[%c0_81, %c0_82] : memref<256x128xbf16, #tpu.memory_space<vmem>>, vector<256x128xbf16>
    %261 = arith.truncf %259 : vector<8x256xf32> to vector<8x256xbf16>
    %cst_83 = arith.constant dense<0.000000e+00> : vector<8x128xf32>
    %262 = tpu.matmul %261, %260, %cst_83 {dimension_numbers = #tpu.dot_dimension_numbers<[1], [0], [0], [1], [0, 0, 1, 1], [], []>} : vector<8x256xbf16>, vector<256x128xbf16>, vector<8x128xf32> -> vector<8x128xf32>
    %263 = arith.addf %241, %262 : vector<8x128xf32>
    %c0_84 = arith.constant 0 : index
    %c0_85 = arith.constant 0 : index
    %c0_86 = arith.constant 0 : index
    %264 = vector.load %arg16[%c0_84, %c0_85, %c0_86] : memref<1x8x128xf32, #tpu.memory_space<vmem>>, vector<1x8x128xf32>
    %265 = vector.shape_cast %264 : vector<1x8x128xf32> to vector<8x128xf32>
    %266 = vector.shape_cast %263 : vector<8x128xf32> to vector<1x8x128xf32>
    tpu.vector_store %arg16[%c0_84, %c0_85, %c0_86], %266 {strides = array<i32>} : memref<1x8x128xf32, #tpu.memory_space<vmem>>, vector<1x8x128xf32>,
    return
  }
  func.func @transform_0(%arg0: i32) -> (i32, i32, i32) {
    %c0_i32 = arith.constant 0 : i32
    %c0_i32_0 = arith.constant 0 : i32
    %c0_i32_1 = arith.constant 0 : i32
    return %arg0, %c0_i32, %c0_i32_0 : i32, i32, i32
  }
  func.func @transform_1(%arg0: i32) -> (i32, i32, i32) {
    %c0_i32 = arith.constant 0 : i32
    %c0_i32_0 = arith.constant 0 : i32
    %c0_i32_1 = arith.constant 0 : i32
    return %arg0, %c0_i32, %c0_i32_0 : i32, i32, i32
  }
  func.func @transform_2(%arg0: i32) -> (i32, i32, i32) {
    %c0_i32 = arith.constant 0 : i32
    %c0_i32_0 = arith.constant 0 : i32
    %c0_i32_1 = arith.constant 0 : i32
    return %arg0, %c0_i32, %c0_i32_0 : i32, i32, i32
  }
  func.func @transform_3(%arg0: i32) -> (i32, i32, i32) {
    %c0_i32 = arith.constant 0 : i32
    %c0_i32_0 = arith.constant 0 : i32
    %c0_i32_1 = arith.constant 0 : i32
    %c0_i32_2 = arith.constant 0 : i32
    return %c0_i32, %c0_i32_0, %c0_i32_1 : i32, i32, i32
  }
  func.func @transform_4(%arg0: i32) -> (i32, i32) {
    %c0_i32 = arith.constant 0 : i32
    %c0_i32_0 = arith.constant 0 : i32
    %c0_i32_1 = arith.constant 0 : i32
    return %c0_i32, %c0_i32_0 : i32, i32
  }
  func.func @transform_5(%arg0: i32) -> (i32, i32) {
    %c0_i32 = arith.constant 0 : i32
    %c0_i32_0 = arith.constant 0 : i32
    %c0_i32_1 = arith.constant 0 : i32
    return %c0_i32, %c0_i32_0 : i32, i32
  }
  func.func @transform_6(%arg0: i32) -> (i32, i32) {
    %c0_i32 = arith.constant 0 : i32
    %c0_i32_0 = arith.constant 0 : i32
    %c0_i32_1 = arith.constant 0 : i32
    return %c0_i32, %c0_i32_0 : i32, i32
  }
  func.func @transform_7(%arg0: i32) -> (i32, i32) {
    %c0_i32 = arith.constant 0 : i32
    %c0_i32_0 = arith.constant 0 : i32
    %c0_i32_1 = arith.constant 0 : i32
    return %c0_i32, %c0_i32_0 : i32, i32
  }
  func.func @transform_8(%arg0: i32) -> (i32, i32) {
    %c0_i32 = arith.constant 0 : i32
    %c0_i32_0 = arith.constant 0 : i32
    %c0_i32_1 = arith.constant 0 : i32
    return %c0_i32, %c0_i32_0 : i32, i32
  }
  func.func @transform_9(%arg0: i32) -> (i32, i32) {
    %c0_i32 = arith.constant 0 : i32
    %c0_i32_0 = arith.constant 0 : i32
    %c0_i32_1 = arith.constant 0 : i32
    return %c0_i32, %c0_i32_0 : i32, i32
  }
  func.func @transform_10(%arg0: i32) -> (i32, i32) {
    %c0_i32 = arith.constant 0 : i32
    %c0_i32_0 = arith.constant 0 : i32
    %c0_i32_1 = arith.constant 0 : i32
    return %c0_i32, %c0_i32_0 : i32, i32
  }
  func.func @transform_11(%arg0: i32) -> (i32, i32) {
    %c0_i32 = arith.constant 0 : i32
    %c0_i32_0 = arith.constant 0 : i32
    %c0_i32_1 = arith.constant 0 : i32
    return %c0_i32, %c0_i32_0 : i32, i32
  }
  func.func @transform_12(%arg0: i32) -> (i32, i32) {
    %c0_i32 = arith.constant 0 : i32
    %c0_i32_0 = arith.constant 0 : i32
    %c0_i32_1 = arith.constant 0 : i32
    return %c0_i32, %c0_i32_0 : i32, i32
  }
  func.func @transform_13(%arg0: i32) -> (i32, i32) {
    %c0_i32 = arith.constant 0 : i32
    %c0_i32_0 = arith.constant 0 : i32
    %c0_i32_1 = arith.constant 0 : i32
    return %c0_i32, %c0_i32_0 : i32, i32
  }
  func.func @transform_14(%arg0: i32) -> (i32, i32) {
    %c0_i32 = arith.constant 0 : i32
    %c0_i32_0 = arith.constant 0 : i32
    %c0_i32_1 = arith.constant 0 : i32
    return %c0_i32, %c0_i32_0 : i32, i32
  }
  func.func @transform_15(%arg0: i32) -> (i32, i32, i32) {
    %c0_i32 = arith.constant 0 : i32
    %c0_i32_0 = arith.constant 0 : i32
    %c0_i32_1 = arith.constant 0 : i32
    return %arg0, %c0_i32, %c0_i32_0 : i32, i32, i32
  }
}

</mosaic_0001>

<llo_original>
// kernel: generator_forward.9
$region0: #{generator_forward.9}
  #allocation0 [shape = 'u32[]', space=smem, size = 0x4, offset = 0x4, fixed_abs, tag = 'smem constant byte address 0x4 - core index']
  #allocation1 [shape = 'u32[144,128]{1,0:T(1,128)}', space=vmem, size = 0x12000, scoped, tag = 'internal scratch']
  %s0 = inlined_call_operand.vmem [shape: f32[16,128], index: 0, kind: input, shape index: {}]
  %s1 = inlined_call_operand.vmem [shape: s32[16,1], index: 1, kind: input, shape index: {}]
  %s2 = inlined_call_operand.vmem [shape: f32[1,128], index: 2, kind: input, shape index: {}]
  %s3 = inlined_call_operand.vmem [shape: bf16[128,128], index: 3, kind: input, shape index: {}]
  %s4 = inlined_call_operand.hbm [shape: f32[16,128], index: 4, kind: output, shape index: {0}]
  %s5 = inlined_call_operand.vmem [shape: f32[16,1], index: 5, kind: output, shape index: {1}]
  %6 = xla_tuple %s4, %s5
  %s7 = sld [smem:[#allocation0]]
  $region57: #{generator_forward.9} parent=0
    _
  %s9 = ssub.s32 1, %s7
  %s10 = scalar_select 0, %s9, %s7
  $region1: #{generator_forward.9} parent=0
    #allocation2 [shape = 'u8[8192]{0}', space=vmem, size = 0x2000, scoped, tag = 'output window, operand 0']
    #allocation3 [shape = 's32[2]{0}', space=sflag, size = 0x8, scoped, tag = 'scoped memory for generator_forward.9']
    %11 = vsyncpa [#allocation3], 0
    %s12 = scalar_lea.sflag [#allocation3], 1
    %13 = vsyncpa %s12, 0
    loop: start=0, step=1, limit=4
    $region2: #{generator_forward.9} parent=1 // loop_pre_header
      _
    $region3: #{generator_forward.9} parent=1 // loop_header
      %s15 = sphi 0, %s19
      %p16 = scmp.ge.s32.totalorder %s15, 4
      %s25 = sphi 0, %s27
      %s28 = sphi 0, %s25
      %s29 = sphi 0, %s28
      %s45 = sphi 0, %s29
      %s51 = sphi 0, %s53
      %s54 = sphi 0, %s51
      %s55 = sphi 0, %s54
      %s71 = sphi 0, %s55
      %s75 = sphi 0, %s75
      %s77 = sphi 0, %s75
      %s78 = sphi 0, %s77
      %s92 = sphi 0, %s78
      %s96 = sphi 0, %s96
      %s98 = sphi 0, %s96
      %s99 = sphi 0, %s98
      %s113 = sphi 0, %s99
      %s119 = sphi 0, %s121
      %s122 = sphi 0, %s119
      %s123 = sphi 0, %s122
      %s139 = sphi 0, %s123
      %s145 = sphi 0, %s147
      %s148 = sphi 0, %s145
      %s149 = sphi 0, %s148
      %s165 = sphi 0, %s149
    $region4: #{generator_forward.9} parent=1 // loop_header_branch
      %18 = sbr.rel (%p16) target = $region8
    $region5: #{generator_forward.9} parent=1 // loop_body
      %s20 = ssub.s32 %s15, 1
      %s21 = ssub.s32 %s15, 2
      %s22 = sadd.s32 %s15, 1
      %s23 = ssub.s32 %s15, %s22
      %p24 = scmp.eq.s32.totalorder %s23, 0
      %s26 = sadd.s32 %s25, 1
      %s27 = scalar_select %p24, %s25, %s26
      %p30 = pneg %p24
      %p31 = scmp.eq.s32.totalorder %s15, 1
      %p32 = por %p30, %p31
      %p33 = scmp.ne.s32.totalorder %s25, %s28
      %p34 = scmp.eq.s32.totalorder %s15, 0
      %p35 = por %p33, %p34
      %p36 = scmp.ne.s32.totalorder %s25, %s28
      %p37 = scmp.eq.s32.totalorder %s20, 1
      %p38 = por %p36, %p37
      %p39 = scmp.ne.s32.totalorder %s28, %s29
      %p40 = scmp.eq.s32.totalorder %s20, 0
      %p41 = por %p39, %p40
      %p42 = scmp.ne.s32.totalorder %s28, %s29
      %p43 = scmp.eq.s32.totalorder %s21, 1
      %p44 = por %p42, %p43
      %p46 = scmp.ne.s32.totalorder %s29, %s45
      %p47 = scmp.eq.s32.totalorder %s21, 0
      %p48 = por %p46, %p47
      %s49 = ssub.s32 %s15, %s22
      %p50 = scmp.eq.s32.totalorder %s49, 0
      %s52 = sadd.s32 %s51, 1
      %s53 = scalar_select %p50, %s51, %s52
      %p56 = pneg %p50
      %p57 = scmp.eq.s32.totalorder %s15, 1
      %p58 = por %p56, %p57
      %p59 = scmp.ne.s32.totalorder %s51, %s54
      %p60 = scmp.eq.s32.totalorder %s15, 0
      %p61 = por %p59, %p60
      %p62 = scmp.ne.s32.totalorder %s51, %s54
      %p63 = scmp.eq.s32.totalorder %s20, 1
      %p64 = por %p62, %p63
      %p65 = scmp.ne.s32.totalorder %s54, %s55
      %p66 = scmp.eq.s32.totalorder %s20, 0
      %p67 = por %p65, %p66
      %p68 = scmp.ne.s32.totalorder %s54, %s55
      %p69 = scmp.eq.s32.totalorder %s21, 1
      %p70 = por %p68, %p69
      %p72 = scmp.ne.s32.totalorder %s55, %s71
      %p73 = scmp.eq.s32.totalorder %s21, 0
      %p74 = por %p72, %p73
      %s76 = sadd.s32 %s75, 1
      %p79 = scmp.eq.s32.totalorder %s15, 1
      %p80 = scmp.ne.s32.totalorder %s75, %s77
      %p81 = scmp.eq.s32.totalorder %s15, 0
      %p82 = por %p80, %p81
      %p83 = scmp.ne.s32.totalorder %s75, %s77
      %p84 = scmp.eq.s32.totalorder %s20, 1
      %p85 = por %p83, %p84
      %p86 = scmp.ne.s32.totalorder %s77, %s78
      %p87 = scmp.eq.s32.totalorder %s20, 0
      %p88 = por %p86, %p87
      %p89 = scmp.ne.s32.totalorder %s77, %s78
      %p90 = scmp.eq.s32.totalorder %s21, 1
      %p91 = por %p89, %p90
      %p93 = scmp.ne.s32.totalorder %s78, %s92
      %p94 = scmp.eq.s32.totalorder %s21, 0
      %p95 = por %p93, %p94
      %s97 = sadd.s32 %s96, 1
      %p100 = scmp.eq.s32.totalorder %s15, 1
      %p101 = scmp.ne.s32.totalorder %s96, %s98
      %p102 = scmp.eq.s32.totalorder %s15, 0
      %p103 = por %p101, %p102
      %p104 = scmp.ne.s32.totalorder %s96, %s98
      %p105 = scmp.eq.s32.totalorder %s20, 1
      %p106 = por %p104, %p105
      %p107 = scmp.ne.s32.totalorder %s98, %s99
      %p108 = scmp.eq.s32.totalorder %s20, 0
      %p109 = por %p107, %p108
      %p110 = scmp.ne.s32.totalorder %s98, %s99
      %p111 = scmp.eq.s32.totalorder %s21, 1
      %p112 = por %p110, %p111
      %p114 = scmp.ne.s32.totalorder %s99, %s113
      %p115 = scmp.eq.s32.totalorder %s21, 0
      %p116 = por %p114, %p115
      %s117 = ssub.s32 %s15, %s22
      %p118 = scmp.eq.s32.totalorder %s117, 0
      %s120 = sadd.s32 %s119, 1
      %s121 = scalar_select %p118, %s119, %s120
      %p124 = pneg %p118
      %p125 = scmp.eq.s32.totalorder %s15, 1
      %p126 = por %p124, %p125
      %p127 = scmp.ne.s32.totalorder %s119, %s122
      %p128 = scmp.eq.s32.totalorder %s15, 0
      %p129 = por %p127, %p128
      %p130 = scmp.ne.s32.totalorder %s119, %s122
      %p131 = scmp.eq.s32.totalorder %s20, 1
      %p132 = por %p130, %p131
      %p133 = scmp.ne.s32.totalorder %s122, %s123
      %p134 = scmp.eq.s32.totalorder %s20, 0
      %p135 = por %p133, %p134
      %p136 = scmp.ne.s32.totalorder %s122, %s123
      %p137 = scmp.eq.s32.totalorder %s21, 1
      %p138 = por %p136, %p137
      %p140 = scmp.ne.s32.totalorder %s123, %s139
      %p141 = scmp.eq.s32.totalorder %s21, 0
      %p142 = por %p140, %p141
      %s143 = ssub.s32 %s15, %s22
      %p144 = scmp.eq.s32.totalorder %s143, 0
      %s146 = sadd.s32 %s145, 1
      %s147 = scalar_select %p144, %s145, %s146
      %p150 = pneg %p144
      %p151 = scmp.eq.s32.totalorder %s15, 1
      %p152 = por %p150, %p151
      %p153 = scmp.ne.s32.totalorder %s145, %s148
      %p154 = scmp.eq.s32.totalorder %s15, 0
      %p155 = por %p153, %p154
      %p156 = scmp.ne.s32.totalorder %s145, %s148
      %p157 = scmp.eq.s32.totalorder %s20, 1
      %p158 = por %p156, %p157
      %p159 = scmp.ne.s32.totalorder %s148, %s149
      %p160 = scmp.eq.s32.totalorder %s20, 0
      %p161 = por %p159, %p160
      %p162 = scmp.ne.s32.totalorder %s148, %s149
      %p163 = scmp.eq.s32.totalorder %s21, 1
      %p164 = por %p162, %p163
      %p166 = scmp.ne.s32.totalorder %s149, %s165
      %p167 = scmp.eq.s32.totalorder %s21, 0
      %p168 = por %p166, %p167
      %p169 = scmp.le.s32.totalorder 1, %s15
      %p170 = scmp.lt.s32.totalorder %s15, 3
      %p171 = pnand %p169, %p170
      %p172 = pneg %p171
      // Predicated region
      $region9: #{generator_forward.9} parent=5 // pred_check
        _
      $region10: #{generator_forward.9} parent=5 // pred_check_branch
        %174 = sbr.rel (%p171) target = $region12
      $region11: #{generator_forward.9} parent=5 // pred_region
        %s175 = ssub.s32 %s15, 1
        // Predicated region
        $region13: #{generator_forward.9} parent=11 // pred_check
          %p176 = pneg %p88
        $region14: #{generator_forward.9} parent=11 // pred_check_branch
          %178 = sbr.rel (%p176) target = $region16
        $region15: #{generator_forward.9} parent=11 // pred_region
          _
        $region16: #{generator_forward.9} parent=11 // pred_fallthru
          _
        // Predicated region
        $region17: #{generator_forward.9} parent=11 // pred_check
          %p179 = pneg %p109
        $region18: #{generator_forward.9} parent=11 // pred_check_branch
          %181 = sbr.rel (%p179) target = $region20
        $region19: #{generator_forward.9} parent=11 // pred_region
          _
        $region20: #{generator_forward.9} parent=11 // pred_fallthru
          _
      $region12: #{generator_forward.9} parent=5 // pred_fallthru
        _
      %p182 = scmp.lt.s32.totalorder %s15, 2
      // Predicated region
      $region21: #{generator_forward.9} parent=5 // pred_check
        %p183 = pneg %p182
      $region22: #{generator_forward.9} parent=5 // pred_check_branch
        %185 = sbr.rel (%p183) target = $region24
      $region23: #{generator_forward.9} parent=5 // pred_region
        // Predicated region
        $region25: #{generator_forward.9} parent=23 // pred_check
          %p186 = pneg %p35
        $region26: #{generator_forward.9} parent=23 // pred_check_branch
          %188 = sbr.rel (%p186) target = $region28
        $region27: #{generator_forward.9} parent=23 // pred_region
          %p189 = scmp.lt.s32.totalorder %s15, 1
          %s190 = scalar_select %p189, %s15, 1
          %s191 = smul.addr %s190, 8
          %s192 = scalar_lea.vmem %s0, %s191
        $region28: #{generator_forward.9} parent=23 // pred_fallthru
          _
        // Predicated region
        $region29: #{generator_forward.9} parent=23 // pred_check
          %p193 = pneg %p61
        $region30: #{generator_forward.9} parent=23 // pred_check_branch
          %195 = sbr.rel (%p193) target = $region32
        $region31: #{generator_forward.9} parent=23 // pred_region
          %p196 = scmp.lt.s32.totalorder %s15, 1
          %s197 = scalar_select %p196, %s15, 1
          %s198 = smul.addr %s197, 8
          %s199 = scalar_lea.vmem %s1, %s198
        $region32: #{generator_forward.9} parent=23 // pred_fallthru
          _
      $region24: #{generator_forward.9} parent=5 // pred_fallthru
        _
      %p200 = scmp.le.s32.totalorder 1, %s15
      %p201 = scmp.lt.s32.totalorder %s15, 3
      %p202 = pnand %p200, %p201
      %p203 = pneg %p202
      // Predicated region
      $region33: #{generator_forward.9} parent=5 // pred_check
        _
      $region34: #{generator_forward.9} parent=5 // pred_check_branch
        %205 = sbr.rel (%p202) target = $region36
      $region35: #{generator_forward.9} parent=5 // pred_region
        %s206 = ssub.s32 %s15, 1
        %p207 = scmp.lt.s32.totalorder %s20, 1
        %s208 = scalar_select %p207, %s20, 1
        %s209 = smul.addr %s208, 8
        %s210 = scalar_lea.vmem %s0, %s209
        %p211 = pneg %p41
        %p212 = pneg %p38
        %p213 = scmp.lt.s32.totalorder %s20, 1
        %s214 = scalar_select %p213, %s20, 1
        %s215 = smul.addr %s214, 8
        %s216 = scalar_lea.vmem %s1, %s215
        %p217 = pneg %p67
        %p218 = pneg %p64
        %p219 = pneg %p88
        %p220 = pneg %p85
        %p221 = pneg %p109
        %p222 = pneg %p106
        %p223 = pneg %p135
        %p224 = pneg %p132
        %s225 = sand.u32 %s122, 1
        %s226 = scalar_lea.sflag [#allocation3], %s225
        %s227 = sand.u32 %s122, 1
        %s228 = smul.addr %s227, 8
        %s229 = scalar_lea.vmem [#allocation2], %s228
        %p230 = pneg %p161
        %p231 = pneg %p158
        %p232 = scmp.lt.s32.totalorder %s20, 1
        %s233 = scalar_select %p232, %s20, 1
        %s234 = smul.addr %s233, 8
        %s235 = scalar_lea.vmem %s5, %s234
        %p236 = scmp.lt.s32.totalorder %s20, 1
        %s237 = scalar_select %p236, %s20, 1
        %s238 = smul.addr %s237, 8
        %s239 = scalar_lea.vmem %s0, %s238
        %p240 = scmp.lt.s32.totalorder %s20, 1
        %s241 = scalar_select %p240, %s20, 1
        %s242 = smul.addr %s241, 8
        %s243 = scalar_lea.vmem %s1, %s242
        %p244 = scmp.lt.s32.totalorder %s20, 1
        %s245 = scalar_select %p244, %s20, 1
        %s246 = smul.addr %s245, 8
        %s247 = scalar_lea.vmem %s5, %s246
        %v249 = vld [vmem:[%s239] sm:$0xff]
        %v250 = vld [vmem:[%s2] sm:$0x1]
        %v251 = vmul.f32 %v249, %v249
        %252 = vadd.xlane.f32.xlu0 %v251
        %v253 = vpop.xlane.xlu0 %252
        %v254 = vrcp.pop 128.0
        %v255 = vmul.f32 %v253, %v254
        %v256 = vadd.f32 %v255, 1e-06
        %v257 = vrsqrt.pop %v256
        %v258 = vmul.f32 %v249, %v257
        %v260 = vlaneseq
        %v261 = vshrl.u32 %v260, 7
        %v262 = vsub.s32 0, %v261
        %v263 = vrot.slane %v250, %v262
        %v265 = vmul.f32 %v258, %v263
        %v266 = vmul.f32 %v265, 0.088388346
        %v267 = vld [vmem:[%s3] sm:$0xf]
        %v268 = vld [vmem:[%s3 + $0x4] sm:$0xf]
        %v269 = vld [vmem:[%s3 + $0x8] sm:$0xf]
        %v270 = vld [vmem:[%s3 + $0xc] sm:$0xf]
        %v271 = vld [vmem:[%s3 + $0x10] sm:$0xf]
        %v272 = vld [vmem:[%s3 + $0x14] sm:$0xf]
        %v273 = vld [vmem:[%s3 + $0x18] sm:$0xf]
        %v274 = vld [vmem:[%s3 + $0x1c] sm:$0xf]
        %v275 = vld [vmem:[%s3 + $0x20] sm:$0xf]
        %v276 = vld [vmem:[%s3 + $0x24] sm:$0xf]
        %v277 = vld [vmem:[%s3 + $0x28] sm:$0xf]
        %v278 = vld [vmem:[%s3 + $0x2c] sm:$0xf]
        %v279 = vld [vmem:[%s3 + $0x30] sm:$0xf]
        %v280 = vld [vmem:[%s3 + $0x34] sm:$0xf]
        %v281 = vld [vmem:[%s3 + $0x38] sm:$0xf]
        %v282 = vld [vmem:[%s3 + $0x3c] sm:$0xf]
        %v283 = vpack.c.bf16 %v266, %v266
        %v300 = vunpack.c.l.b16 %v267
        %v301 = vunpack.c.l.b16 %v268
        %v302 = vunpack.c.l.b16 %v269
        %v303 = vunpack.c.l.b16 %v270
        %v304 = vunpack.c.l.b16 %v271
        %v305 = vunpack.c.l.b16 %v272
        %v306 = vunpack.c.l.b16 %v273
        %v307 = vunpack.c.l.b16 %v274
        %v308 = vunpack.c.l.b16 %v275
        %v309 = vunpack.c.l.b16 %v276
        %v310 = vunpack.c.l.b16 %v277
        %v311 = vunpack.c.l.b16 %v278
        %v312 = vunpack.c.l.b16 %v279
        %v313 = vunpack.c.l.b16 %v280
        %v314 = vunpack.c.l.b16 %v281
        %v315 = vunpack.c.l.b16 %v282
        %v316 = vpack.c.b16 %v301, %v300
        %v317 = vpack.c.b16 %v303, %v302
        %v318 = vpack.c.b16 %v305, %v304
        %v319 = vpack.c.b16 %v307, %v306
        %v320 = vpack.c.b16 %v309, %v308
        %v321 = vpack.c.b16 %v311, %v310
        %v322 = vpack.c.b16 %v313, %v312
        %v323 = vpack.c.b16 %v315, %v314
        %332 = vmatprep.subr.bf16.mxu0 0
        %333 = vmatpush1.bf16.msra.mxu0 %v316
        %334 = vmatprep.subr.bf16.mxu0 0
        %335 = vmatpush1.bf16.msra.mxu0 %v317
        %336 = vmatprep.subr.bf16.mxu0 0
        %337 = vmatpush1.bf16.msra.mxu0 %v318
        %338 = vmatprep.subr.bf16.mxu0 0
        %339 = vmatpush1.bf16.msra.mxu0 %v319
        %340 = vmatprep.subr.bf16.mxu0 0
        %341 = vmatpush1.bf16.msra.mxu0 %v320
        %342 = vmatprep.subr.bf16.mxu0 0
        %343 = vmatpush1.bf16.msra.mxu0 %v321
        %344 = vmatprep.subr.bf16.mxu0 0
        %345 = vmatpush1.bf16.msra.mxu0 %v322
        %346 = vmatprep.subr.bf16.mxu0 0
        %347 = vmatpush1.bf16.msra.mxu0 %v323
        %348 = vmatprep.subr.bf16.mxu0 0
        %349 = vmatpush1.bf16.msra.mxu0 0
        %350 = vmatprep.subr.bf16.mxu0 0
        %351 = vmatpush1.bf16.msra.mxu0 0
        %352 = vmatprep.subr.bf16.mxu0 0
        %353 = vmatpush1.bf16.msra.mxu0 0
        %354 = vmatprep.subr.bf16.mxu0 0
        %355 = vmatpush1.bf16.msra.mxu0 0
        %356 = vmatprep.subr.bf16.mxu0 0
        %357 = vmatpush1.bf16.msra.mxu0 0
        %358 = vmatprep.subr.bf16.mxu0 0
        %359 = vmatpush1.bf16.msra.mxu0 0
        %360 = vmatprep.subr.bf16.mxu0 0
        %361 = vmatpush1.bf16.msra.mxu0 0
        %362 = vmatprep.subr.bf16.mxu0 0
        %363 = vmatpush1.bf16.msra.mxu0 0
        %364 = vmatprep.mubr.bf16.mxu0 0
        %365 = vmatmul.mubr.bf16.gmra.mrb[0].mxu0 %v283
        %v366 = vpop.f32.mrb[0].mxu0
        %v367 = vadd.f32 0.0, %v366
        %v368 = vpop.f32.mrb[0].mxu0
        %v369 = vpop.f32.mrb[0].mxu0
        %v370 = vpop.f32.mrb[0].mxu0
        %371 = vdwg.mxu0
        %372 = vst [vmem:[%s229] sm:$0xff] %v367
        %373 = vmax.xlane.f32.xlu0 %v367
        %v374 = vpop.xlane.xlu0 %373
        %v375 = vsub.f32 %v367, %v374
        %v376 = vmul.f32 %v375, 1.442695
        %v377 = vpow.pop %v376
        %378 = vadd.xlane.f32.xlu0 %v377
        %v379 = vpop.xlane.xlu0 %378
        %v380 = vlog2.pop %v379
        %v381 = vmul.f32 %v380, 0.6931472
        %v382 = vadd.f32 %v381, %v374
        %v383 = vld [vmem:[%s243] sm:$0xff]
        %v384 = vlaneseq
        %v385 = vand.u32 %v384, 127
        %386 = vset.pattern.permute.xlu0 0
        %387 = vperm.xlu0 %386, %v383
        %v388 = vpop.permute.xlu0 %387
        %vm389 = vcmp.eq.s32.totalorder %v385, %v388
        %v390 = vsel %vm389, %v367, 0.0
        %391 = vadd.xlane.f32.xlu0 %v390
        %v392 = vpop.xlane.xlu0 %391
        %vm393 = vcmp.ne.s32.totalorder %v383, 4294967196
        %v394 = vsub.f32 %v382, %v392
        %v395 = vsel %vm393, %v394, 0.0
        %vm396 = vcmask 7168
        %397 = vst.msk [vmem:[%s247] sm:$0xff] %vm396, %v395
        %s398 = sand.u32 %s122, 1
        %s399 = scalar_lea.sflag [#allocation3], %s398
        %s400 = sand.u32 %s122, 1
        %s401 = smul.addr %s400, 8
        %s402 = scalar_lea.vmem [#allocation2], %s401
        %p403 = scmp.lt.s32.totalorder %s20, 1
        %s404 = scalar_select %p403, %s20, 1
        %s405 = smul.addr %s404, 8
        %s406 = scalar_lea.vmem %s5, %s405
        // Predicated region
        $region37: #{generator_forward.9} parent=35 // pred_check
          %p407 = pneg %p132
        $region38: #{generator_forward.9} parent=35 // pred_check_branch
          %409 = sbr.rel (%p407) target = $region40
        $region39: #{generator_forward.9} parent=35 // pred_region
          %s411 = ssub.s32 128, 128
          %412 = vsyncadd %s399, %s411
          %s413 = smul.addr %s20, 128
          %s414 = scalar_lea.hbm %s4, %s413
          %s416 = sshll.u32 %s402, 4
          %s417 = int_to_ptr.vmem [resolvable:$true] %s416
          %419 = dma.vmem_to_hbm [thread:$0]  %s417, 128, %s414, %s399
        $region40: #{generator_forward.9} parent=35 // pred_fallthru
          _
        // Predicated region
        $region41: #{generator_forward.9} parent=35 // pred_check
          %p420 = pneg %p158
        $region42: #{generator_forward.9} parent=35 // pred_check_branch
          %422 = sbr.rel (%p420) target = $region44
        $region43: #{generator_forward.9} parent=35 // pred_region
          _
        $region44: #{generator_forward.9} parent=35 // pred_fallthru
          _
      $region36: #{generator_forward.9} parent=5 // pred_fallthru
        _
      %p423 = scmp.le.s32.totalorder 2, %s15
      // Predicated region
      $region45: #{generator_forward.9} parent=5 // pred_check
        %p424 = pneg %p423
      $region46: #{generator_forward.9} parent=5 // pred_check_branch
        %426 = sbr.rel (%p424) target = $region48
      $region47: #{generator_forward.9} parent=5 // pred_region
        %s427 = ssub.s32 %s15, 2
        // Predicated region
        $region49: #{generator_forward.9} parent=47 // pred_check
          %p428 = pneg %p138
        $region50: #{generator_forward.9} parent=47 // pred_check_branch
          %430 = sbr.rel (%p428) target = $region52
        $region51: #{generator_forward.9} parent=47 // pred_region
          %s431 = sand.u32 %s123, 1
          %s432 = scalar_lea.sflag [#allocation3], %s431
          %s433 = sand.u32 %s123, 1
          %s434 = smul.addr %s433, 8
          %s435 = scalar_lea.vmem [#allocation2], %s434
          %436 = dma.done %s432, 128
        $region52: #{generator_forward.9} parent=47 // pred_fallthru
          _
        // Predicated region
        $region53: #{generator_forward.9} parent=47 // pred_check
          %p437 = pneg %p164
        $region54: #{generator_forward.9} parent=47 // pred_check_branch
          %439 = sbr.rel (%p437) target = $region56
        $region55: #{generator_forward.9} parent=47 // pred_region
          %p440 = scmp.lt.s32.totalorder %s21, 1
          %s441 = scalar_select %p440, %s21, 1
          %s442 = smul.addr %s441, 8
          %s443 = scalar_lea.vmem %s5, %s442
        $region56: #{generator_forward.9} parent=47 // pred_fallthru
          _
      $region48: #{generator_forward.9} parent=5 // pred_fallthru
        _
    $region6: #{generator_forward.9} parent=1 // loop_footer
      %s19 = sadd.s32 1, %s15
    $region7: #{generator_forward.9} parent=1 // loop_footer_branch
      %14 = sbr.rel target = $region3
    $region8: #{generator_forward.9} parent=1 // loop_exit
      _
    %444 = vsyncpa [#allocation3], 1
    %s445 = scalar_lea.sflag [#allocation3], 1
    %446 = vsyncpa %s445, 1

// kernel: generator_forward.5
$region0: #{generator_forward.5}
  #allocation0 [shape = 'u32[]', space=smem, size = 0x4, offset = 0x4, fixed_abs, tag = 'smem constant byte address 0x4 - core index']
  #allocation1 [shape = 'u32[144,128]{1,0:T(1,128)}', space=vmem, size = 0x12000, scoped, tag = 'internal scratch']
  %s0 = inlined_call_operand.vmem [shape: f32[2,16,128], index: 0, kind: input, shape index: {}]
  %s1 = inlined_call_operand.vmem [shape: f32[2,1,16], index: 1, kind: input, shape index: {}]
  %s2 = inlined_call_operand.vmem [shape: f32[4,16,16], index: 2, kind: input, shape index: {}]
  %s3 = inlined_call_operand.vmem [shape: f32[1,128], index: 3, kind: input, shape index: {}]
  %s4 = inlined_call_operand.vmem [shape: bf16[128,384], index: 4, kind: input, shape index: {}]
  %s5 = inlined_call_operand.vmem [shape: bf16[128,128], index: 5, kind: input, shape index: {}]
  %s6 = inlined_call_operand.vmem [shape: f32[1,128], index: 6, kind: input, shape index: {}]
  %s7 = inlined_call_operand.vmem [shape: bf16[128,256], index: 7, kind: input, shape index: {}]
  %s8 = inlined_call_operand.vmem [shape: bf16[256,128], index: 8, kind: input, shape index: {}]
  %s9 = inlined_call_operand.vmem [shape: f32[2,16,128], index: 9, kind: output, shape index: {}]
  %s10 = sld [smem:[#allocation0]]
  $region69: #{generator_forward.5} parent=0
    _
  %s12 = ssub.s32 1, %s10
  %s13 = scalar_select 0, %s12, %s10
  loop: start=0, step=1, limit=4
  $region2: #{generator_forward.5} parent=0 // loop_pre_header
    _
  $region3: #{generator_forward.5} parent=0 // loop_header
    %s15 = sphi 0, %s19
    %p16 = scmp.ge.s32.totalorder %s15, 4
    %s25 = sphi 0, %s27
    %s28 = sphi 0, %s25
    %s29 = sphi 0, %s28
    %s45 = sphi 0, %s29
    %s51 = sphi 0, %s53
    %s54 = sphi 0, %s51
    %s55 = sphi 0, %s54
    %s71 = sphi 0, %s55
    %s75 = sphi 0, %s75
    %s77 = sphi 0, %s75
    %s78 = sphi 0, %s77
    %s92 = sphi 0, %s78
    %s96 = sphi 0, %s96
    %s98 = sphi 0, %s96
    %s99 = sphi 0, %s98
    %s113 = sphi 0, %s99
    %s117 = sphi 0, %s117
    %s119 = sphi 0, %s117
    %s120 = sphi 0, %s119
    %s134 = sphi 0, %s120
    %s138 = sphi 0, %s138
    %s140 = sphi 0, %s138
    %s141 = sphi 0, %s140
    %s155 = sphi 0, %s141
    %s159 = sphi 0, %s159
    %s161 = sphi 0, %s159
    %s162 = sphi 0, %s161
    %s176 = sphi 0, %s162
    %s180 = sphi 0, %s180
    %s182 = sphi 0, %s180
    %s183 = sphi 0, %s182
    %s197 = sphi 0, %s183
    %s201 = sphi 0, %s201
    %s203 = sphi 0, %s201
    %s204 = sphi 0, %s203
    %s218 = sphi 0, %s204
    %s224 = sphi 0, %s226
    %s227 = sphi 0, %s224
    %s228 = sphi 0, %s227
    %s244 = sphi 0, %s228
  $region4: #{generator_forward.5} parent=0 // loop_header_branch
    %18 = sbr.rel (%p16) target = $region8
  $region5: #{generator_forward.5} parent=0 // loop_body
    %s20 = ssub.s32 %s15, 1
    %s21 = ssub.s32 %s15, 2
    %s22 = sadd.s32 %s15, 1
    %s23 = ssub.s32 %s15, %s22
    %p24 = scmp.eq.s32.totalorder %s23, 0
    %s26 = sadd.s32 %s25, 1
    %s27 = scalar_select %p24, %s25, %s26
    %p30 = pneg %p24
    %p31 = scmp.eq.s32.totalorder %s15, 1
    %p32 = por %p30, %p31
    %p33 = scmp.ne.s32.totalorder %s25, %s28
    %p34 = scmp.eq.s32.totalorder %s15, 0
    %p35 = por %p33, %p34
    %p36 = scmp.ne.s32.totalorder %s25, %s28
    %p37 = scmp.eq.s32.totalorder %s20, 1
    %p38 = por %p36, %p37
    %p39 = scmp.ne.s32.totalorder %s28, %s29
    %p40 = scmp.eq.s32.totalorder %s20, 0
    %p41 = por %p39, %p40
    %p42 = scmp.ne.s32.totalorder %s28, %s29
    %p43 = scmp.eq.s32.totalorder %s21, 1
    %p44 = por %p42, %p43
    %p46 = scmp.ne.s32.totalorder %s29, %s45
    %p47 = scmp.eq.s32.totalorder %s21, 0
    %p48 = por %p46, %p47
    %s49 = ssub.s32 %s15, %s22
    %p50 = scmp.eq.s32.totalorder %s49, 0
    %s52 = sadd.s32 %s51, 1
    %s53 = scalar_select %p50, %s51, %s52
    %p56 = pneg %p50
    %p57 = scmp.eq.s32.totalorder %s15, 1
    %p58 = por %p56, %p57
    %p59 = scmp.ne.s32.totalorder %s51, %s54
    %p60 = scmp.eq.s32.totalorder %s15, 0
    %p61 = por %p59, %p60
    %p62 = scmp.ne.s32.totalorder %s51, %s54
    %p63 = scmp.eq.s32.totalorder %s20, 1
    %p64 = por %p62, %p63
    %p65 = scmp.ne.s32.totalorder %s54, %s55
    %p66 = scmp.eq.s32.totalorder %s20, 0
    %p67 = por %p65, %p66
    %p68 = scmp.ne.s32.totalorder %s54, %s55
    %p69 = scmp.eq.s32.totalorder %s21, 1
    %p70 = por %p68, %p69
    %p72 = scmp.ne.s32.totalorder %s55, %s71
    %p73 = scmp.eq.s32.totalorder %s21, 0
    %p74 = por %p72, %p73
    %s76 = sadd.s32 %s75, 1
    %p79 = scmp.eq.s32.totalorder %s15, 1
    %p80 = scmp.ne.s32.totalorder %s75, %s77
    %p81 = scmp.eq.s32.totalorder %s15, 0
    %p82 = por %p80, %p81
    %p83 = scmp.ne.s32.totalorder %s75, %s77
    %p84 = scmp.eq.s32.totalorder %s20, 1
    %p85 = por %p83, %p84
    %p86 = scmp.ne.s32.totalorder %s77, %s78
    %p87 = scmp.eq.s32.totalorder %s20, 0
    %p88 = por %p86, %p87
    %p89 = scmp.ne.s32.totalorder %s77, %s78
    %p90 = scmp.eq.s32.totalorder %s21, 1
    %p91 = por %p89, %p90
    %p93 = scmp.ne.s32.totalorder %s78, %s92
    %p94 = scmp.eq.s32.totalorder %s21, 0
    %p95 = por %p93, %p94
    %s97 = sadd.s32 %s96, 1
    %p100 = scmp.eq.s32.totalorder %s15, 1
    %p101 = scmp.ne.s32.totalorder %s96, %s98
    %p102 = scmp.eq.s32.totalorder %s15, 0
    %p103 = por %p101, %p102
    %p104 = scmp.ne.s32.totalorder %s96, %s98
    %p105 = scmp.eq.s32.totalorder %s20, 1
    %p106 = por %p104, %p105
    %p107 = scmp.ne.s32.totalorder %s98, %s99
    %p108 = scmp.eq.s32.totalorder %s20, 0
    %p109 = por %p107, %p108
    %p110 = scmp.ne.s32.totalorder %s98, %s99
    %p111 = scmp.eq.s32.totalorder %s21, 1
    %p112 = por %p110, %p111
    %p114 = scmp.ne.s32.totalorder %s99, %s113
    %p115 = scmp.eq.s32.totalorder %s21, 0
    %p116 = por %p114, %p115
    %s118 = sadd.s32 %s117, 1
    %p121 = scmp.eq.s32.totalorder %s15, 1
    %p122 = scmp.ne.s32.totalorder %s117, %s119
    %p123 = scmp.eq.s32.totalorder %s15, 0
    %p124 = por %p122, %p123
    %p125 = scmp.ne.s32.totalorder %s117, %s119
    %p126 = scmp.eq.s32.totalorder %s20, 1
    %p127 = por %p125, %p126
    %p128 = scmp.ne.s32.totalorder %s119, %s120
    %p129 = scmp.eq.s32.totalorder %s20, 0
    %p130 = por %p128, %p129
    %p131 = scmp.ne.s32.totalorder %s119, %s120
    %p132 = scmp.eq.s32.totalorder %s21, 1
    %p133 = por %p131, %p132
    %p135 = scmp.ne.s32.totalorder %s120, %s134
    %p136 = scmp.eq.s32.totalorder %s21, 0
    %p137 = por %p135, %p136
    %s139 = sadd.s32 %s138, 1
    %p142 = scmp.eq.s32.totalorder %s15, 1
    %p143 = scmp.ne.s32.totalorder %s138, %s140
    %p144 = scmp.eq.s32.totalorder %s15, 0
    %p145 = por %p143, %p144
    %p146 = scmp.ne.s32.totalorder %s138, %s140
    %p147 = scmp.eq.s32.totalorder %s20, 1
    %p148 = por %p146, %p147
    %p149 = scmp.ne.s32.totalorder %s140, %s141
    %p150 = scmp.eq.s32.totalorder %s20, 0
    %p151 = por %p149, %p150
    %p152 = scmp.ne.s32.totalorder %s140, %s141
    %p153 = scmp.eq.s32.totalorder %s21, 1
    %p154 = por %p152, %p153
    %p156 = scmp.ne.s32.totalorder %s141, %s155
    %p157 = scmp.eq.s32.totalorder %s21, 0
    %p158 = por %p156, %p157
    %s160 = sadd.s32 %s159, 1
    %p163 = scmp.eq.s32.totalorder %s15, 1
    %p164 = scmp.ne.s32.totalorder %s159, %s161
    %p165 = scmp.eq.s32.totalorder %s15, 0
    %p166 = por %p164, %p165
    %p167 = scmp.ne.s32.totalorder %s159, %s161
    %p168 = scmp.eq.s32.totalorder %s20, 1
    %p169 = por %p167, %p168
    %p170 = scmp.ne.s32.totalorder %s161, %s162
    %p171 = scmp.eq.s32.totalorder %s20, 0
    %p172 = por %p170, %p171
    %p173 = scmp.ne.s32.totalorder %s161, %s162
    %p174 = scmp.eq.s32.totalorder %s21, 1
    %p175 = por %p173, %p174
    %p177 = scmp.ne.s32.totalorder %s162, %s176
    %p178 = scmp.eq.s32.totalorder %s21, 0
    %p179 = por %p177, %p178
    %s181 = sadd.s32 %s180, 1
    %p184 = scmp.eq.s32.totalorder %s15, 1
    %p185 = scmp.ne.s32.totalorder %s180, %s182
    %p186 = scmp.eq.s32.totalorder %s15, 0
    %p187 = por %p185, %p186
    %p188 = scmp.ne.s32.totalorder %s180, %s182
    %p189 = scmp.eq.s32.totalorder %s20, 1
    %p190 = por %p188, %p189
    %p191 = scmp.ne.s32.totalorder %s182, %s183
    %p192 = scmp.eq.s32.totalorder %s20, 0
    %p193 = por %p191, %p192
    %p194 = scmp.ne.s32.totalorder %s182, %s183
    %p195 = scmp.eq.s32.totalorder %s21, 1
    %p196 = por %p194, %p195
    %p198 = scmp.ne.s32.totalorder %s183, %s197
    %p199 = scmp.eq.s32.totalorder %s21, 0
    %p200 = por %p198, %p199
    %s202 = sadd.s32 %s201, 1
    %p205 = scmp.eq.s32.totalorder %s15, 1
    %p206 = scmp.ne.s32.totalorder %s201, %s203
    %p207 = scmp.eq.s32.totalorder %s15, 0
    %p208 = por %p206, %p207
    %p209 = scmp.ne.s32.totalorder %s201, %s203
    %p210 = scmp.eq.s32.totalorder %s20, 1
    %p211 = por %p209, %p210
    %p212 = scmp.ne.s32.totalorder %s203, %s204
    %p213 = scmp.eq.s32.totalorder %s20, 0
    %p214 = por %p212, %p213
    %p215 = scmp.ne.s32.totalorder %s203, %s204
    %p216 = scmp.eq.s32.totalorder %s21, 1
    %p217 = por %p215, %p216
    %p219 = scmp.ne.s32.totalorder %s204, %s218
    %p220 = scmp.eq.s32.totalorder %s21, 0
    %p221 = por %p219, %p220
    %s222 = ssub.s32 %s15, %s22
    %p223 = scmp.eq.s32.totalorder %s222, 0
    %s225 = sadd.s32 %s224, 1
    %s226 = scalar_select %p223, %s224, %s225
    %p229 = pneg %p223
    %p230 = scmp.eq.s32.totalorder %s15, 1
    %p231 = por %p229, %p230
    %p232 = scmp.ne.s32.totalorder %s224, %s227
    %p233 = scmp.eq.s32.totalorder %s15, 0
    %p234 = por %p232, %p233
    %p235 = scmp.ne.s32.totalorder %s224, %s227
    %p236 = scmp.eq.s32.totalorder %s20, 1
    %p237 = por %p235, %p236
    %p238 = scmp.ne.s32.totalorder %s227, %s228
    %p239 = scmp.eq.s32.totalorder %s20, 0
    %p240 = por %p238, %p239
    %p241 = scmp.ne.s32.totalorder %s227, %s228
    %p242 = scmp.eq.s32.totalorder %s21, 1
    %p243 = por %p241, %p242
    %p245 = scmp.ne.s32.totalorder %s228, %s244
    %p246 = scmp.eq.s32.totalorder %s21, 0
    %p247 = por %p245, %p246
    %p248 = scmp.le.s32.totalorder 1, %s15
    %p249 = scmp.lt.s32.totalorder %s15, 3
    %p250 = pnand %p248, %p249
    %p251 = pneg %p250
    // Predicated region
    $region9: #{generator_forward.5} parent=5 // pred_check
      _
    $region10: #{generator_forward.5} parent=5 // pred_check_branch
      %253 = sbr.rel (%p250) target = $region12
    $region11: #{generator_forward.5} parent=5 // pred_region
      %s254 = ssub.s32 %s15, 1
      // Predicated region
      $region13: #{generator_forward.5} parent=11 // pred_check
        %p255 = pneg %p88
      $region14: #{generator_forward.5} parent=11 // pred_check_branch
        %257 = sbr.rel (%p255) target = $region16
      $region15: #{generator_forward.5} parent=11 // pred_region
        _
      $region16: #{generator_forward.5} parent=11 // pred_fallthru
        _
      // Predicated region
      $region17: #{generator_forward.5} parent=11 // pred_check
        %p258 = pneg %p109
      $region18: #{generator_forward.5} parent=11 // pred_check_branch
        %260 = sbr.rel (%p258) target = $region20
      $region19: #{generator_forward.5} parent=11 // pred_region
        _
      $region20: #{generator_forward.5} parent=11 // pred_fallthru
        _
      // Predicated region
      $region21: #{generator_forward.5} parent=11 // pred_check
        %p261 = pneg %p130
      $region22: #{generator_forward.5} parent=11 // pred_check_branch
        %263 = sbr.rel (%p261) target = $region24
      $region23: #{generator_forward.5} parent=11 // pred_region
        _
      $region24: #{generator_forward.5} parent=11 // pred_fallthru
        _
      // Predicated region
      $region25: #{generator_forward.5} parent=11 // pred_check
        %p264 = pneg %p151
      $region26: #{generator_forward.5} parent=11 // pred_check_branch
        %266 = sbr.rel (%p264) target = $region28
      $region27: #{generator_forward.5} parent=11 // pred_region
        _
      $region28: #{generator_forward.5} parent=11 // pred_fallthru
        _
      // Predicated region
      $region29: #{generator_forward.5} parent=11 // pred_check
        %p267 = pneg %p172
      $region30: #{generator_forward.5} parent=11 // pred_check_branch
        %269 = sbr.rel (%p267) target = $region32
      $region31: #{generator_forward.5} parent=11 // pred_region
        _
      $region32: #{generator_forward.5} parent=11 // pred_fallthru
        _
      // Predicated region
      $region33: #{generator_forward.5} parent=11 // pred_check
        %p270 = pneg %p193
      $region34: #{generator_forward.5} parent=11 // pred_check_branch
        %272 = sbr.rel (%p270) target = $region36
      $region35: #{generator_forward.5} parent=11 // pred_region
        _
      $region36: #{generator_forward.5} parent=11 // pred_fallthru
        _
      // Predicated region
      $region37: #{generator_forward.5} parent=11 // pred_check
        %p273 = pneg %p214
      $region38: #{generator_forward.5} parent=11 // pred_check_branch
        %275 = sbr.rel (%p273) target = $region40
      $region39: #{generator_forward.5} parent=11 // pred_region
        _
      $region40: #{generator_forward.5} parent=11 // pred_fallthru
        _
    $region12: #{generator_forward.5} parent=5 // pred_fallthru
      _
    %p276 = scmp.lt.s32.totalorder %s15, 2
    // Predicated region
    $region41: #{generator_forward.5} parent=5 // pred_check
      %p277 = pneg %p276
    $region42: #{generator_forward.5} parent=5 // pred_check_branch
      %279 = sbr.rel (%p277) target = $region44
    $region43: #{generator_forward.5} parent=5 // pred_region
      // Predicated region
      $region45: #{generator_forward.5} parent=43 // pred_check
        %p280 = pneg %p35
      $region46: #{generator_forward.5} parent=43 // pred_check_branch
        %282 = sbr.rel (%p280) target = $region48
      $region47: #{generator_forward.5} parent=43 // pred_region
        %p283 = scmp.lt.s32.totalorder %s15, 1
        %s284 = scalar_select %p283, %s15, 1
        %s285 = smul.addr %s284, 2
        %s286 = smul.addr %s285, 8
        %s287 = scalar_lea.vmem %s0, %s286
      $region48: #{generator_forward.5} parent=43 // pred_fallthru
        _
      // Predicated region
      $region49: #{generator_forward.5} parent=43 // pred_check
        %p288 = pneg %p61
      $region50: #{generator_forward.5} parent=43 // pred_check_branch
        %290 = sbr.rel (%p288) target = $region52
      $region51: #{generator_forward.5} parent=43 // pred_region
        %p291 = scmp.lt.s32.totalorder %s15, 1
        %s292 = scalar_select %p291, %s15, 1
        %s293 = scalar_lea.vmem %s1, %s292
      $region52: #{generator_forward.5} parent=43 // pred_fallthru
        _
    $region44: #{generator_forward.5} parent=5 // pred_fallthru
      _
    %p294 = scmp.le.s32.totalorder 1, %s15
    %p295 = scmp.lt.s32.totalorder %s15, 3
    %p296 = pnand %p294, %p295
    %p297 = pneg %p296
    // Predicated region
    $region53: #{generator_forward.5} parent=5 // pred_check
      _
    $region54: #{generator_forward.5} parent=5 // pred_check_branch
      %299 = sbr.rel (%p296) target = $region56
    $region55: #{generator_forward.5} parent=5 // pred_region
      %s300 = ssub.s32 %s15, 1
      %p301 = scmp.lt.s32.totalorder %s20, 1
      %s302 = scalar_select %p301, %s20, 1
      %s303 = smul.addr %s302, 2
      %s304 = smul.addr %s303, 8
      %s305 = scalar_lea.vmem %s0, %s304
      %p306 = pneg %p41
      %p307 = pneg %p38
      %p308 = scmp.lt.s32.totalorder %s20, 1
      %s309 = scalar_select %p308, %s20, 1
      %s310 = scalar_lea.vmem %s1, %s309
      %p311 = pneg %p67
      %p312 = pneg %p64
      %p313 = pneg %p88
      %p314 = pneg %p85
      %p315 = pneg %p109
      %p316 = pneg %p106
      %p317 = pneg %p130
      %p318 = pneg %p127
      %p319 = pneg %p151
      %p320 = pneg %p148
      %p321 = pneg %p172
      %p322 = pneg %p169
      %p323 = pneg %p193
      %p324 = pneg %p190
      %p325 = pneg %p214
      %p326 = pneg %p211
      %p327 = pneg %p240
      %p328 = pneg %p237
      %p329 = scmp.lt.s32.totalorder %s20, 1
      %s330 = scalar_select %p329, %s20, 1
      %s331 = smul.addr %s330, 2
      %s332 = smul.addr %s331, 8
      %s333 = scalar_lea.vmem %s9, %s332
      %p334 = scmp.lt.s32.totalorder %s20, 1
      %s335 = scalar_select %p334, %s20, 1
      %s336 = smul.addr %s335, 2
      %s337 = smul.addr %s336, 8
      %s338 = scalar_lea.vmem %s0, %s337
      %p339 = scmp.lt.s32.totalorder %s20, 1
      %s340 = scalar_select %p339, %s20, 1
      %s341 = scalar_lea.vmem %s1, %s340
      %p342 = scmp.lt.s32.totalorder %s20, 1
      %s343 = scalar_select %p342, %s20, 1
      %s344 = smul.addr %s343, 2
      %s345 = smul.addr %s344, 8
      %s346 = scalar_lea.vmem %s9, %s345
      %v348 = vld [vmem:[%s338] sm:$0xff]
      %v349 = vld [vmem:[%s338 + $0x8] sm:$0xff]
      %v350 = vld [vmem:[%s3] sm:$0x1]
      %v351 = vmul.f32 %v348, %v348
      %v352 = vmul.f32 %v349, %v349
      %353 = vadd.xlane.f32.xlu0 %v351
      %v354 = vpop.xlane.xlu0 %353
      %355 = vadd.xlane.f32.xlu0 %v352
      %v356 = vpop.xlane.xlu0 %355
      %v357 = vrcp.pop 128.0
      %v358 = vmul.f32 %v354, %v357
      %v359 = vmul.f32 %v356, %v357
      %v360 = vadd.f32 %v358, 1e-06
      %v361 = vadd.f32 %v359, 1e-06
      %v362 = vrsqrt.pop %v360
      %v363 = vrsqrt.pop %v361
      %v364 = vmul.f32 %v348, %v362
      %v365 = vmul.f32 %v349, %v363
      %v367 = vlaneseq
      %v368 = vshrl.u32 %v367, 7
      %v369 = vsub.s32 0, %v368
      %v370 = vrot.slane %v350, %v369
      %v372 = vmul.f32 %v364, %v370
      %v373 = vmul.f32 %v365, %v370
      %v374 = vld [vmem:[%s4] sm:$0xff]
      %v375 = vld [vmem:[%s4 + $0x8] sm:$0xf]
      %v376 = vld [vmem:[%s4 + $0xc] sm:$0xff]
      %v377 = vld [vmem:[%s4 + $0x14] sm:$0xf]
      %v378 = vld [vmem:[%s4 + $0x18] sm:$0xff]
      %v379 = vld [vmem:[%s4 + $0x20] sm:$0xf]
      %v380 = vld [vmem:[%s4 + $0x24] sm:$0xff]
      %v381 = vld [vmem:[%s4 + $0x2c] sm:$0xf]
      %v382 = vld [vmem:[%s4 + $0x30] sm:$0xff]
      %v383 = vld [vmem:[%s4 + $0x38] sm:$0xf]
      %v384 = vld [vmem:[%s4 + $0x3c] sm:$0xff]
      %v385 = vld [vmem:[%s4 + $0x44] sm:$0xf]
      %v386 = vld [vmem:[%s4 + $0x48] sm:$0xff]
      %v387 = vld [vmem:[%s4 + $0x50] sm:$0xf]
      %v388 = vld [vmem:[%s4 + $0x54] sm:$0xff]
      %v389 = vld [vmem:[%s4 + $0x5c] sm:$0xf]
      %v390 = vld [vmem:[%s4 + $0x60] sm:$0xff]
      %v391 = vld [vmem:[%s4 + $0x68] sm:$0xf]
      %v392 = vld [vmem:[%s4 + $0x6c] sm:$0xff]
      %v393 = vld [vmem:[%s4 + $0x74] sm:$0xf]
      %v394 = vld [vmem:[%s4 + $0x78] sm:$0xff]
      %v395 = vld [vmem:[%s4 + $0x80] sm:$0xf]
      %v396 = vld [vmem:[%s4 + $0x84] sm:$0xff]
      %v397 = vld [vmem:[%s4 + $0x8c] sm:$0xf]
      %v398 = vld [vmem:[%s4 + $0x90] sm:$0xff]
      %v399 = vld [vmem:[%s4 + $0x98] sm:$0xf]
      %v400 = vld [vmem:[%s4 + $0x9c] sm:$0xff]
      %v401 = vld [vmem:[%s4 + $0xa4] sm:$0xf]
      %v402 = vld [vmem:[%s4 + $0xa8] sm:$0xff]
      %v403 = vld [vmem:[%s4 + $0xb0] sm:$0xf]
      %v404 = vld [vmem:[%s4 + $0xb4] sm:$0xff]
      %v405 = vld [vmem:[%s4 + $0xbc] sm:$0xf]
      %v406 = vpack.c.bf16 %v373, %v372
      %v439 = vunpack.c.l.b16 %v374
      %v440 = vunpack.c.h.b16 %v374
      %v441 = vunpack.c.l.b16 %v375
      %v442 = vunpack.c.l.b16 %v376
      %v443 = vunpack.c.h.b16 %v376
      %v444 = vunpack.c.l.b16 %v377
      %v445 = vunpack.c.l.b16 %v378
      %v446 = vunpack.c.h.b16 %v378
      %v447 = vunpack.c.l.b16 %v379
      %v448 = vunpack.c.l.b16 %v380
      %v449 = vunpack.c.h.b16 %v380
      %v450 = vunpack.c.l.b16 %v381
      %v451 = vunpack.c.l.b16 %v382
      %v452 = vunpack.c.h.b16 %v382
      %v453 = vunpack.c.l.b16 %v383
      %v454 = vunpack.c.l.b16 %v384
      %v455 = vunpack.c.h.b16 %v384
      %v456 = vunpack.c.l.b16 %v385
      %v457 = vunpack.c.l.b16 %v386
      %v458 = vunpack.c.h.b16 %v386
      %v459 = vunpack.c.l.b16 %v387
      %v460 = vunpack.c.l.b16 %v388
      %v461 = vunpack.c.h.b16 %v388
      %v462 = vunpack.c.l.b16 %v389
      %v463 = vunpack.c.l.b16 %v390
      %v464 = vunpack.c.h.b16 %v390
      %v465 = vunpack.c.l.b16 %v391
      %v466 = vunpack.c.l.b16 %v392
      %v467 = vunpack.c.h.b16 %v392
      %v468 = vunpack.c.l.b16 %v393
      %v469 = vunpack.c.l.b16 %v394
      %v470 = vunpack.c.h.b16 %v394
      %v471 = vunpack.c.l.b16 %v395
      %v472 = vunpack.c.l.b16 %v396
      %v473 = vunpack.c.h.b16 %v396
      %v474 = vunpack.c.l.b16 %v397
      %v475 = vunpack.c.l.b16 %v398
      %v476 = vunpack.c.h.b16 %v398
      %v477 = vunpack.c.l.b16 %v399
      %v478 = vunpack.c.l.b16 %v400
      %v479 = vunpack.c.h.b16 %v400
      %v480 = vunpack.c.l.b16 %v401
      %v481 = vunpack.c.l.b16 %v402
      %v482 = vunpack.c.h.b16 %v402
      %v483 = vunpack.c.l.b16 %v403
      %v484 = vunpack.c.l.b16 %v404
      %v485 = vunpack.c.h.b16 %v404
      %v486 = vunpack.c.l.b16 %v405
      %v487 = vpack.c.b16 %v442, %v439
      %v488 = vpack.c.b16 %v443, %v440
      %v489 = vpack.c.b16 %v444, %v441
      %v490 = vpack.c.b16 %v448, %v445
      %v491 = vpack.c.b16 %v449, %v446
      %v492 = vpack.c.b16 %v450, %v447
      %v493 = vpack.c.b16 %v454, %v451
      %v494 = vpack.c.b16 %v455, %v452
      %v495 = vpack.c.b16 %v456, %v453
      %v496 = vpack.c.b16 %v460, %v457
      %v497 = vpack.c.b16 %v461, %v458
      %v498 = vpack.c.b16 %v462, %v459
      %v499 = vpack.c.b16 %v466, %v463
      %v500 = vpack.c.b16 %v467, %v464
      %v501 = vpack.c.b16 %v468, %v465
      %v502 = vpack.c.b16 %v472, %v469
      %v503 = vpack.c.b16 %v473, %v470
      %v504 = vpack.c.b16 %v474, %v471
      %v505 = vpack.c.b16 %v478, %v475
      %v506 = vpack.c.b16 %v479, %v476
      %v507 = vpack.c.b16 %v480, %v477
      %v508 = vpack.c.b16 %v484, %v481
      %v509 = vpack.c.b16 %v485, %v482
      %v510 = vpack.c.b16 %v486, %v483
      %535 = vmatprep.subr.bf16.mxu0 %v488
      %536 = vmatpush1.bf16.msra.mxu0 %v487
      %537 = vmatprep.subr.bf16.mxu0 %v491
      %538 = vmatpush1.bf16.msra.mxu0 %v490
      %539 = vmatprep.subr.bf16.mxu0 %v494
      %540 = vmatpush1.bf16.msra.mxu0 %v493
      %541 = vmatprep.subr.bf16.mxu0 %v497
      %542 = vmatpush1.bf16.msra.mxu0 %v496
      %543 = vmatprep.subr.bf16.mxu0 %v500
      %544 = vmatpush1.bf16.msra.mxu0 %v499
      %545 = vmatprep.subr.bf16.mxu0 %v503
      %546 = vmatpush1.bf16.msra.mxu0 %v502
      %547 = vmatprep.subr.bf16.mxu0 %v506
      %548 = vmatpush1.bf16.msra.mxu0 %v505
      %549 = vmatprep.subr.bf16.mxu0 %v509
      %550 = vmatpush1.bf16.msra.mxu0 %v508
      %551 = vmatprep.subr.bf16.mxu0 0
      %552 = vmatpush1.bf16.msra.mxu0 0
      %553 = vmatprep.subr.bf16.mxu0 0
      %554 = vmatpush1.bf16.msra.mxu0 0
      %555 = vmatprep.subr.bf16.mxu0 0
      %556 = vmatpush1.bf16.msra.mxu0 0
      %557 = vmatprep.subr.bf16.mxu0 0
      %558 = vmatpush1.bf16.msra.mxu0 0
      %559 = vmatprep.subr.bf16.mxu0 0
      %560 = vmatpush1.bf16.msra.mxu0 0
      %561 = vmatprep.subr.bf16.mxu0 0
      %562 = vmatpush1.bf16.msra.mxu0 0
      %563 = vmatprep.subr.bf16.mxu0 0
      %564 = vmatpush1.bf16.msra.mxu0 0
      %565 = vmatprep.subr.bf16.mxu0 0
      %566 = vmatpush1.bf16.msra.mxu0 0
      %567 = vmatprep.mubr.bf16.mxu0 0
      %568 = vmatmul.mubr.bf16.gmra.mrb[0].mxu0 %v406
      %v569 = vpop.f32.mrb[0].mxu0
      %v570 = vadd.f32 0.0, %v569
      %v571 = vpop.f32.mrb[0].mxu0
      %v572 = vadd.f32 0.0, %v571
      %v573 = vpop.f32.mrb[0].mxu0
      %v574 = vadd.f32 0.0, %v573
      %v575 = vpop.f32.mrb[0].mxu0
      %v576 = vadd.f32 0.0, %v575
      %577 = vdwg.mxu0
      %578 = vmatprep.subr.bf16.mxu0 0
      %579 = vmatpush1.bf16.msra.mxu0 %v489
      %580 = vmatprep.subr.bf16.mxu0 0
      %581 = vmatpush1.bf16.msra.mxu0 %v492
      %582 = vmatprep.subr.bf16.mxu0 0
      %583 = vmatpush1.bf16.msra.mxu0 %v495
      %584 = vmatprep.subr.bf16.mxu0 0
      %585 = vmatpush1.bf16.msra.mxu0 %v498
      %586 = vmatprep.subr.bf16.mxu0 0
      %587 = vmatpush1.bf16.msra.mxu0 %v501
      %588 = vmatprep.subr.bf16.mxu0 0
      %589 = vmatpush1.bf16.msra.mxu0 %v504
      %590 = vmatprep.subr.bf16.mxu0 0
      %591 = vmatpush1.bf16.msra.mxu0 %v507
      %592 = vmatprep.subr.bf16.mxu0 0
      %593 = vmatpush1.bf16.msra.mxu0 %v510
      %594 = vmatprep.subr.bf16.mxu0 0
      %595 = vmatpush1.bf16.msra.mxu0 0
      %596 = vmatprep.subr.bf16.mxu0 0
      %597 = vmatpush1.bf16.msra.mxu0 0
      %598 = vmatprep.subr.bf16.mxu0 0
      %599 = vmatpush1.bf16.msra.mxu0 0
      %600 = vmatprep.subr.bf16.mxu0 0
      %601 = vmatpush1.bf16.msra.mxu0 0
      %602 = vmatprep.subr.bf16.mxu0 0
      %603 = vmatpush1.bf16.msra.mxu0 0
      %604 = vmatprep.subr.bf16.mxu0 0
      %605 = vmatpush1.bf16.msra.mxu0 0
      %606 = vmatprep.subr.bf16.mxu0 0
      %607 = vmatpush1.bf16.msra.mxu0 0
      %608 = vmatprep.subr.bf16.mxu0 0
      %609 = vmatpush1.bf16.msra.mxu0 0
      %610 = vmatprep.mubr.bf16.mxu0 0
      %611 = vmatmul.mubr.bf16.gmra.mrb[0].mxu0 %v406
      %v612 = vpop.f32.mrb[0].mxu0
      %v613 = vadd.f32 0.0, %v612
      %v614 = vpop.f32.mrb[0].mxu0
      %v615 = vpop.f32.mrb[0].mxu0
      %v616 = vadd.f32 0.0, %v615
      %v617 = vpop.f32.mrb[0].mxu0
      %618 = vdwg.mxu0
      %v619 = vld [vmem:[%s2] sm:$0xff]
      %v620 = vld [vmem:[%s2 + $0x8] sm:$0xff]
      %v621 = vld [vmem:[%s2 + $0x10] sm:$0xff]
      %v622 = vld [vmem:[%s2 + $0x18] sm:$0xff]
      %v623 = vld [vmem:[%s2 + $0x20] sm:$0xff]
      %v624 = vld [vmem:[%s2 + $0x28] sm:$0xff]
      %v625 = vld [vmem:[%s2 + $0x30] sm:$0xff]
      %v626 = vld [vmem:[%s2 + $0x38] sm:$0xff]
      %v627 = vld [vmem:[%s341] sm:$0x1]
      %v628 = vpack.c.bf16 %v574, %v570
      %v629 = vpack.c.bf16 %v576, %v572
      %vm630 = vcmask 261120
      %v632 = vsel %vm630, %v628, 0
      %v635 = vsel %vm630, %v629, 0
      %637 = vmatprep.subr.bf16.mxu0 0
      %638 = vmatpush1.bf16.xpose.msra.mxu0 %v635
      %639 = vmatprep.subr.bf16.mxu0 0
      %640 = vmatpush1.bf16.xpose.msra.mxu0 0
      %641 = vmatprep.subr.bf16.mxu0 0
      %642 = vmatpush1.bf16.xpose.msra.mxu0 0
      %643 = vmatprep.subr.bf16.mxu0 0
      %644 = vmatpush1.bf16.xpose.msra.mxu0 0
      %645 = vmatprep.subr.bf16.mxu0 0
      %646 = vmatpush1.bf16.xpose.msra.mxu0 0
      %647 = vmatprep.subr.bf16.mxu0 0
      %648 = vmatpush1.bf16.xpose.msra.mxu0 0
      %649 = vmatprep.subr.bf16.mxu0 0
      %650 = vmatpush1.bf16.xpose.msra.mxu0 0
      %651 = vmatprep.subr.bf16.mxu0 0
      %652 = vmatpush1.bf16.xpose.msra.mxu0 0
      %653 = vmatprep.subr.bf16.mxu0 0
      %654 = vmatpush1.bf16.xpose.msra.mxu0 0
      %655 = vmatprep.subr.bf16.mxu0 0
      %656 = vmatpush1.bf16.xpose.msra.mxu0 0
      %657 = vmatprep.subr.bf16.mxu0 0
      %658 = vmatpush1.bf16.xpose.msra.mxu0 0
      %659 = vmatprep.subr.bf16.mxu0 0
      %660 = vmatpush1.bf16.xpose.msra.mxu0 0
      %661 = vmatprep.subr.bf16.mxu0 0
      %662 = vmatpush1.bf16.xpose.msra.mxu0 0
      %663 = vmatprep.subr.bf16.mxu0 0
      %664 = vmatpush1.bf16.xpose.msra.mxu0 0
      %665 = vmatprep.subr.bf16.mxu0 0
      %666 = vmatpush1.bf16.xpose.msra.mxu0 0
      %667 = vmatprep.subr.bf16.mxu0 0
      %668 = vmatpush1.bf16.xpose.msra.mxu0 0
      %669 = vmatprep.mubr.bf16.mxu0 0
      %670 = vmatmul.mubr.bf16.gmra.mrb[0].mxu0 %v632
      %v671 = vpop.f32.mrb[0].mxu0
      %v672 = vadd.f32 %v619, %v671
      %v673 = vpop.f32.mrb[0].mxu0
      %v674 = vpop.f32.mrb[0].mxu0
      %v675 = vadd.f32 %v620, %v674
      %v676 = vpop.f32.mrb[0].mxu0
      %677 = vdwg.mxu0
      %v679 = vlaneseq
      %v680 = vshrl.u32 %v679, 7
      %v681 = vsub.s32 0, %v680
      %v682 = vrot.slane %v627, %v681
      %v684 = vadd.f32 %v672, %v682
      %v685 = vadd.f32 %v675, %v682
      %vm686 = vcmask 130048
      %v687 = vsel %vm686, %v684, -inf
      %688 = vmax.xlane.f32.xlu0 %v687
      %v689 = vpop.xlane.xlu0 %688
      %v690 = vsel %vm686, %v685, -inf
      %691 = vmax.xlane.f32.xlu0 %v690
      %v692 = vpop.xlane.xlu0 %691
      %v693 = vsub.f32 %v684, %v689
      %v694 = vsub.f32 %v685, %v692
      %v695 = vmul.f32 %v693, 1.442695
      %v696 = vpow.pop %v695
      %v697 = vmul.f32 %v694, 1.442695
      %v698 = vpow.pop %v697
      %v699 = vsel %vm686, %v696, 0.0
      %700 = vadd.xlane.f32.xlu0 %v699
      %v701 = vpop.xlane.xlu0 %700
      %v702 = vsel %vm686, %v698, 0.0
      %703 = vadd.xlane.f32.xlu0 %v702
      %v704 = vpop.xlane.xlu0 %703
      %v705 = vpack.c.bf16 %v698, %v696
      %v706 = vpack.c.bf16 %v616, %v613
      %v708 = vsel %vm686, %v705, 0
      %710 = vmatprep.subr.bf16.mxu0 0
      %711 = vmatpush1.bf16.msra.mxu0 %v706
      %712 = vmatprep.subr.bf16.mxu0 0
      %713 = vmatpush1.bf16.msra.mxu0 0
      %714 = vmatprep.subr.bf16.mxu0 0
      %715 = vmatpush1.bf16.msra.mxu0 0
      %716 = vmatprep.subr.bf16.mxu0 0
      %717 = vmatpush1.bf16.msra.mxu0 0
      %718 = vmatprep.subr.bf16.mxu0 0
      %719 = vmatpush1.bf16.msra.mxu0 0
      %720 = vmatprep.subr.bf16.mxu0 0
      %721 = vmatpush1.bf16.msra.mxu0 0
      %722 = vmatprep.subr.bf16.mxu0 0
      %723 = vmatpush1.bf16.msra.mxu0 0
      %724 = vmatprep.subr.bf16.mxu0 0
      %725 = vmatpush1.bf16.msra.mxu0 0
      %726 = vmatprep.subr.bf16.mxu0 0
      %727 = vmatpush1.bf16.msra.mxu0 0
      %728 = vmatprep.subr.bf16.mxu0 0
      %729 = vmatpush1.bf16.msra.mxu0 0
      %730 = vmatprep.subr.bf16.mxu0 0
      %731 = vmatpush1.bf16.msra.mxu0 0
      %732 = vmatprep.subr.bf16.mxu0 0
      %733 = vmatpush1.bf16.msra.mxu0 0
      %734 = vmatprep.subr.bf16.mxu0 0
      %735 = vmatpush1.bf16.msra.mxu0 0
      %736 = vmatprep.subr.bf16.mxu0 0
      %737 = vmatpush1.bf16.msra.mxu0 0
      %738 = vmatprep.subr.bf16.mxu0 0
      %739 = vmatpush1.bf16.msra.mxu0 0
      %740 = vmatprep.subr.bf16.mxu0 0
      %741 = vmatpush1.bf16.msra.mxu0 0
      %742 = vmatprep.mubr.bf16.mxu0 0
      %743 = vmatmul.mubr.bf16.gmra.mrb[0].mxu0 %v708
      %v744 = vpop.f32.mrb[0].mxu0
      %v745 = vadd.f32 0.0, %v744
      %v746 = vpop.f32.mrb[0].mxu0
      %v747 = vpop.f32.mrb[0].mxu0
      %v748 = vadd.f32 0.0, %v747
      %v749 = vpop.f32.mrb[0].mxu0
      %750 = vdwg.mxu0
      %v751 = vrcp.pop %v701
      %v752 = vrcp.pop %v704
      %v753 = vmul.f32 %v745, %v751
      %v754 = vmul.f32 %v748, %v752
      %756 = vrot.lane.b32.xlu0 %v628, 96
      %v757 = vpop.permute.xlu0 %756
      %759 = vrot.lane.b32.xlu0 %v629, 96
      %v760 = vpop.permute.xlu0 %759
      %v762 = vsel %vm630, %v757, 0
      %v765 = vsel %vm630, %v760, 0
      %767 = vmatprep.subr.bf16.mxu0 0
      %768 = vmatpush1.bf16.xpose.msra.mxu0 %v765
      %769 = vmatprep.subr.bf16.mxu0 0
      %770 = vmatpush1.bf16.xpose.msra.mxu0 0
      %771 = vmatprep.subr.bf16.mxu0 0
      %772 = vmatpush1.bf16.xpose.msra.mxu0 0
      %773 = vmatprep.subr.bf16.mxu0 0
      %774 = vmatpush1.bf16.xpose.msra.mxu0 0
      %775 = vmatprep.subr.bf16.mxu0 0
      %776 = vmatpush1.bf16.xpose.msra.mxu0 0
      %777 = vmatprep.subr.bf16.mxu0 0
      %778 = vmatpush1.bf16.xpose.msra.mxu0 0
      %779 = vmatprep.subr.bf16.mxu0 0
      %780 = vmatpush1.bf16.xpose.msra.mxu0 0
      %781 = vmatprep.subr.bf16.mxu0 0
      %782 = vmatpush1.bf16.xpose.msra.mxu0 0
      %783 = vmatprep.subr.bf16.mxu0 0
      %784 = vmatpush1.bf16.xpose.msra.mxu0 0
      %785 = vmatprep.subr.bf16.mxu0 0
      %786 = vmatpush1.bf16.xpose.msra.mxu0 0
      %787 = vmatprep.subr.bf16.mxu0 0
      %788 = vmatpush1.bf16.xpose.msra.mxu0 0
      %789 = vmatprep.subr.bf16.mxu0 0
      %790 = vmatpush1.bf16.xpose.msra.mxu0 0
      %791 = vmatprep.subr.bf16.mxu0 0
      %792 = vmatpush1.bf16.xpose.msra.mxu0 0
      %793 = vmatprep.subr.bf16.mxu0 0
      %794 = vmatpush1.bf16.xpose.msra.mxu0 0
      %795 = vmatprep.subr.bf16.mxu0 0
      %796 = vmatpush1.bf16.xpose.msra.mxu0 0
      %797 = vmatprep.subr.bf16.mxu0 0
      %798 = vmatpush1.bf16.xpose.msra.mxu0 0
      %799 = vmatprep.mubr.bf16.mxu0 0
      %800 = vmatmul.mubr.bf16.gmra.mrb[0].mxu0 %v762
      %v801 = vpop.f32.mrb[0].mxu0
      %v802 = vadd.f32 %v621, %v801
      %v803 = vpop.f32.mrb[0].mxu0
      %v804 = vpop.f32.mrb[0].mxu0
      %v805 = vadd.f32 %v622, %v804
      %v806 = vpop.f32.mrb[0].mxu0
      %807 = vdwg.mxu0
      %v808 = vadd.f32 %v802, %v682
      %v809 = vadd.f32 %v805, %v682
      %v810 = vsel %vm686, %v808, -inf
      %811 = vmax.xlane.f32.xlu0 %v810
      %v812 = vpop.xlane.xlu0 %811
      %v813 = vsel %vm686, %v809, -inf
      %814 = vmax.xlane.f32.xlu0 %v813
      %v815 = vpop.xlane.xlu0 %814
      %v816 = vsub.f32 %v808, %v812
      %v817 = vsub.f32 %v809, %v815
      %v818 = vmul.f32 %v816, 1.442695
      %v819 = vpow.pop %v818
      %v820 = vmul.f32 %v817, 1.442695
      %v821 = vpow.pop %v820
      %v822 = vsel %vm686, %v819, 0.0
      %823 = vadd.xlane.f32.xlu0 %v822
      %v824 = vpop.xlane.xlu0 %823
      %v825 = vsel %vm686, %v821, 0.0
      %826 = vadd.xlane.f32.xlu0 %v825
      %v827 = vpop.xlane.xlu0 %826
      %v828 = vpack.c.bf16 %v821, %v819
      %830 = vrot.lane.b32.xlu0 %v706, 96
      %v831 = vpop.permute.xlu0 %830
      %v834 = vsel %vm686, %v828, 0
      %836 = vmatprep.subr.bf16.mxu0 0
      %837 = vmatpush1.bf16.msra.mxu0 %v831
      %838 = vmatprep.subr.bf16.mxu0 0
      %839 = vmatpush1.bf16.msra.mxu0 0
      %840 = vmatprep.subr.bf16.mxu0 0
      %841 = vmatpush1.bf16.msra.mxu0 0
      %842 = vmatprep.subr.bf16.mxu0 0
      %843 = vmatpush1.bf16.msra.mxu0 0
      %844 = vmatprep.subr.bf16.mxu0 0
      %845 = vmatpush1.bf16.msra.mxu0 0
      %846 = vmatprep.subr.bf16.mxu0 0
      %847 = vmatpush1.bf16.msra.mxu0 0
      %848 = vmatprep.subr.bf16.mxu0 0
      %849 = vmatpush1.bf16.msra.mxu0 0
      %850 = vmatprep.subr.bf16.mxu0 0
      %851 = vmatpush1.bf16.msra.mxu0 0
      %852 = vmatprep.subr.bf16.mxu0 0
      %853 = vmatpush1.bf16.msra.mxu0 0
      %854 = vmatprep.subr.bf16.mxu0 0
      %855 = vmatpush1.bf16.msra.mxu0 0
      %856 = vmatprep.subr.bf16.mxu0 0
      %857 = vmatpush1.bf16.msra.mxu0 0
      %858 = vmatprep.subr.bf16.mxu0 0
      %859 = vmatpush1.bf16.msra.mxu0 0
      %860 = vmatprep.subr.bf16.mxu0 0
      %861 = vmatpush1.bf16.msra.mxu0 0
      %862 = vmatprep.subr.bf16.mxu0 0
      %863 = vmatpush1.bf16.msra.mxu0 0
      %864 = vmatprep.subr.bf16.mxu0 0
      %865 = vmatpush1.bf16.msra.mxu0 0
      %866 = vmatprep.subr.bf16.mxu0 0
      %867 = vmatpush1.bf16.msra.mxu0 0
      %868 = vmatprep.mubr.bf16.mxu0 0
      %869 = vmatmul.mubr.bf16.gmra.mrb[0].mxu0 %v834
      %v870 = vpop.f32.mrb[0].mxu0
      %v871 = vadd.f32 0.0, %v870
      %v872 = vpop.f32.mrb[0].mxu0
      %v873 = vpop.f32.mrb[0].mxu0
      %v874 = vadd.f32 0.0, %v873
      %v875 = vpop.f32.mrb[0].mxu0
      %876 = vdwg.mxu0
      %v877 = vrcp.pop %v824
      %v878 = vrcp.pop %v827
      %v879 = vmul.f32 %v871, %v877
      %v880 = vmul.f32 %v874, %v878
      %881 = vrot.lane.b32.xlu0 %v628, 64
      %v882 = vpop.permute.xlu0 %881
      %883 = vrot.lane.b32.xlu0 %v629, 64
      %v884 = vpop.permute.xlu0 %883
      %v886 = vsel %vm630, %v882, 0
      %v889 = vsel %vm630, %v884, 0
      %891 = vmatprep.subr.bf16.mxu0 0
      %892 = vmatpush1.bf16.xpose.msra.mxu0 %v889
      %893 = vmatprep.subr.bf16.mxu0 0
      %894 = vmatpush1.bf16.xpose.msra.mxu0 0
      %895 = vmatprep.subr.bf16.mxu0 0
      %896 = vmatpush1.bf16.xpose.msra.mxu0 0
      %897 = vmatprep.subr.bf16.mxu0 0
      %898 = vmatpush1.bf16.xpose.msra.mxu0 0
      %899 = vmatprep.subr.bf16.mxu0 0
      %900 = vmatpush1.bf16.xpose.msra.mxu0 0
      %901 = vmatprep.subr.bf16.mxu0 0
      %902 = vmatpush1.bf16.xpose.msra.mxu0 0
      %903 = vmatprep.subr.bf16.mxu0 0
      %904 = vmatpush1.bf16.xpose.msra.mxu0 0
      %905 = vmatprep.subr.bf16.mxu0 0
      %906 = vmatpush1.bf16.xpose.msra.mxu0 0
      %907 = vmatprep.subr.bf16.mxu0 0
      %908 = vmatpush1.bf16.xpose.msra.mxu0 0
      %909 = vmatprep.subr.bf16.mxu0 0
      %910 = vmatpush1.bf16.xpose.msra.mxu0 0
      %911 = vmatprep.subr.bf16.mxu0 0
      %912 = vmatpush1.bf16.xpose.msra.mxu0 0
      %913 = vmatprep.subr.bf16.mxu0 0
      %914 = vmatpush1.bf16.xpose.msra.mxu0 0
      %915 = vmatprep.subr.bf16.mxu0 0
      %916 = vmatpush1.bf16.xpose.msra.mxu0 0
      %917 = vmatprep.subr.bf16.mxu0 0
      %918 = vmatpush1.bf16.xpose.msra.mxu0 0
      %919 = vmatprep.subr.bf16.mxu0 0
      %920 = vmatpush1.bf16.xpose.msra.mxu0 0
      %921 = vmatprep.subr.bf16.mxu0 0
      %922 = vmatpush1.bf16.xpose.msra.mxu0 0
      %923 = vmatprep.mubr.bf16.mxu0 0
      %924 = vmatmul.mubr.bf16.gmra.mrb[0].mxu0 %v886
      %v925 = vpop.f32.mrb[0].mxu0
      %v926 = vadd.f32 %v623, %v925
      %v927 = vpop.f32.mrb[0].mxu0
      %v928 = vpop.f32.mrb[0].mxu0
      %v929 = vadd.f32 %v624, %v928
      %v930 = vpop.f32.mrb[0].mxu0
      %931 = vdwg.mxu0
      %v932 = vadd.f32 %v926, %v682
      %v933 = vadd.f32 %v929, %v682
      %v934 = vsel %vm686, %v932, -inf
      %935 = vmax.xlane.f32.xlu0 %v934
      %v936 = vpop.xlane.xlu0 %935
      %v937 = vsel %vm686, %v933, -inf
      %938 = vmax.xlane.f32.xlu0 %v937
      %v939 = vpop.xlane.xlu0 %938
      %v940 = vsub.f32 %v932, %v936
      %v941 = vsub.f32 %v933, %v939
      %v942 = vmul.f32 %v940, 1.442695
      %v943 = vpow.pop %v942
      %v944 = vmul.f32 %v941, 1.442695
      %v945 = vpow.pop %v944
      %v946 = vsel %vm686, %v943, 0.0
      %947 = vadd.xlane.f32.xlu0 %v946
      %v948 = vpop.xlane.xlu0 %947
      %v949 = vsel %vm686, %v945, 0.0
      %950 = vadd.xlane.f32.xlu0 %v949
      %v951 = vpop.xlane.xlu0 %950
      %v952 = vpack.c.bf16 %v945, %v943
      %953 = vrot.lane.b32.xlu0 %v706, 64
      %v954 = vpop.permute.xlu0 %953
      %v957 = vsel %vm686, %v952, 0
      %959 = vmatprep.subr.bf16.mxu0 0
      %960 = vmatpush1.bf16.msra.mxu0 %v954
      %961 = vmatprep.subr.bf16.mxu0 0
      %962 = vmatpush1.bf16.msra.mxu0 0
      %963 = vmatprep.subr.bf16.mxu0 0
      %964 = vmatpush1.bf16.msra.mxu0 0
      %965 = vmatprep.subr.bf16.mxu0 0
      %966 = vmatpush1.bf16.msra.mxu0 0
      %967 = vmatprep.subr.bf16.mxu0 0
      %968 = vmatpush1.bf16.msra.mxu0 0
      %969 = vmatprep.subr.bf16.mxu0 0
      %970 = vmatpush1.bf16.msra.mxu0 0
      %971 = vmatprep.subr.bf16.mxu0 0
      %972 = vmatpush1.bf16.msra.mxu0 0
      %973 = vmatprep.subr.bf16.mxu0 0
      %974 = vmatpush1.bf16.msra.mxu0 0
      %975 = vmatprep.subr.bf16.mxu0 0
      %976 = vmatpush1.bf16.msra.mxu0 0
      %977 = vmatprep.subr.bf16.mxu0 0
      %978 = vmatpush1.bf16.msra.mxu0 0
      %979 = vmatprep.subr.bf16.mxu0 0
      %980 = vmatpush1.bf16.msra.mxu0 0
      %981 = vmatprep.subr.bf16.mxu0 0
      %982 = vmatpush1.bf16.msra.mxu0 0
      %983 = vmatprep.subr.bf16.mxu0 0
      %984 = vmatpush1.bf16.msra.mxu0 0
      %985 = vmatprep.subr.bf16.mxu0 0
      %986 = vmatpush1.bf16.msra.mxu0 0
      %987 = vmatprep.subr.bf16.mxu0 0
      %988 = vmatpush1.bf16.msra.mxu0 0
      %989 = vmatprep.subr.bf16.mxu0 0
      %990 = vmatpush1.bf16.msra.mxu0 0
      %991 = vmatprep.mubr.bf16.mxu0 0
      %992 = vmatmul.mubr.bf16.gmra.mrb[0].mxu0 %v957
      %v993 = vpop.f32.mrb[0].mxu0
      %v994 = vadd.f32 0.0, %v993
      %v995 = vpop.f32.mrb[0].mxu0
      %v996 = vpop.f32.mrb[0].mxu0
      %v997 = vadd.f32 0.0, %v996
      %v998 = vpop.f32.mrb[0].mxu0
      %999 = vdwg.mxu0
      %v1000 = vrcp.pop %v948
      %v1001 = vrcp.pop %v951
      %v1002 = vmul.f32 %v994, %v1000
      %v1003 = vmul.f32 %v997, %v1001
      %1004 = vrot.lane.b32.xlu0 %v628, 32
      %v1005 = vpop.permute.xlu0 %1004
      %1006 = vrot.lane.b32.xlu0 %v629, 32
      %v1007 = vpop.permute.xlu0 %1006
      %v1009 = vsel %vm630, %v1005, 0
      %v1012 = vsel %vm630, %v1007, 0
      %1014 = vmatprep.subr.bf16.mxu0 0
      %1015 = vmatpush1.bf16.xpose.msra.mxu0 %v1012
      %1016 = vmatprep.subr.bf16.mxu0 0
      %1017 = vmatpush1.bf16.xpose.msra.mxu0 0
      %1018 = vmatprep.subr.bf16.mxu0 0
      %1019 = vmatpush1.bf16.xpose.msra.mxu0 0
      %1020 = vmatprep.subr.bf16.mxu0 0
      %1021 = vmatpush1.bf16.xpose.msra.mxu0 0
      %1022 = vmatprep.subr.bf16.mxu0 0
      %1023 = vmatpush1.bf16.xpose.msra.mxu0 0
      %1024 = vmatprep.subr.bf16.mxu0 0
      %1025 = vmatpush1.bf16.xpose.msra.mxu0 0
      %1026 = vmatprep.subr.bf16.mxu0 0
      %1027 = vmatpush1.bf16.xpose.msra.mxu0 0
      %1028 = vmatprep.subr.bf16.mxu0 0
      %1029 = vmatpush1.bf16.xpose.msra.mxu0 0
      %1030 = vmatprep.subr.bf16.mxu0 0
      %1031 = vmatpush1.bf16.xpose.msra.mxu0 0
      %1032 = vmatprep.subr.bf16.mxu0 0
      %1033 = vmatpush1.bf16.xpose.msra.mxu0 0
      %1034 = vmatprep.subr.bf16.mxu0 0
      %1035 = vmatpush1.bf16.xpose.msra.mxu0 0
      %1036 = vmatprep.subr.bf16.mxu0 0
      %1037 = vmatpush1.bf16.xpose.msra.mxu0 0
      %1038 = vmatprep.subr.bf16.mxu0 0
      %1039 = vmatpush1.bf16.xpose.msra.mxu0 0
      %1040 = vmatprep.subr.bf16.mxu0 0
      %1041 = vmatpush1.bf16.xpose.msra.mxu0 0
      %1042 = vmatprep.subr.bf16.mxu0 0
      %1043 = vmatpush1.bf16.xpose.msra.mxu0 0
      %1044 = vmatprep.subr.bf16.mxu0 0
      %1045 = vmatpush1.bf16.xpose.msra.mxu0 0
      %1046 = vmatprep.mubr.bf16.mxu0 0
      %1047 = vmatmul.mubr.bf16.gmra.mrb[0].mxu0 %v1009
      %v1048 = vpop.f32.mrb[0].mxu0
      %v1049 = vadd.f32 %v625, %v1048
      %v1050 = vpop.f32.mrb[0].mxu0
      %v1051 = vpop.f32.mrb[0].mxu0
      %v1052 = vadd.f32 %v626, %v1051
      %v1053 = vpop.f32.mrb[0].mxu0
      %1054 = vdwg.mxu0
      %v1055 = vadd.f32 %v1049, %v682
      %v1056 = vadd.f32 %v1052, %v682
      %v1057 = vsel %vm686, %v1055, -inf
      %1058 = vmax.xlane.f32.xlu0 %v1057
      %v1059 = vpop.xlane.xlu0 %1058
      %v1060 = vsel %vm686, %v1056, -inf
      %1061 = vmax.xlane.f32.xlu0 %v1060
      %v1062 = vpop.xlane.xlu0 %1061
      %v1063 = vsub.f32 %v1055, %v1059
      %v1064 = vsub.f32 %v1056, %v1062
      %v1065 = vmul.f32 %v1063, 1.442695
      %v1066 = vpow.pop %v1065
      %v1067 = vmul.f32 %v1064, 1.442695
      %v1068 = vpow.pop %v1067
      %v1069 = vsel %vm686, %v1066, 0.0
      %1070 = vadd.xlane.f32.xlu0 %v1069
      %v1071 = vpop.xlane.xlu0 %1070
      %v1072 = vsel %vm686, %v1068, 0.0
      %1073 = vadd.xlane.f32.xlu0 %v1072
      %v1074 = vpop.xlane.xlu0 %1073
      %v1075 = vpack.c.bf16 %v1068, %v1066
      %1076 = vrot.lane.b32.xlu0 %v706, 32
      %v1077 = vpop.permute.xlu0 %1076
      %v1080 = vsel %vm686, %v1075, 0
      %1082 = vmatprep.subr.bf16.mxu0 0
      %1083 = vmatpush1.bf16.msra.mxu0 %v1077
      %1084 = vmatprep.subr.bf16.mxu0 0
      %1085 = vmatpush1.bf16.msra.mxu0 0
      %1086 = vmatprep.subr.bf16.mxu0 0
      %1087 = vmatpush1.bf16.msra.mxu0 0
      %1088 = vmatprep.subr.bf16.mxu0 0
      %1089 = vmatpush1.bf16.msra.mxu0 0
      %1090 = vmatprep.subr.bf16.mxu0 0
      %1091 = vmatpush1.bf16.msra.mxu0 0
      %1092 = vmatprep.subr.bf16.mxu0 0
      %1093 = vmatpush1.bf16.msra.mxu0 0
      %1094 = vmatprep.subr.bf16.mxu0 0
      %1095 = vmatpush1.bf16.msra.mxu0 0
      %1096 = vmatprep.subr.bf16.mxu0 0
      %1097 = vmatpush1.bf16.msra.mxu0 0
      %1098 = vmatprep.subr.bf16.mxu0 0
      %1099 = vmatpush1.bf16.msra.mxu0 0
      %1100 = vmatprep.subr.bf16.mxu0 0
      %1101 = vmatpush1.bf16.msra.mxu0 0
      %1102 = vmatprep.subr.bf16.mxu0 0
      %1103 = vmatpush1.bf16.msra.mxu0 0
      %1104 = vmatprep.subr.bf16.mxu0 0
      %1105 = vmatpush1.bf16.msra.mxu0 0
      %1106 = vmatprep.subr.bf16.mxu0 0
      %1107 = vmatpush1.bf16.msra.mxu0 0
      %1108 = vmatprep.subr.bf16.mxu0 0
      %1109 = vmatpush1.bf16.msra.mxu0 0
      %1110 = vmatprep.subr.bf16.mxu0 0
      %1111 = vmatpush1.bf16.msra.mxu0 0
      %1112 = vmatprep.subr.bf16.mxu0 0
      %1113 = vmatpush1.bf16.msra.mxu0 0
      %1114 = vmatprep.mubr.bf16.mxu0 0
      %1115 = vmatmul.mubr.bf16.gmra.mrb[0].mxu0 %v1080
      %v1116 = vpop.f32.mrb[0].mxu0
      %v1117 = vadd.f32 0.0, %v1116
      %v1118 = vpop.f32.mrb[0].mxu0
      %v1119 = vpop.f32.mrb[0].mxu0
      %v1120 = vadd.f32 0.0, %v1119
      %v1121 = vpop.f32.mrb[0].mxu0
      %1122 = vdwg.mxu0
      %v1123 = vrcp.pop %v1071
      %v1124 = vrcp.pop %v1074
      %v1125 = vmul.f32 %v1117, %v1123
      %v1126 = vmul.f32 %v1120, %v1124
      %1129 = vrot.lane.b32.xlu0 %v879, 32
      %v1130 = vpop.permute.xlu0 %1129
      %1131 = vrot.lane.b32.xlu0 %v880, 32
      %v1132 = vpop.permute.xlu0 %1131
      %1137 = vrot.lane.b32.xlu0 %v1002, 64
      %v1138 = vpop.permute.xlu0 %1137
      %1139 = vrot.lane.b32.xlu0 %v1003, 64
      %v1140 = vpop.permute.xlu0 %1139
      %1145 = vrot.lane.b32.xlu0 %v1125, 96
      %v1146 = vpop.permute.xlu0 %1145
      %1147 = vrot.lane.b32.xlu0 %v1126, 96
      %v1148 = vpop.permute.xlu0 %1147
      %v1151 = vsel %vm630, %v753, %v1130
      %v1152 = vsel %vm630, %v754, %v1132
      %vm1153 = vcmask 523264
      %v1154 = vsel %vm1153, %v1151, %v1138
      %v1155 = vsel %vm1153, %v1152, %v1140
      %vm1156 = vcmask 785408
      %v1157 = vsel %vm1156, %v1154, %v1146
      %v1158 = vsel %vm1156, %v1155, %v1148
      %v1159 = vld [vmem:[%s5] sm:$0xf]
      %v1160 = vld [vmem:[%s5 + $0x4] sm:$0xf]
      %v1161 = vld [vmem:[%s5 + $0x8] sm:$0xf]
      %v1162 = vld [vmem:[%s5 + $0xc] sm:$0xf]
      %v1163 = vld [vmem:[%s5 + $0x10] sm:$0xf]
      %v1164 = vld [vmem:[%s5 + $0x14] sm:$0xf]
      %v1165 = vld [vmem:[%s5 + $0x18] sm:$0xf]
      %v1166 = vld [vmem:[%s5 + $0x1c] sm:$0xf]
      %v1167 = vld [vmem:[%s5 + $0x20] sm:$0xf]
      %v1168 = vld [vmem:[%s5 + $0x24] sm:$0xf]
      %v1169 = vld [vmem:[%s5 + $0x28] sm:$0xf]
      %v1170 = vld [vmem:[%s5 + $0x2c] sm:$0xf]
      %v1171 = vld [vmem:[%s5 + $0x30] sm:$0xf]
      %v1172 = vld [vmem:[%s5 + $0x34] sm:$0xf]
      %v1173 = vld [vmem:[%s5 + $0x38] sm:$0xf]
      %v1174 = vld [vmem:[%s5 + $0x3c] sm:$0xf]
      %v1175 = vpack.c.bf16 %v1158, %v1157
      %v1192 = vunpack.c.l.b16 %v1159
      %v1193 = vunpack.c.l.b16 %v1160
      %v1194 = vunpack.c.l.b16 %v1161
      %v1195 = vunpack.c.l.b16 %v1162
      %v1196 = vunpack.c.l.b16 %v1163
      %v1197 = vunpack.c.l.b16 %v1164
      %v1198 = vunpack.c.l.b16 %v1165
      %v1199 = vunpack.c.l.b16 %v1166
      %v1200 = vunpack.c.l.b16 %v1167
      %v1201 = vunpack.c.l.b16 %v1168
      %v1202 = vunpack.c.l.b16 %v1169
      %v1203 = vunpack.c.l.b16 %v1170
      %v1204 = vunpack.c.l.b16 %v1171
      %v1205 = vunpack.c.l.b16 %v1172
      %v1206 = vunpack.c.l.b16 %v1173
      %v1207 = vunpack.c.l.b16 %v1174
      %v1208 = vpack.c.b16 %v1193, %v1192
      %v1209 = vpack.c.b16 %v1195, %v1194
      %v1210 = vpack.c.b16 %v1197, %v1196
      %v1211 = vpack.c.b16 %v1199, %v1198
      %v1212 = vpack.c.b16 %v1201, %v1200
      %v1213 = vpack.c.b16 %v1203, %v1202
      %v1214 = vpack.c.b16 %v1205, %v1204
      %v1215 = vpack.c.b16 %v1207, %v1206
      %1224 = vmatprep.subr.bf16.mxu0 0
      %1225 = vmatpush1.bf16.msra.mxu0 %v1208
      %1226 = vmatprep.subr.bf16.mxu0 0
      %1227 = vmatpush1.bf16.msra.mxu0 %v1209
      %1228 = vmatprep.subr.bf16.mxu0 0
      %1229 = vmatpush1.bf16.msra.mxu0 %v1210
      %1230 = vmatprep.subr.bf16.mxu0 0
      %1231 = vmatpush1.bf16.msra.mxu0 %v1211
      %1232 = vmatprep.subr.bf16.mxu0 0
      %1233 = vmatpush1.bf16.msra.mxu0 %v1212
      %1234 = vmatprep.subr.bf16.mxu0 0
      %1235 = vmatpush1.bf16.msra.mxu0 %v1213
      %1236 = vmatprep.subr.bf16.mxu0 0
      %1237 = vmatpush1.bf16.msra.mxu0 %v1214
      %1238 = vmatprep.subr.bf16.mxu0 0
      %1239 = vmatpush1.bf16.msra.mxu0 %v1215
      %1240 = vmatprep.subr.bf16.mxu0 0
      %1241 = vmatpush1.bf16.msra.mxu0 0
      %1242 = vmatprep.subr.bf16.mxu0 0
      %1243 = vmatpush1.bf16.msra.mxu0 0
      %1244 = vmatprep.subr.bf16.mxu0 0
      %1245 = vmatpush1.bf16.msra.mxu0 0
      %1246 = vmatprep.subr.bf16.mxu0 0
      %1247 = vmatpush1.bf16.msra.mxu0 0
      %1248 = vmatprep.subr.bf16.mxu0 0
      %1249 = vmatpush1.bf16.msra.mxu0 0
      %1250 = vmatprep.subr.bf16.mxu0 0
      %1251 = vmatpush1.bf16.msra.mxu0 0
      %1252 = vmatprep.subr.bf16.mxu0 0
      %1253 = vmatpush1.bf16.msra.mxu0 0
      %1254 = vmatprep.subr.bf16.mxu0 0
      %1255 = vmatpush1.bf16.msra.mxu0 0
      %1256 = vmatprep.mubr.bf16.mxu0 0
      %1257 = vmatmul.mubr.bf16.gmra.mrb[0].mxu0 %v1175
      %v1258 = vpop.f32.mrb[0].mxu0
      %v1259 = vadd.f32 0.0, %v1258
      %v1260 = vpop.f32.mrb[0].mxu0
      %v1261 = vpop.f32.mrb[0].mxu0
      %v1262 = vadd.f32 0.0, %v1261
      %v1263 = vpop.f32.mrb[0].mxu0
      %1264 = vdwg.mxu0
      %v1265 = vadd.f32 %v348, %v1259
      %v1266 = vadd.f32 %v349, %v1262
      %v1267 = vld [vmem:[%s6] sm:$0x1]
      %v1268 = vmul.f32 %v1265, %v1265
      %v1269 = vmul.f32 %v1266, %v1266
      %1270 = vadd.xlane.f32.xlu0 %v1268
      %v1271 = vpop.xlane.xlu0 %1270
      %1272 = vadd.xlane.f32.xlu0 %v1269
      %v1273 = vpop.xlane.xlu0 %1272
      %v1274 = vmul.f32 %v1271, %v357
      %v1275 = vmul.f32 %v1273, %v357
      %v1276 = vadd.f32 %v1274, 1e-06
      %v1277 = vadd.f32 %v1275, 1e-06
      %v1278 = vrsqrt.pop %v1276
      %v1279 = vrsqrt.pop %v1277
      %v1280 = vmul.f32 %v1265, %v1278
      %v1281 = vmul.f32 %v1266, %v1279
      %v1283 = vlaneseq
      %v1284 = vshrl.u32 %v1283, 7
      %v1285 = vsub.s32 0, %v1284
      %v1286 = vrot.slane %v1267, %v1285
      %v1288 = vmul.f32 %v1280, %v1286
      %v1289 = vmul.f32 %v1281, %v1286
      %v1290 = vld [vmem:[%s7] sm:$0xff]
      %v1291 = vld [vmem:[%s7 + $0x8] sm:$0xff]
      %v1292 = vld [vmem:[%s7 + $0x10] sm:$0xff]
      %v1293 = vld [vmem:[%s7 + $0x18] sm:$0xff]
      %v1294 = vld [vmem:[%s7 + $0x20] sm:$0xff]
      %v1295 = vld [vmem:[%s7 + $0x28] sm:$0xff]
      %v1296 = vld [vmem:[%s7 + $0x30] sm:$0xff]
      %v1297 = vld [vmem:[%s7 + $0x38] sm:$0xff]
      %v1298 = vld [vmem:[%s7 + $0x40] sm:$0xff]
      %v1299 = vld [vmem:[%s7 + $0x48] sm:$0xff]
      %v1300 = vld [vmem:[%s7 + $0x50] sm:$0xff]
      %v1301 = vld [vmem:[%s7 + $0x58] sm:$0xff]
      %v1302 = vld [vmem:[%s7 + $0x60] sm:$0xff]
      %v1303 = vld [vmem:[%s7 + $0x68] sm:$0xff]
      %v1304 = vld [vmem:[%s7 + $0x70] sm:$0xff]
      %v1305 = vld [vmem:[%s7 + $0x78] sm:$0xff]
      %v1306 = vpack.c.bf16 %v1289, %v1288
      %v1323 = vunpack.c.l.b16 %v1290
      %v1324 = vunpack.c.h.b16 %v1290
      %v1325 = vunpack.c.l.b16 %v1291
      %v1326 = vunpack.c.h.b16 %v1291
      %v1327 = vunpack.c.l.b16 %v1292
      %v1328 = vunpack.c.h.b16 %v1292
      %v1329 = vunpack.c.l.b16 %v1293
      %v1330 = vunpack.c.h.b16 %v1293
      %v1331 = vunpack.c.l.b16 %v1294
      %v1332 = vunpack.c.h.b16 %v1294
      %v1333 = vunpack.c.l.b16 %v1295
      %v1334 = vunpack.c.h.b16 %v1295
      %v1335 = vunpack.c.l.b16 %v1296
      %v1336 = vunpack.c.h.b16 %v1296
      %v1337 = vunpack.c.l.b16 %v1297
      %v1338 = vunpack.c.h.b16 %v1297
      %v1339 = vunpack.c.l.b16 %v1298
      %v1340 = vunpack.c.h.b16 %v1298
      %v1341 = vunpack.c.l.b16 %v1299
      %v1342 = vunpack.c.h.b16 %v1299
      %v1343 = vunpack.c.l.b16 %v1300
      %v1344 = vunpack.c.h.b16 %v1300
      %v1345 = vunpack.c.l.b16 %v1301
      %v1346 = vunpack.c.h.b16 %v1301
      %v1347 = vunpack.c.l.b16 %v1302
      %v1348 = vunpack.c.h.b16 %v1302
      %v1349 = vunpack.c.l.b16 %v1303
      %v1350 = vunpack.c.h.b16 %v1303
      %v1351 = vunpack.c.l.b16 %v1304
      %v1352 = vunpack.c.h.b16 %v1304
      %v1353 = vunpack.c.l.b16 %v1305
      %v1354 = vunpack.c.h.b16 %v1305
      %v1355 = vpack.c.b16 %v1325, %v1323
      %v1356 = vpack.c.b16 %v1326, %v1324
      %v1357 = vpack.c.b16 %v1329, %v1327
      %v1358 = vpack.c.b16 %v1330, %v1328
      %v1359 = vpack.c.b16 %v1333, %v1331
      %v1360 = vpack.c.b16 %v1334, %v1332
      %v1361 = vpack.c.b16 %v1337, %v1335
      %v1362 = vpack.c.b16 %v1338, %v1336
      %v1363 = vpack.c.b16 %v1341, %v1339
      %v1364 = vpack.c.b16 %v1342, %v1340
      %v1365 = vpack.c.b16 %v1345, %v1343
      %v1366 = vpack.c.b16 %v1346, %v1344
      %v1367 = vpack.c.b16 %v1349, %v1347
      %v1368 = vpack.c.b16 %v1350, %v1348
      %v1369 = vpack.c.b16 %v1353, %v1351
      %v1370 = vpack.c.b16 %v1354, %v1352
      %1387 = vmatprep.subr.bf16.mxu0 %v1356
      %1388 = vmatpush1.bf16.msra.mxu0 %v1355
      %1389 = vmatprep.subr.bf16.mxu0 %v1358
      %1390 = vmatpush1.bf16.msra.mxu0 %v1357
      %1391 = vmatprep.subr.bf16.mxu0 %v1360
      %1392 = vmatpush1.bf16.msra.mxu0 %v1359
      %1393 = vmatprep.subr.bf16.mxu0 %v1362
      %1394 = vmatpush1.bf16.msra.mxu0 %v1361
      %1395 = vmatprep.subr.bf16.mxu0 %v1364
      %1396 = vmatpush1.bf16.msra.mxu0 %v1363
      %1397 = vmatprep.subr.bf16.mxu0 %v1366
      %1398 = vmatpush1.bf16.msra.mxu0 %v1365
      %1399 = vmatprep.subr.bf16.mxu0 %v1368
      %1400 = vmatpush1.bf16.msra.mxu0 %v1367
      %1401 = vmatprep.subr.bf16.mxu0 %v1370
      %1402 = vmatpush1.bf16.msra.mxu0 %v1369
      %1403 = vmatprep.subr.bf16.mxu0 0
      %1404 = vmatpush1.bf16.msra.mxu0 0
      %1405 = vmatprep.subr.bf16.mxu0 0
      %1406 = vmatpush1.bf16.msra.mxu0 0
      %1407 = vmatprep.subr.bf16.mxu0 0
      %1408 = vmatpush1.bf16.msra.mxu0 0
      %1409 = vmatprep.subr.bf16.mxu0 0
      %1410 = vmatpush1.bf16.msra.mxu0 0
      %1411 = vmatprep.subr.bf16.mxu0 0
      %1412 = vmatpush1.bf16.msra.mxu0 0
      %1413 = vmatprep.subr.bf16.mxu0 0
      %1414 = vmatpush1.bf16.msra.mxu0 0
      %1415 = vmatprep.subr.bf16.mxu0 0
      %1416 = vmatpush1.bf16.msra.mxu0 0
      %1417 = vmatprep.subr.bf16.mxu0 0
      %1418 = vmatpush1.bf16.msra.mxu0 0
      %1419 = vmatprep.mubr.bf16.mxu0 0
      %1420 = vmatmul.mubr.bf16.gmra.mrb[0].mxu0 %v1306
      %v1421 = vpop.f32.mrb[0].mxu0
      %v1422 = vadd.f32 0.0, %v1421
      %v1423 = vpop.f32.mrb[0].mxu0
      %v1424 = vadd.f32 0.0, %v1423
      %v1425 = vpop.f32.mrb[0].mxu0
      %v1426 = vadd.f32 0.0, %v1425
      %v1427 = vpop.f32.mrb[0].mxu0
      %v1428 = vadd.f32 0.0, %v1427
      %1429 = vdwg.mxu0
      %v1430 = vmax.f32 %v1422, 0.0
      %v1431 = vmax.f32 %v1424, 0.0
      %v1432 = vmax.f32 %v1426, 0.0
      %v1433 = vmax.f32 %v1428, 0.0
      %v1434 = vld [vmem:[%s8] sm:$0xf]
      %v1435 = vld [vmem:[%s8 + $0x4] sm:$0xf]
      %v1436 = vld [vmem:[%s8 + $0x8] sm:$0xf]
      %v1437 = vld [vmem:[%s8 + $0xc] sm:$0xf]
      %v1438 = vld [vmem:[%s8 + $0x10] sm:$0xf]
      %v1439 = vld [vmem:[%s8 + $0x14] sm:$0xf]
      %v1440 = vld [vmem:[%s8 + $0x18] sm:$0xf]
      %v1441 = vld [vmem:[%s8 + $0x1c] sm:$0xf]
      %v1442 = vld [vmem:[%s8 + $0x20] sm:$0xf]
      %v1443 = vld [vmem:[%s8 + $0x24] sm:$0xf]
      %v1444 = vld [vmem:[%s8 + $0x28] sm:$0xf]
      %v1445 = vld [vmem:[%s8 + $0x2c] sm:$0xf]
      %v1446 = vld [vmem:[%s8 + $0x30] sm:$0xf]
      %v1447 = vld [vmem:[%s8 + $0x34] sm:$0xf]
      %v1448 = vld [vmem:[%s8 + $0x38] sm:$0xf]
      %v1449 = vld [vmem:[%s8 + $0x3c] sm:$0xf]
      %v1450 = vld [vmem:[%s8 + $0x40] sm:$0xf]
      %v1451 = vld [vmem:[%s8 + $0x44] sm:$0xf]
      %v1452 = vld [vmem:[%s8 + $0x48] sm:$0xf]
      %v1453 = vld [vmem:[%s8 + $0x4c] sm:$0xf]
      %v1454 = vld [vmem:[%s8 + $0x50] sm:$0xf]
      %v1455 = vld [vmem:[%s8 + $0x54] sm:$0xf]
      %v1456 = vld [vmem:[%s8 + $0x58] sm:$0xf]
      %v1457 = vld [vmem:[%s8 + $0x5c] sm:$0xf]
      %v1458 = vld [vmem:[%s8 + $0x60] sm:$0xf]
      %v1459 = vld [vmem:[%s8 + $0x64] sm:$0xf]
      %v1460 = vld [vmem:[%s8 + $0x68] sm:$0xf]
      %v1461 = vld [vmem:[%s8 + $0x6c] sm:$0xf]
      %v1462 = vld [vmem:[%s8 + $0x70] sm:$0xf]
      %v1463 = vld [vmem:[%s8 + $0x74] sm:$0xf]
      %v1464 = vld [vmem:[%s8 + $0x78] sm:$0xf]
      %v1465 = vld [vmem:[%s8 + $0x7c] sm:$0xf]
      %v1466 = vpack.c.bf16 %v1432, %v1430
      %v1467 = vpack.c.bf16 %v1433, %v1431
      %v1500 = vunpack.c.l.b16 %v1434
      %v1501 = vunpack.c.l.b16 %v1435
      %v1502 = vunpack.c.l.b16 %v1436
      %v1503 = vunpack.c.l.b16 %v1437
      %v1504 = vunpack.c.l.b16 %v1438
      %v1505 = vunpack.c.l.b16 %v1439
      %v1506 = vunpack.c.l.b16 %v1440
      %v1507 = vunpack.c.l.b16 %v1441
      %v1508 = vunpack.c.l.b16 %v1442
      %v1509 = vunpack.c.l.b16 %v1443
      %v1510 = vunpack.c.l.b16 %v1444
      %v1511 = vunpack.c.l.b16 %v1445
      %v1512 = vunpack.c.l.b16 %v1446
      %v1513 = vunpack.c.l.b16 %v1447
      %v1514 = vunpack.c.l.b16 %v1448
      %v1515 = vunpack.c.l.b16 %v1449
      %v1516 = vunpack.c.l.b16 %v1450
      %v1517 = vunpack.c.l.b16 %v1451
      %v1518 = vunpack.c.l.b16 %v1452
      %v1519 = vunpack.c.l.b16 %v1453
      %v1520 = vunpack.c.l.b16 %v1454
      %v1521 = vunpack.c.l.b16 %v1455
      %v1522 = vunpack.c.l.b16 %v1456
      %v1523 = vunpack.c.l.b16 %v1457
      %v1524 = vunpack.c.l.b16 %v1458
      %v1525 = vunpack.c.l.b16 %v1459
      %v1526 = vunpack.c.l.b16 %v1460
      %v1527 = vunpack.c.l.b16 %v1461
      %v1528 = vunpack.c.l.b16 %v1462
      %v1529 = vunpack.c.l.b16 %v1463
      %v1530 = vunpack.c.l.b16 %v1464
      %v1531 = vunpack.c.l.b16 %v1465
      %v1532 = vpack.c.b16 %v1501, %v1500
      %v1533 = vpack.c.b16 %v1503, %v1502
      %v1534 = vpack.c.b16 %v1505, %v1504
      %v1535 = vpack.c.b16 %v1507, %v1506
      %v1536 = vpack.c.b16 %v1509, %v1508
      %v1537 = vpack.c.b16 %v1511, %v1510
      %v1538 = vpack.c.b16 %v1513, %v1512
      %v1539 = vpack.c.b16 %v1515, %v1514
      %v1540 = vpack.c.b16 %v1517, %v1516
      %v1541 = vpack.c.b16 %v1519, %v1518
      %v1542 = vpack.c.b16 %v1521, %v1520
      %v1543 = vpack.c.b16 %v1523, %v1522
      %v1544 = vpack.c.b16 %v1525, %v1524
      %v1545 = vpack.c.b16 %v1527, %v1526
      %v1546 = vpack.c.b16 %v1529, %v1528
      %v1547 = vpack.c.b16 %v1531, %v1530
      %1564 = vmatprep.subr.bf16.mxu0 0
      %1565 = vmatpush1.bf16.msra.mxu0 %v1532
      %1566 = vmatprep.subr.bf16.mxu0 0
      %1567 = vmatpush1.bf16.msra.mxu0 %v1533
      %1568 = vmatprep.subr.bf16.mxu0 0
      %1569 = vmatpush1.bf16.msra.mxu0 %v1534
      %1570 = vmatprep.subr.bf16.mxu0 0
      %1571 = vmatpush1.bf16.msra.mxu0 %v1535
      %1572 = vmatprep.subr.bf16.mxu0 0
      %1573 = vmatpush1.bf16.msra.mxu0 %v1536
      %1574 = vmatprep.subr.bf16.mxu0 0
      %1575 = vmatpush1.bf16.msra.mxu0 %v1537
      %1576 = vmatprep.subr.bf16.mxu0 0
      %1577 = vmatpush1.bf16.msra.mxu0 %v1538
      %1578 = vmatprep.subr.bf16.mxu0 0
      %1579 = vmatpush1.bf16.msra.mxu0 %v1539
      %1580 = vmatprep.subr.bf16.mxu0 0
      %1581 = vmatpush1.bf16.msra.mxu0 %v1540
      %1582 = vmatprep.subr.bf16.mxu0 0
      %1583 = vmatpush1.bf16.msra.mxu0 %v1541
      %1584 = vmatprep.subr.bf16.mxu0 0
      %1585 = vmatpush1.bf16.msra.mxu0 %v1542
      %1586 = vmatprep.subr.bf16.mxu0 0
      %1587 = vmatpush1.bf16.msra.mxu0 %v1543
      %1588 = vmatprep.subr.bf16.mxu0 0
      %1589 = vmatpush1.bf16.msra.mxu0 %v1544
      %1590 = vmatprep.subr.bf16.mxu0 0
      %1591 = vmatpush1.bf16.msra.mxu0 %v1545
      %1592 = vmatprep.subr.bf16.mxu0 0
      %1593 = vmatpush1.bf16.msra.mxu0 %v1546
      %1594 = vmatprep.subr.bf16.mxu0 0
      %1595 = vmatpush1.bf16.msra.mxu0 %v1547
      %1596 = vmatprep.mubr.bf16.mxu0 %v1467
      %1597 = vmatmul.mubr.bf16.gmra.mrb[0].mxu0 %v1466
      %v1598 = vpop.f32.mrb[0].mxu0
      %v1599 = vadd.f32 0.0, %v1598
      %v1600 = vpop.f32.mrb[0].mxu0
      %v1601 = vpop.f32.mrb[0].mxu0
      %v1602 = vadd.f32 0.0, %v1601
      %v1603 = vpop.f32.mrb[0].mxu0
      %1604 = vdwg.mxu0
      %v1605 = vadd.f32 %v1265, %v1599
      %v1606 = vadd.f32 %v1266, %v1602
      %1607 = vst [vmem:[%s346] sm:$0xff] %v1605
      %1608 = vst [vmem:[%s346 + $0x8] sm:$0xff] %v1606
      %p1609 = scmp.lt.s32.totalorder %s20, 1
      %s1610 = scalar_select %p1609, %s20, 1
      %s1611 = smul.addr %s1610, 2
      %s1612 = smul.addr %s1611, 8
      %s1613 = scalar_lea.vmem %s9, %s1612
      // Predicated region
      $region57: #{generator_forward.5} parent=55 // pred_check
        %p1614 = pneg %p237
      $region58: #{generator_forward.5} parent=55 // pred_check_branch
        %1616 = sbr.rel (%p1614) target = $region60
      $region59: #{generator_forward.5} parent=55 // pred_region
        _
      $region60: #{generator_forward.5} parent=55 // pred_fallthru
        _
    $region56: #{generator_forward.5} parent=5 // pred_fallthru
      _
    %p1617 = scmp.le.s32.totalorder 2, %s15
    // Predicated region
    $region61: #{generator_forward.5} parent=5 // pred_check
      %p1618 = pneg %p1617
    $region62: #{generator_forward.5} parent=5 // pred_check_branch
      %1620 = sbr.rel (%p1618) target = $region64
    $region63: #{generator_forward.5} parent=5 // pred_region
      %s1621 = ssub.s32 %s15, 2
      // Predicated region
      $region65: #{generator_forward.5} parent=63 // pred_check
        %p1622 = pneg %p243
      $region66: #{generator_forward.5} parent=63 // pred_check_branch
        %1624 = sbr.rel (%p1622) target = $region68
      $region67: #{generator_forward.5} parent=63 // pred_region
        %p1625 = scmp.lt.s32.totalorder %s21, 1
        %s1626 = scalar_select %p1625, %s21, 1
        %s1627 = smul.addr %s1626, 2
        %s1628 = smul.addr %s1627, 8
        %s1629 = scalar_lea.vmem %s9, %s1628
      $region68: #{generator_forward.5} parent=63 // pred_fallthru
        _
    $region64: #{generator_forward.5} parent=5 // pred_fallthru
      _
  $region6: #{generator_forward.5} parent=0 // loop_footer
    %s19 = sadd.s32 1, %s15
  $region7: #{generator_forward.5} parent=0 // loop_footer_branch
    %14 = sbr.rel target = $region3
  $region8: #{generator_forward.5} parent=0 // loop_exit
    _

// kernel: generator_forward.7
$region0: #{generator_forward.7}
  #allocation0 [shape = 'u32[]', space=smem, size = 0x4, offset = 0x4, fixed_abs, tag = 'smem constant byte address 0x4 - core index']
  #allocation1 [shape = 'u32[144,128]{1,0:T(1,128)}', space=vmem, size = 0x12000, scoped, tag = 'internal scratch']
  %s0 = inlined_call_operand.vmem [shape: f32[2,8,128], index: 0, kind: input, shape index: {}]
  %s1 = inlined_call_operand.vmem [shape: f32[2,16,128], index: 1, kind: input, shape index: {}]
  %s2 = inlined_call_operand.vmem [shape: f32[2,1,16], index: 2, kind: input, shape index: {}]
  %s3 = inlined_call_operand.vmem [shape: f32[4,8,8], index: 3, kind: input, shape index: {}]
  %s4 = inlined_call_operand.vmem [shape: f32[1,128], index: 4, kind: input, shape index: {}]
  %s5 = inlined_call_operand.vmem [shape: f32[1,128], index: 5, kind: input, shape index: {}]
  %s6 = inlined_call_operand.vmem [shape: bf16[128,384], index: 6, kind: input, shape index: {}]
  %s7 = inlined_call_operand.vmem [shape: bf16[128,128], index: 7, kind: input, shape index: {}]
  %s8 = inlined_call_operand.vmem [shape: f32[1,128], index: 8, kind: input, shape index: {}]
  %s9 = inlined_call_operand.vmem [shape: bf16[128,128], index: 9, kind: input, shape index: {}]
  %s10 = inlined_call_operand.vmem [shape: bf16[128,256], index: 10, kind: input, shape index: {}]
  %s11 = inlined_call_operand.vmem [shape: bf16[128,128], index: 11, kind: input, shape index: {}]
  %s12 = inlined_call_operand.vmem [shape: f32[1,128], index: 12, kind: input, shape index: {}]
  %s13 = inlined_call_operand.vmem [shape: bf16[128,256], index: 13, kind: input, shape index: {}]
  %s14 = inlined_call_operand.vmem [shape: bf16[256,128], index: 14, kind: input, shape index: {}]
  %s15 = inlined_call_operand.vmem [shape: f32[2,8,128], index: 15, kind: output, shape index: {}]
  %s16 = sld [smem:[#allocation0]]
  $region93: #{generator_forward.7} parent=0
    _
  %s18 = ssub.s32 1, %s16
  %s19 = scalar_select 0, %s18, %s16
  loop: start=0, step=1, limit=4
  $region2: #{generator_forward.7} parent=0 // loop_pre_header
    _
  $region3: #{generator_forward.7} parent=0 // loop_header
    %s21 = sphi 0, %s25
    %p22 = scmp.ge.s32.totalorder %s21, 4
    %s31 = sphi 0, %s33
    %s34 = sphi 0, %s31
    %s35 = sphi 0, %s34
    %s51 = sphi 0, %s35
    %s57 = sphi 0, %s59
    %s60 = sphi 0, %s57
    %s61 = sphi 0, %s60
    %s77 = sphi 0, %s61
    %s83 = sphi 0, %s85
    %s86 = sphi 0, %s83
    %s87 = sphi 0, %s86
    %s103 = sphi 0, %s87
    %s107 = sphi 0, %s107
    %s109 = sphi 0, %s107
    %s110 = sphi 0, %s109
    %s124 = sphi 0, %s110
    %s128 = sphi 0, %s128
    %s130 = sphi 0, %s128
    %s131 = sphi 0, %s130
    %s145 = sphi 0, %s131
    %s149 = sphi 0, %s149
    %s151 = sphi 0, %s149
    %s152 = sphi 0, %s151
    %s166 = sphi 0, %s152
    %s170 = sphi 0, %s170
    %s172 = sphi 0, %s170
    %s173 = sphi 0, %s172
    %s187 = sphi 0, %s173
    %s191 = sphi 0, %s191
    %s193 = sphi 0, %s191
    %s194 = sphi 0, %s193
    %s208 = sphi 0, %s194
    %s212 = sphi 0, %s212
    %s214 = sphi 0, %s212
    %s215 = sphi 0, %s214
    %s229 = sphi 0, %s215
    %s233 = sphi 0, %s233
    %s235 = sphi 0, %s233
    %s236 = sphi 0, %s235
    %s250 = sphi 0, %s236
    %s254 = sphi 0, %s254
    %s256 = sphi 0, %s254
    %s257 = sphi 0, %s256
    %s271 = sphi 0, %s257
    %s275 = sphi 0, %s275
    %s277 = sphi 0, %s275
    %s278 = sphi 0, %s277
    %s292 = sphi 0, %s278
    %s296 = sphi 0, %s296
    %s298 = sphi 0, %s296
    %s299 = sphi 0, %s298
    %s313 = sphi 0, %s299
    %s317 = sphi 0, %s317
    %s319 = sphi 0, %s317
    %s320 = sphi 0, %s319
    %s334 = sphi 0, %s320
    %s338 = sphi 0, %s338
    %s340 = sphi 0, %s338
    %s341 = sphi 0, %s340
    %s355 = sphi 0, %s341
    %s361 = sphi 0, %s363
    %s364 = sphi 0, %s361
    %s365 = sphi 0, %s364
    %s381 = sphi 0, %s365
  $region4: #{generator_forward.7} parent=0 // loop_header_branch
    %24 = sbr.rel (%p22) target = $region8
  $region5: #{generator_forward.7} parent=0 // loop_body
    %s26 = ssub.s32 %s21, 1
    %s27 = ssub.s32 %s21, 2
    %s28 = sadd.s32 %s21, 1
    %s29 = ssub.s32 %s21, %s28
    %p30 = scmp.eq.s32.totalorder %s29, 0
    %s32 = sadd.s32 %s31, 1
    %s33 = scalar_select %p30, %s31, %s32
    %p36 = pneg %p30
    %p37 = scmp.eq.s32.totalorder %s21, 1
    %p38 = por %p36, %p37
    %p39 = scmp.ne.s32.totalorder %s31, %s34
    %p40 = scmp.eq.s32.totalorder %s21, 0
    %p41 = por %p39, %p40
    %p42 = scmp.ne.s32.totalorder %s31, %s34
    %p43 = scmp.eq.s32.totalorder %s26, 1
    %p44 = por %p42, %p43
    %p45 = scmp.ne.s32.totalorder %s34, %s35
    %p46 = scmp.eq.s32.totalorder %s26, 0
    %p47 = por %p45, %p46
    %p48 = scmp.ne.s32.totalorder %s34, %s35
    %p49 = scmp.eq.s32.totalorder %s27, 1
    %p50 = por %p48, %p49
    %p52 = scmp.ne.s32.totalorder %s35, %s51
    %p53 = scmp.eq.s32.totalorder %s27, 0
    %p54 = por %p52, %p53
    %s55 = ssub.s32 %s21, %s28
    %p56 = scmp.eq.s32.totalorder %s55, 0
    %s58 = sadd.s32 %s57, 1
    %s59 = scalar_select %p56, %s57, %s58
    %p62 = pneg %p56
    %p63 = scmp.eq.s32.totalorder %s21, 1
    %p64 = por %p62, %p63
    %p65 = scmp.ne.s32.totalorder %s57, %s60
    %p66 = scmp.eq.s32.totalorder %s21, 0
    %p67 = por %p65, %p66
    %p68 = scmp.ne.s32.totalorder %s57, %s60
    %p69 = scmp.eq.s32.totalorder %s26, 1
    %p70 = por %p68, %p69
    %p71 = scmp.ne.s32.totalorder %s60, %s61
    %p72 = scmp.eq.s32.totalorder %s26, 0
    %p73 = por %p71, %p72
    %p74 = scmp.ne.s32.totalorder %s60, %s61
    %p75 = scmp.eq.s32.totalorder %s27, 1
    %p76 = por %p74, %p75
    %p78 = scmp.ne.s32.totalorder %s61, %s77
    %p79 = scmp.eq.s32.totalorder %s27, 0
    %p80 = por %p78, %p79
    %s81 = ssub.s32 %s21, %s28
    %p82 = scmp.eq.s32.totalorder %s81, 0
    %s84 = sadd.s32 %s83, 1
    %s85 = scalar_select %p82, %s83, %s84
    %p88 = pneg %p82
    %p89 = scmp.eq.s32.totalorder %s21, 1
    %p90 = por %p88, %p89
    %p91 = scmp.ne.s32.totalorder %s83, %s86
    %p92 = scmp.eq.s32.totalorder %s21, 0
    %p93 = por %p91, %p92
    %p94 = scmp.ne.s32.totalorder %s83, %s86
    %p95 = scmp.eq.s32.totalorder %s26, 1
    %p96 = por %p94, %p95
    %p97 = scmp.ne.s32.totalorder %s86, %s87
    %p98 = scmp.eq.s32.totalorder %s26, 0
    %p99 = por %p97, %p98
    %p100 = scmp.ne.s32.totalorder %s86, %s87
    %p101 = scmp.eq.s32.totalorder %s27, 1
    %p102 = por %p100, %p101
    %p104 = scmp.ne.s32.totalorder %s87, %s103
    %p105 = scmp.eq.s32.totalorder %s27, 0
    %p106 = por %p104, %p105
    %s108 = sadd.s32 %s107, 1
    %p111 = scmp.eq.s32.totalorder %s21, 1
    %p112 = scmp.ne.s32.totalorder %s107, %s109
    %p113 = scmp.eq.s32.totalorder %s21, 0
    %p114 = por %p112, %p113
    %p115 = scmp.ne.s32.totalorder %s107, %s109
    %p116 = scmp.eq.s32.totalorder %s26, 1
    %p117 = por %p115, %p116
    %p118 = scmp.ne.s32.totalorder %s109, %s110
    %p119 = scmp.eq.s32.totalorder %s26, 0
    %p120 = por %p118, %p119
    %p121 = scmp.ne.s32.totalorder %s109, %s110
    %p122 = scmp.eq.s32.totalorder %s27, 1
    %p123 = por %p121, %p122
    %p125 = scmp.ne.s32.totalorder %s110, %s124
    %p126 = scmp.eq.s32.totalorder %s27, 0
    %p127 = por %p125, %p126
    %s129 = sadd.s32 %s128, 1
    %p132 = scmp.eq.s32.totalorder %s21, 1
    %p133 = scmp.ne.s32.totalorder %s128, %s130
    %p134 = scmp.eq.s32.totalorder %s21, 0
    %p135 = por %p133, %p134
    %p136 = scmp.ne.s32.totalorder %s128, %s130
    %p137 = scmp.eq.s32.totalorder %s26, 1
    %p138 = por %p136, %p137
    %p139 = scmp.ne.s32.totalorder %s130, %s131
    %p140 = scmp.eq.s32.totalorder %s26, 0
    %p141 = por %p139, %p140
    %p142 = scmp.ne.s32.totalorder %s130, %s131
    %p143 = scmp.eq.s32.totalorder %s27, 1
    %p144 = por %p142, %p143
    %p146 = scmp.ne.s32.totalorder %s131, %s145
    %p147 = scmp.eq.s32.totalorder %s27, 0
    %p148 = por %p146, %p147
    %s150 = sadd.s32 %s149, 1
    %p153 = scmp.eq.s32.totalorder %s21, 1
    %p154 = scmp.ne.s32.totalorder %s149, %s151
    %p155 = scmp.eq.s32.totalorder %s21, 0
    %p156 = por %p154, %p155
    %p157 = scmp.ne.s32.totalorder %s149, %s151
    %p158 = scmp.eq.s32.totalorder %s26, 1
    %p159 = por %p157, %p158
    %p160 = scmp.ne.s32.totalorder %s151, %s152
    %p161 = scmp.eq.s32.totalorder %s26, 0
    %p162 = por %p160, %p161
    %p163 = scmp.ne.s32.totalorder %s151, %s152
    %p164 = scmp.eq.s32.totalorder %s27, 1
    %p165 = por %p163, %p164
    %p167 = scmp.ne.s32.totalorder %s152, %s166
    %p168 = scmp.eq.s32.totalorder %s27, 0
    %p169 = por %p167, %p168
    %s171 = sadd.s32 %s170, 1
    %p174 = scmp.eq.s32.totalorder %s21, 1
    %p175 = scmp.ne.s32.totalorder %s170, %s172
    %p176 = scmp.eq.s32.totalorder %s21, 0
    %p177 = por %p175, %p176
    %p178 = scmp.ne.s32.totalorder %s170, %s172
    %p179 = scmp.eq.s32.totalorder %s26, 1
    %p180 = por %p178, %p179
    %p181 = scmp.ne.s32.totalorder %s172, %s173
    %p182 = scmp.eq.s32.totalorder %s26, 0
    %p183 = por %p181, %p182
    %p184 = scmp.ne.s32.totalorder %s172, %s173
    %p185 = scmp.eq.s32.totalorder %s27, 1
    %p186 = por %p184, %p185
    %p188 = scmp.ne.s32.totalorder %s173, %s187
    %p189 = scmp.eq.s32.totalorder %s27, 0
    %p190 = por %p188, %p189
    %s192 = sadd.s32 %s191, 1
    %p195 = scmp.eq.s32.totalorder %s21, 1
    %p196 = scmp.ne.s32.totalorder %s191, %s193
    %p197 = scmp.eq.s32.totalorder %s21, 0
    %p198 = por %p196, %p197
    %p199 = scmp.ne.s32.totalorder %s191, %s193
    %p200 = scmp.eq.s32.totalorder %s26, 1
    %p201 = por %p199, %p200
    %p202 = scmp.ne.s32.totalorder %s193, %s194
    %p203 = scmp.eq.s32.totalorder %s26, 0
    %p204 = por %p202, %p203
    %p205 = scmp.ne.s32.totalorder %s193, %s194
    %p206 = scmp.eq.s32.totalorder %s27, 1
    %p207 = por %p205, %p206
    %p209 = scmp.ne.s32.totalorder %s194, %s208
    %p210 = scmp.eq.s32.totalorder %s27, 0
    %p211 = por %p209, %p210
    %s213 = sadd.s32 %s212, 1
    %p216 = scmp.eq.s32.totalorder %s21, 1
    %p217 = scmp.ne.s32.totalorder %s212, %s214
    %p218 = scmp.eq.s32.totalorder %s21, 0
    %p219 = por %p217, %p218
    %p220 = scmp.ne.s32.totalorder %s212, %s214
    %p221 = scmp.eq.s32.totalorder %s26, 1
    %p222 = por %p220, %p221
    %p223 = scmp.ne.s32.totalorder %s214, %s215
    %p224 = scmp.eq.s32.totalorder %s26, 0
    %p225 = por %p223, %p224
    %p226 = scmp.ne.s32.totalorder %s214, %s215
    %p227 = scmp.eq.s32.totalorder %s27, 1
    %p228 = por %p226, %p227
    %p230 = scmp.ne.s32.totalorder %s215, %s229
    %p231 = scmp.eq.s32.totalorder %s27, 0
    %p232 = por %p230, %p231
    %s234 = sadd.s32 %s233, 1
    %p237 = scmp.eq.s32.totalorder %s21, 1
    %p238 = scmp.ne.s32.totalorder %s233, %s235
    %p239 = scmp.eq.s32.totalorder %s21, 0
    %p240 = por %p238, %p239
    %p241 = scmp.ne.s32.totalorder %s233, %s235
    %p242 = scmp.eq.s32.totalorder %s26, 1
    %p243 = por %p241, %p242
    %p244 = scmp.ne.s32.totalorder %s235, %s236
    %p245 = scmp.eq.s32.totalorder %s26, 0
    %p246 = por %p244, %p245
    %p247 = scmp.ne.s32.totalorder %s235, %s236
    %p248 = scmp.eq.s32.totalorder %s27, 1
    %p249 = por %p247, %p248
    %p251 = scmp.ne.s32.totalorder %s236, %s250
    %p252 = scmp.eq.s32.totalorder %s27, 0
    %p253 = por %p251, %p252
    %s255 = sadd.s32 %s254, 1
    %p258 = scmp.eq.s32.totalorder %s21, 1
    %p259 = scmp.ne.s32.totalorder %s254, %s256
    %p260 = scmp.eq.s32.totalorder %s21, 0
    %p261 = por %p259, %p260
    %p262 = scmp.ne.s32.totalorder %s254, %s256
    %p263 = scmp.eq.s32.totalorder %s26, 1
    %p264 = por %p262, %p263
    %p265 = scmp.ne.s32.totalorder %s256, %s257
    %p266 = scmp.eq.s32.totalorder %s26, 0
    %p267 = por %p265, %p266
    %p268 = scmp.ne.s32.totalorder %s256, %s257
    %p269 = scmp.eq.s32.totalorder %s27, 1
    %p270 = por %p268, %p269
    %p272 = scmp.ne.s32.totalorder %s257, %s271
    %p273 = scmp.eq.s32.totalorder %s27, 0
    %p274 = por %p272, %p273
    %s276 = sadd.s32 %s275, 1
    %p279 = scmp.eq.s32.totalorder %s21, 1
    %p280 = scmp.ne.s32.totalorder %s275, %s277
    %p281 = scmp.eq.s32.totalorder %s21, 0
    %p282 = por %p280, %p281
    %p283 = scmp.ne.s32.totalorder %s275, %s277
    %p284 = scmp.eq.s32.totalorder %s26, 1
    %p285 = por %p283, %p284
    %p286 = scmp.ne.s32.totalorder %s277, %s278
    %p287 = scmp.eq.s32.totalorder %s26, 0
    %p288 = por %p286, %p287
    %p289 = scmp.ne.s32.totalorder %s277, %s278
    %p290 = scmp.eq.s32.totalorder %s27, 1
    %p291 = por %p289, %p290
    %p293 = scmp.ne.s32.totalorder %s278, %s292
    %p294 = scmp.eq.s32.totalorder %s27, 0
    %p295 = por %p293, %p294
    %s297 = sadd.s32 %s296, 1
    %p300 = scmp.eq.s32.totalorder %s21, 1
    %p301 = scmp.ne.s32.totalorder %s296, %s298
    %p302 = scmp.eq.s32.totalorder %s21, 0
    %p303 = por %p301, %p302
    %p304 = scmp.ne.s32.totalorder %s296, %s298
    %p305 = scmp.eq.s32.totalorder %s26, 1
    %p306 = por %p304, %p305
    %p307 = scmp.ne.s32.totalorder %s298, %s299
    %p308 = scmp.eq.s32.totalorder %s26, 0
    %p309 = por %p307, %p308
    %p310 = scmp.ne.s32.totalorder %s298, %s299
    %p311 = scmp.eq.s32.totalorder %s27, 1
    %p312 = por %p310, %p311
    %p314 = scmp.ne.s32.totalorder %s299, %s313
    %p315 = scmp.eq.s32.totalorder %s27, 0
    %p316 = por %p314, %p315
    %s318 = sadd.s32 %s317, 1
    %p321 = scmp.eq.s32.totalorder %s21, 1
    %p322 = scmp.ne.s32.totalorder %s317, %s319
    %p323 = scmp.eq.s32.totalorder %s21, 0
    %p324 = por %p322, %p323
    %p325 = scmp.ne.s32.totalorder %s317, %s319
    %p326 = scmp.eq.s32.totalorder %s26, 1
    %p327 = por %p325, %p326
    %p328 = scmp.ne.s32.totalorder %s319, %s320
    %p329 = scmp.eq.s32.totalorder %s26, 0
    %p330 = por %p328, %p329
    %p331 = scmp.ne.s32.totalorder %s319, %s320
    %p332 = scmp.eq.s32.totalorder %s27, 1
    %p333 = por %p331, %p332
    %p335 = scmp.ne.s32.totalorder %s320, %s334
    %p336 = scmp.eq.s32.totalorder %s27, 0
    %p337 = por %p335, %p336
    %s339 = sadd.s32 %s338, 1
    %p342 = scmp.eq.s32.totalorder %s21, 1
    %p343 = scmp.ne.s32.totalorder %s338, %s340
    %p344 = scmp.eq.s32.totalorder %s21, 0
    %p345 = por %p343, %p344
    %p346 = scmp.ne.s32.totalorder %s338, %s340
    %p347 = scmp.eq.s32.totalorder %s26, 1
    %p348 = por %p346, %p347
    %p349 = scmp.ne.s32.totalorder %s340, %s341
    %p350 = scmp.eq.s32.totalorder %s26, 0
    %p351 = por %p349, %p350
    %p352 = scmp.ne.s32.totalorder %s340, %s341
    %p353 = scmp.eq.s32.totalorder %s27, 1
    %p354 = por %p352, %p353
    %p356 = scmp.ne.s32.totalorder %s341, %s355
    %p357 = scmp.eq.s32.totalorder %s27, 0
    %p358 = por %p356, %p357
    %s359 = ssub.s32 %s21, %s28
    %p360 = scmp.eq.s32.totalorder %s359, 0
    %s362 = sadd.s32 %s361, 1
    %s363 = scalar_select %p360, %s361, %s362
    %p366 = pneg %p360
    %p367 = scmp.eq.s32.totalorder %s21, 1
    %p368 = por %p366, %p367
    %p369 = scmp.ne.s32.totalorder %s361, %s364
    %p370 = scmp.eq.s32.totalorder %s21, 0
    %p371 = por %p369, %p370
    %p372 = scmp.ne.s32.totalorder %s361, %s364
    %p373 = scmp.eq.s32.totalorder %s26, 1
    %p374 = por %p372, %p373
    %p375 = scmp.ne.s32.totalorder %s364, %s365
    %p376 = scmp.eq.s32.totalorder %s26, 0
    %p377 = por %p375, %p376
    %p378 = scmp.ne.s32.totalorder %s364, %s365
    %p379 = scmp.eq.s32.totalorder %s27, 1
    %p380 = por %p378, %p379
    %p382 = scmp.ne.s32.totalorder %s365, %s381
    %p383 = scmp.eq.s32.totalorder %s27, 0
    %p384 = por %p382, %p383
    %p385 = scmp.le.s32.totalorder 1, %s21
    %p386 = scmp.lt.s32.totalorder %s21, 3
    %p387 = pnand %p385, %p386
    %p388 = pneg %p387
    // Predicated region
    $region9: #{generator_forward.7} parent=5 // pred_check
      _
    $region10: #{generator_forward.7} parent=5 // pred_check_branch
      %390 = sbr.rel (%p387) target = $region12
    $region11: #{generator_forward.7} parent=5 // pred_region
      %s391 = ssub.s32 %s21, 1
      // Predicated region
      $region13: #{generator_forward.7} parent=11 // pred_check
        %p392 = pneg %p120
      $region14: #{generator_forward.7} parent=11 // pred_check_branch
        %394 = sbr.rel (%p392) target = $region16
      $region15: #{generator_forward.7} parent=11 // pred_region
        _
      $region16: #{generator_forward.7} parent=11 // pred_fallthru
        _
      // Predicated region
      $region17: #{generator_forward.7} parent=11 // pred_check
        %p395 = pneg %p141
      $region18: #{generator_forward.7} parent=11 // pred_check_branch
        %397 = sbr.rel (%p395) target = $region20
      $region19: #{generator_forward.7} parent=11 // pred_region
        _
      $region20: #{generator_forward.7} parent=11 // pred_fallthru
        _
      // Predicated region
      $region21: #{generator_forward.7} parent=11 // pred_check
        %p398 = pneg %p162
      $region22: #{generator_forward.7} parent=11 // pred_check_branch
        %400 = sbr.rel (%p398) target = $region24
      $region23: #{generator_forward.7} parent=11 // pred_region
        _
      $region24: #{generator_forward.7} parent=11 // pred_fallthru
        _
      // Predicated region
      $region25: #{generator_forward.7} parent=11 // pred_check
        %p401 = pneg %p183
      $region26: #{generator_forward.7} parent=11 // pred_check_branch
        %403 = sbr.rel (%p401) target = $region28
      $region27: #{generator_forward.7} parent=11 // pred_region
        _
      $region28: #{generator_forward.7} parent=11 // pred_fallthru
        _
      // Predicated region
      $region29: #{generator_forward.7} parent=11 // pred_check
        %p404 = pneg %p204
      $region30: #{generator_forward.7} parent=11 // pred_check_branch
        %406 = sbr.rel (%p404) target = $region32
      $region31: #{generator_forward.7} parent=11 // pred_region
        _
      $region32: #{generator_forward.7} parent=11 // pred_fallthru
        _
      // Predicated region
      $region33: #{generator_forward.7} parent=11 // pred_check
        %p407 = pneg %p225
      $region34: #{generator_forward.7} parent=11 // pred_check_branch
        %409 = sbr.rel (%p407) target = $region36
      $region35: #{generator_forward.7} parent=11 // pred_region
        _
      $region36: #{generator_forward.7} parent=11 // pred_fallthru
        _
      // Predicated region
      $region37: #{generator_forward.7} parent=11 // pred_check
        %p410 = pneg %p246
      $region38: #{generator_forward.7} parent=11 // pred_check_branch
        %412 = sbr.rel (%p410) target = $region40
      $region39: #{generator_forward.7} parent=11 // pred_region
        _
      $region40: #{generator_forward.7} parent=11 // pred_fallthru
        _
      // Predicated region
      $region41: #{generator_forward.7} parent=11 // pred_check
        %p413 = pneg %p267
      $region42: #{generator_forward.7} parent=11 // pred_check_branch
        %415 = sbr.rel (%p413) target = $region44
      $region43: #{generator_forward.7} parent=11 // pred_region
        _
      $region44: #{generator_forward.7} parent=11 // pred_fallthru
        _
      // Predicated region
      $region45: #{generator_forward.7} parent=11 // pred_check
        %p416 = pneg %p288
      $region46: #{generator_forward.7} parent=11 // pred_check_branch
        %418 = sbr.rel (%p416) target = $region48
      $region47: #{generator_forward.7} parent=11 // pred_region
        _
      $region48: #{generator_forward.7} parent=11 // pred_fallthru
        _
      // Predicated region
      $region49: #{generator_forward.7} parent=11 // pred_check
        %p419 = pneg %p309
      $region50: #{generator_forward.7} parent=11 // pred_check_branch
        %421 = sbr.rel (%p419) target = $region52
      $region51: #{generator_forward.7} parent=11 // pred_region
        _
      $region52: #{generator_forward.7} parent=11 // pred_fallthru
        _
      // Predicated region
      $region53: #{generator_forward.7} parent=11 // pred_check
        %p422 = pneg %p330
      $region54: #{generator_forward.7} parent=11 // pred_check_branch
        %424 = sbr.rel (%p422) target = $region56
      $region55: #{generator_forward.7} parent=11 // pred_region
        _
      $region56: #{generator_forward.7} parent=11 // pred_fallthru
        _
      // Predicated region
      $region57: #{generator_forward.7} parent=11 // pred_check
        %p425 = pneg %p351
      $region58: #{generator_forward.7} parent=11 // pred_check_branch
        %427 = sbr.rel (%p425) target = $region60
      $region59: #{generator_forward.7} parent=11 // pred_region
        _
      $region60: #{generator_forward.7} parent=11 // pred_fallthru
        _
    $region12: #{generator_forward.7} parent=5 // pred_fallthru
      _
    %p428 = scmp.lt.s32.totalorder %s21, 2
    // Predicated region
    $region61: #{generator_forward.7} parent=5 // pred_check
      %p429 = pneg %p428
    $region62: #{generator_forward.7} parent=5 // pred_check_branch
      %431 = sbr.rel (%p429) target = $region64
    $region63: #{generator_forward.7} parent=5 // pred_region
      // Predicated region
      $region65: #{generator_forward.7} parent=63 // pred_check
        %p432 = pneg %p41
      $region66: #{generator_forward.7} parent=63 // pred_check_branch
        %434 = sbr.rel (%p432) target = $region68
      $region67: #{generator_forward.7} parent=63 // pred_region
        %p435 = scmp.lt.s32.totalorder %s21, 1
        %s436 = scalar_select %p435, %s21, 1
        %s437 = smul.addr %s436, 8
        %s438 = scalar_lea.vmem %s0, %s437
      $region68: #{generator_forward.7} parent=63 // pred_fallthru
        _
      // Predicated region
      $region69: #{generator_forward.7} parent=63 // pred_check
        %p439 = pneg %p67
      $region70: #{generator_forward.7} parent=63 // pred_check_branch
        %441 = sbr.rel (%p439) target = $region72
      $region71: #{generator_forward.7} parent=63 // pred_region
        %p442 = scmp.lt.s32.totalorder %s21, 1
        %s443 = scalar_select %p442, %s21, 1
        %s444 = smul.addr %s443, 2
        %s445 = smul.addr %s444, 8
        %s446 = scalar_lea.vmem %s1, %s445
      $region72: #{generator_forward.7} parent=63 // pred_fallthru
        _
      // Predicated region
      $region73: #{generator_forward.7} parent=63 // pred_check
        %p447 = pneg %p93
      $region74: #{generator_forward.7} parent=63 // pred_check_branch
        %449 = sbr.rel (%p447) target = $region76
      $region75: #{generator_forward.7} parent=63 // pred_region
        %p450 = scmp.lt.s32.totalorder %s21, 1
        %s451 = scalar_select %p450, %s21, 1
        %s452 = scalar_lea.vmem %s2, %s451
      $region76: #{generator_forward.7} parent=63 // pred_fallthru
        _
    $region64: #{generator_forward.7} parent=5 // pred_fallthru
      _
    %p453 = scmp.le.s32.totalorder 1, %s21
    %p454 = scmp.lt.s32.totalorder %s21, 3
    %p455 = pnand %p453, %p454
    %p456 = pneg %p455
    // Predicated region
    $region77: #{generator_forward.7} parent=5 // pred_check
      _
    $region78: #{generator_forward.7} parent=5 // pred_check_branch
      %458 = sbr.rel (%p455) target = $region80
    $region79: #{generator_forward.7} parent=5 // pred_region
      %s459 = ssub.s32 %s21, 1
      %p460 = scmp.lt.s32.totalorder %s26, 1
      %s461 = scalar_select %p460, %s26, 1
      %s462 = smul.addr %s461, 8
      %s463 = scalar_lea.vmem %s0, %s462
      %p464 = pneg %p47
      %p465 = pneg %p44
      %p466 = scmp.lt.s32.totalorder %s26, 1
      %s467 = scalar_select %p466, %s26, 1
      %s468 = smul.addr %s467, 2
      %s469 = smul.addr %s468, 8
      %s470 = scalar_lea.vmem %s1, %s469
      %p471 = pneg %p73
      %p472 = pneg %p70
      %p473 = scmp.lt.s32.totalorder %s26, 1
      %s474 = scalar_select %p473, %s26, 1
      %s475 = scalar_lea.vmem %s2, %s474
      %p476 = pneg %p99
      %p477 = pneg %p96
      %p478 = pneg %p120
      %p479 = pneg %p117
      %p480 = pneg %p141
      %p481 = pneg %p138
      %p482 = pneg %p162
      %p483 = pneg %p159
      %p484 = pneg %p183
      %p485 = pneg %p180
      %p486 = pneg %p204
      %p487 = pneg %p201
      %p488 = pneg %p225
      %p489 = pneg %p222
      %p490 = pneg %p246
      %p491 = pneg %p243
      %p492 = pneg %p267
      %p493 = pneg %p264
      %p494 = pneg %p288
      %p495 = pneg %p285
      %p496 = pneg %p309
      %p497 = pneg %p306
      %p498 = pneg %p330
      %p499 = pneg %p327
      %p500 = pneg %p351
      %p501 = pneg %p348
      %p502 = pneg %p377
      %p503 = pneg %p374
      %p504 = scmp.lt.s32.totalorder %s26, 1
      %s505 = scalar_select %p504, %s26, 1
      %s506 = smul.addr %s505, 8
      %s507 = scalar_lea.vmem %s15, %s506
      %p508 = scmp.lt.s32.totalorder %s26, 1
      %s509 = scalar_select %p508, %s26, 1
      %s510 = smul.addr %s509, 8
      %s511 = scalar_lea.vmem %s0, %s510
      %p512 = scmp.lt.s32.totalorder %s26, 1
      %s513 = scalar_select %p512, %s26, 1
      %s514 = smul.addr %s513, 2
      %s515 = smul.addr %s514, 8
      %s516 = scalar_lea.vmem %s1, %s515
      %p517 = scmp.lt.s32.totalorder %s26, 1
      %s518 = scalar_select %p517, %s26, 1
      %s519 = scalar_lea.vmem %s2, %s518
      %p520 = scmp.lt.s32.totalorder %s26, 1
      %s521 = scalar_select %p520, %s26, 1
      %s522 = smul.addr %s521, 8
      %s523 = scalar_lea.vmem %s15, %s522
      %v525 = vld [vmem:[%s511] sm:$0xff]
      %v526 = vld [vmem:[%s5] sm:$0x1]
      %v527 = vmul.f32 %v525, %v525
      %528 = vadd.xlane.f32.xlu0 %v527
      %v529 = vpop.xlane.xlu0 %528
      %v530 = vrcp.pop 128.0
      %v531 = vmul.f32 %v529, %v530
      %v532 = vadd.f32 %v531, 1e-06
      %v533 = vrsqrt.pop %v532
      %v534 = vmul.f32 %v525, %v533
      %v536 = vlaneseq
      %v537 = vshrl.u32 %v536, 7
      %v538 = vsub.s32 0, %v537
      %v539 = vrot.slane %v526, %v538
      %v541 = vmul.f32 %v534, %v539
      %v542 = vld [vmem:[%s6] sm:$0xff]
      %v543 = vld [vmem:[%s6 + $0x8] sm:$0xf]
      %v544 = vld [vmem:[%s6 + $0xc] sm:$0xff]
      %v545 = vld [vmem:[%s6 + $0x14] sm:$0xf]
      %v546 = vld [vmem:[%s6 + $0x18] sm:$0xff]
      %v547 = vld [vmem:[%s6 + $0x20] sm:$0xf]
      %v548 = vld [vmem:[%s6 + $0x24] sm:$0xff]
      %v549 = vld [vmem:[%s6 + $0x2c] sm:$0xf]
      %v550 = vld [vmem:[%s6 + $0x30] sm:$0xff]
      %v551 = vld [vmem:[%s6 + $0x38] sm:$0xf]
      %v552 = vld [vmem:[%s6 + $0x3c] sm:$0xff]
      %v553 = vld [vmem:[%s6 + $0x44] sm:$0xf]
      %v554 = vld [vmem:[%s6 + $0x48] sm:$0xff]
      %v555 = vld [vmem:[%s6 + $0x50] sm:$0xf]
      %v556 = vld [vmem:[%s6 + $0x54] sm:$0xff]
      %v557 = vld [vmem:[%s6 + $0x5c] sm:$0xf]
      %v558 = vld [vmem:[%s6 + $0x60] sm:$0xff]
      %v559 = vld [vmem:[%s6 + $0x68] sm:$0xf]
      %v560 = vld [vmem:[%s6 + $0x6c] sm:$0xff]
      %v561 = vld [vmem:[%s6 + $0x74] sm:$0xf]
      %v562 = vld [vmem:[%s6 + $0x78] sm:$0xff]
      %v563 = vld [vmem:[%s6 + $0x80] sm:$0xf]
      %v564 = vld [vmem:[%s6 + $0x84] sm:$0xff]
      %v565 = vld [vmem:[%s6 + $0x8c] sm:$0xf]
      %v566 = vld [vmem:[%s6 + $0x90] sm:$0xff]
      %v567 = vld [vmem:[%s6 + $0x98] sm:$0xf]
      %v568 = vld [vmem:[%s6 + $0x9c] sm:$0xff]
      %v569 = vld [vmem:[%s6 + $0xa4] sm:$0xf]
      %v570 = vld [vmem:[%s6 + $0xa8] sm:$0xff]
      %v571 = vld [vmem:[%s6 + $0xb0] sm:$0xf]
      %v572 = vld [vmem:[%s6 + $0xb4] sm:$0xff]
      %v573 = vld [vmem:[%s6 + $0xbc] sm:$0xf]
      %v574 = vpack.c.bf16 %v541, %v541
      %v607 = vunpack.c.l.b16 %v542
      %v608 = vunpack.c.h.b16 %v542
      %v609 = vunpack.c.l.b16 %v543
      %v610 = vunpack.c.l.b16 %v544
      %v611 = vunpack.c.h.b16 %v544
      %v612 = vunpack.c.l.b16 %v545
      %v613 = vunpack.c.l.b16 %v546
      %v614 = vunpack.c.h.b16 %v546
      %v615 = vunpack.c.l.b16 %v547
      %v616 = vunpack.c.l.b16 %v548
      %v617 = vunpack.c.h.b16 %v548
      %v618 = vunpack.c.l.b16 %v549
      %v619 = vunpack.c.l.b16 %v550
      %v620 = vunpack.c.h.b16 %v550
      %v621 = vunpack.c.l.b16 %v551
      %v622 = vunpack.c.l.b16 %v552
      %v623 = vunpack.c.h.b16 %v552
      %v624 = vunpack.c.l.b16 %v553
      %v625 = vunpack.c.l.b16 %v554
      %v626 = vunpack.c.h.b16 %v554
      %v627 = vunpack.c.l.b16 %v555
      %v628 = vunpack.c.l.b16 %v556
      %v629 = vunpack.c.h.b16 %v556
      %v630 = vunpack.c.l.b16 %v557
      %v631 = vunpack.c.l.b16 %v558
      %v632 = vunpack.c.h.b16 %v558
      %v633 = vunpack.c.l.b16 %v559
      %v634 = vunpack.c.l.b16 %v560
      %v635 = vunpack.c.h.b16 %v560
      %v636 = vunpack.c.l.b16 %v561
      %v637 = vunpack.c.l.b16 %v562
      %v638 = vunpack.c.h.b16 %v562
      %v639 = vunpack.c.l.b16 %v563
      %v640 = vunpack.c.l.b16 %v564
      %v641 = vunpack.c.h.b16 %v564
      %v642 = vunpack.c.l.b16 %v565
      %v643 = vunpack.c.l.b16 %v566
      %v644 = vunpack.c.h.b16 %v566
      %v645 = vunpack.c.l.b16 %v567
      %v646 = vunpack.c.l.b16 %v568
      %v647 = vunpack.c.h.b16 %v568
      %v648 = vunpack.c.l.b16 %v569
      %v649 = vunpack.c.l.b16 %v570
      %v650 = vunpack.c.h.b16 %v570
      %v651 = vunpack.c.l.b16 %v571
      %v652 = vunpack.c.l.b16 %v572
      %v653 = vunpack.c.h.b16 %v572
      %v654 = vunpack.c.l.b16 %v573
      %v655 = vpack.c.b16 %v610, %v607
      %v656 = vpack.c.b16 %v611, %v608
      %v657 = vpack.c.b16 %v612, %v609
      %v658 = vpack.c.b16 %v616, %v613
      %v659 = vpack.c.b16 %v617, %v614
      %v660 = vpack.c.b16 %v618, %v615
      %v661 = vpack.c.b16 %v622, %v619
      %v662 = vpack.c.b16 %v623, %v620
      %v663 = vpack.c.b16 %v624, %v621
      %v664 = vpack.c.b16 %v628, %v625
      %v665 = vpack.c.b16 %v629, %v626
      %v666 = vpack.c.b16 %v630, %v627
      %v667 = vpack.c.b16 %v634, %v631
      %v668 = vpack.c.b16 %v635, %v632
      %v669 = vpack.c.b16 %v636, %v633
      %v670 = vpack.c.b16 %v640, %v637
      %v671 = vpack.c.b16 %v641, %v638
      %v672 = vpack.c.b16 %v642, %v639
      %v673 = vpack.c.b16 %v646, %v643
      %v674 = vpack.c.b16 %v647, %v644
      %v675 = vpack.c.b16 %v648, %v645
      %v676 = vpack.c.b16 %v652, %v649
      %v677 = vpack.c.b16 %v653, %v650
      %v678 = vpack.c.b16 %v654, %v651
      %703 = vmatprep.subr.bf16.mxu0 %v656
      %704 = vmatpush1.bf16.msra.mxu0 %v655
      %705 = vmatprep.subr.bf16.mxu0 %v659
      %706 = vmatpush1.bf16.msra.mxu0 %v658
      %707 = vmatprep.subr.bf16.mxu0 %v662
      %708 = vmatpush1.bf16.msra.mxu0 %v661
      %709 = vmatprep.subr.bf16.mxu0 %v665
      %710 = vmatpush1.bf16.msra.mxu0 %v664
      %711 = vmatprep.subr.bf16.mxu0 %v668
      %712 = vmatpush1.bf16.msra.mxu0 %v667
      %713 = vmatprep.subr.bf16.mxu0 %v671
      %714 = vmatpush1.bf16.msra.mxu0 %v670
      %715 = vmatprep.subr.bf16.mxu0 %v674
      %716 = vmatpush1.bf16.msra.mxu0 %v673
      %717 = vmatprep.subr.bf16.mxu0 %v677
      %718 = vmatpush1.bf16.msra.mxu0 %v676
      %719 = vmatprep.subr.bf16.mxu0 0
      %720 = vmatpush1.bf16.msra.mxu0 0
      %721 = vmatprep.subr.bf16.mxu0 0
      %722 = vmatpush1.bf16.msra.mxu0 0
      %723 = vmatprep.subr.bf16.mxu0 0
      %724 = vmatpush1.bf16.msra.mxu0 0
      %725 = vmatprep.subr.bf16.mxu0 0
      %726 = vmatpush1.bf16.msra.mxu0 0
      %727 = vmatprep.subr.bf16.mxu0 0
      %728 = vmatpush1.bf16.msra.mxu0 0
      %729 = vmatprep.subr.bf16.mxu0 0
      %730 = vmatpush1.bf16.msra.mxu0 0
      %731 = vmatprep.subr.bf16.mxu0 0
      %732 = vmatpush1.bf16.msra.mxu0 0
      %733 = vmatprep.subr.bf16.mxu0 0
      %734 = vmatpush1.bf16.msra.mxu0 0
      %735 = vmatprep.mubr.bf16.mxu0 0
      %736 = vmatmul.mubr.bf16.gmra.mrb[0].mxu0 %v574
      %v737 = vpop.f32.mrb[0].mxu0
      %v738 = vadd.f32 0.0, %v737
      %v739 = vpop.f32.mrb[0].mxu0
      %v740 = vadd.f32 0.0, %v739
      %v741 = vpop.f32.mrb[0].mxu0
      %v742 = vpop.f32.mrb[0].mxu0
      %743 = vdwg.mxu0
      %744 = vmatprep.subr.bf16.mxu0 0
      %745 = vmatpush1.bf16.msra.mxu0 %v657
      %746 = vmatprep.subr.bf16.mxu0 0
      %747 = vmatpush1.bf16.msra.mxu0 %v660
      %748 = vmatprep.subr.bf16.mxu0 0
      %749 = vmatpush1.bf16.msra.mxu0 %v663
      %750 = vmatprep.subr.bf16.mxu0 0
      %751 = vmatpush1.bf16.msra.mxu0 %v666
      %752 = vmatprep.subr.bf16.mxu0 0
      %753 = vmatpush1.bf16.msra.mxu0 %v669
      %754 = vmatprep.subr.bf16.mxu0 0
      %755 = vmatpush1.bf16.msra.mxu0 %v672
      %756 = vmatprep.subr.bf16.mxu0 0
      %757 = vmatpush1.bf16.msra.mxu0 %v675
      %758 = vmatprep.subr.bf16.mxu0 0
      %759 = vmatpush1.bf16.msra.mxu0 %v678
      %760 = vmatprep.subr.bf16.mxu0 0
      %761 = vmatpush1.bf16.msra.mxu0 0
      %762 = vmatprep.subr.bf16.mxu0 0
      %763 = vmatpush1.bf16.msra.mxu0 0
      %764 = vmatprep.subr.bf16.mxu0 0
      %765 = vmatpush1.bf16.msra.mxu0 0
      %766 = vmatprep.subr.bf16.mxu0 0
      %767 = vmatpush1.bf16.msra.mxu0 0
      %768 = vmatprep.subr.bf16.mxu0 0
      %769 = vmatpush1.bf16.msra.mxu0 0
      %770 = vmatprep.subr.bf16.mxu0 0
      %771 = vmatpush1.bf16.msra.mxu0 0
      %772 = vmatprep.subr.bf16.mxu0 0
      %773 = vmatpush1.bf16.msra.mxu0 0
      %774 = vmatprep.subr.bf16.mxu0 0
      %775 = vmatpush1.bf16.msra.mxu0 0
      %776 = vmatprep.mubr.bf16.mxu0 0
      %777 = vmatmul.mubr.bf16.gmra.mrb[0].mxu0 %v574
      %v778 = vpop.f32.mrb[0].mxu0
      %v779 = vadd.f32 0.0, %v778
      %v780 = vpop.f32.mrb[0].mxu0
      %v781 = vpop.f32.mrb[0].mxu0
      %v782 = vpop.f32.mrb[0].mxu0
      %783 = vdwg.mxu0
      %v784 = vld [vmem:[%s3] sm:$0xff]
      %v785 = vld [vmem:[%s3 + $0x8] sm:$0xff]
      %v786 = vld [vmem:[%s3 + $0x10] sm:$0xff]
      %v787 = vld [vmem:[%s3 + $0x18] sm:$0xff]
      %v788 = vpack.c.bf16 %v738, %v738
      %v789 = vpack.c.bf16 %v740, %v740
      %vm790 = vcmask 261120
      %v792 = vsel %vm790, %v788, 0
      %v795 = vsel %vm790, %v789, 0
      %797 = vmatprep.subr.bf16.mxu0 0
      %798 = vmatpush1.bf16.xpose.msra.mxu0 %v795
      %799 = vmatprep.subr.bf16.mxu0 0
      %800 = vmatpush1.bf16.xpose.msra.mxu0 0
      %801 = vmatprep.subr.bf16.mxu0 0
      %802 = vmatpush1.bf16.xpose.msra.mxu0 0
      %803 = vmatprep.subr.bf16.mxu0 0
      %804 = vmatpush1.bf16.xpose.msra.mxu0 0
      %805 = vmatprep.subr.bf16.mxu0 0
      %806 = vmatpush1.bf16.xpose.msra.mxu0 0
      %807 = vmatprep.subr.bf16.mxu0 0
      %808 = vmatpush1.bf16.xpose.msra.mxu0 0
      %809 = vmatprep.subr.bf16.mxu0 0
      %810 = vmatpush1.bf16.xpose.msra.mxu0 0
      %811 = vmatprep.subr.bf16.mxu0 0
      %812 = vmatpush1.bf16.xpose.msra.mxu0 0
      %813 = vmatprep.subr.bf16.mxu0 0
      %814 = vmatpush1.bf16.xpose.msra.mxu0 0
      %815 = vmatprep.subr.bf16.mxu0 0
      %816 = vmatpush1.bf16.xpose.msra.mxu0 0
      %817 = vmatprep.subr.bf16.mxu0 0
      %818 = vmatpush1.bf16.xpose.msra.mxu0 0
      %819 = vmatprep.subr.bf16.mxu0 0
      %820 = vmatpush1.bf16.xpose.msra.mxu0 0
      %821 = vmatprep.subr.bf16.mxu0 0
      %822 = vmatpush1.bf16.xpose.msra.mxu0 0
      %823 = vmatprep.subr.bf16.mxu0 0
      %824 = vmatpush1.bf16.xpose.msra.mxu0 0
      %825 = vmatprep.subr.bf16.mxu0 0
      %826 = vmatpush1.bf16.xpose.msra.mxu0 0
      %827 = vmatprep.subr.bf16.mxu0 0
      %828 = vmatpush1.bf16.xpose.msra.mxu0 0
      %829 = vmatprep.mubr.bf16.mxu0 0
      %830 = vmatmul.mubr.bf16.gmra.mrb[0].mxu0 %v792
      %v831 = vpop.f32.mrb[0].mxu0
      %v832 = vadd.f32 %v784, %v831
      %v833 = vpop.f32.mrb[0].mxu0
      %v834 = vpop.f32.mrb[0].mxu0
      %v835 = vpop.f32.mrb[0].mxu0
      %836 = vdwg.mxu0
      %vm837 = vcmask 64512
      %v838 = vsel %vm837, %v832, -inf
      %839 = vmax.xlane.f32.xlu0 %v838
      %v840 = vpop.xlane.xlu0 %839
      %v841 = vsub.f32 %v832, %v840
      %v842 = vmul.f32 %v841, 1.442695
      %v843 = vpow.pop %v842
      %v844 = vsel %vm837, %v843, 0.0
      %845 = vadd.xlane.f32.xlu0 %v844
      %v846 = vpop.xlane.xlu0 %845
      %v847 = vpack.c.bf16 %v843, %v843
      %v848 = vpack.c.bf16 %v779, %v779
      %v850 = vsel %vm837, %v847, 0
      %vm852 = vcmask 1043456
      %v854 = vsel %vm852, %v848, 0
      %856 = vmatprep.subr.bf16.mxu0 0
      %857 = vmatpush1.bf16.msra.mxu0 %v854
      %858 = vmatprep.subr.bf16.mxu0 0
      %859 = vmatpush1.bf16.msra.mxu0 0
      %860 = vmatprep.subr.bf16.mxu0 0
      %861 = vmatpush1.bf16.msra.mxu0 0
      %862 = vmatprep.subr.bf16.mxu0 0
      %863 = vmatpush1.bf16.msra.mxu0 0
      %864 = vmatprep.subr.bf16.mxu0 0
      %865 = vmatpush1.bf16.msra.mxu0 0
      %866 = vmatprep.subr.bf16.mxu0 0
      %867 = vmatpush1.bf16.msra.mxu0 0
      %868 = vmatprep.subr.bf16.mxu0 0
      %869 = vmatpush1.bf16.msra.mxu0 0
      %870 = vmatprep.subr.bf16.mxu0 0
      %871 = vmatpush1.bf16.msra.mxu0 0
      %872 = vmatprep.subr.bf16.mxu0 0
      %873 = vmatpush1.bf16.msra.mxu0 0
      %874 = vmatprep.subr.bf16.mxu0 0
      %875 = vmatpush1.bf16.msra.mxu0 0
      %876 = vmatprep.subr.bf16.mxu0 0
      %877 = vmatpush1.bf16.msra.mxu0 0
      %878 = vmatprep.subr.bf16.mxu0 0
      %879 = vmatpush1.bf16.msra.mxu0 0
      %880 = vmatprep.subr.bf16.mxu0 0
      %881 = vmatpush1.bf16.msra.mxu0 0
      %882 = vmatprep.subr.bf16.mxu0 0
      %883 = vmatpush1.bf16.msra.mxu0 0
      %884 = vmatprep.subr.bf16.mxu0 0
      %885 = vmatpush1.bf16.msra.mxu0 0
      %886 = vmatprep.subr.bf16.mxu0 0
      %887 = vmatpush1.bf16.msra.mxu0 0
      %888 = vmatprep.mubr.bf16.mxu0 0
      %889 = vmatmul.mubr.bf16.gmra.mrb[0].mxu0 %v850
      %v890 = vpop.f32.mrb[0].mxu0
      %v891 = vadd.f32 0.0, %v890
      %v892 = vpop.f32.mrb[0].mxu0
      %v893 = vpop.f32.mrb[0].mxu0
      %v894 = vpop.f32.mrb[0].mxu0
      %895 = vdwg.mxu0
      %v896 = vrcp.pop %v846
      %v897 = vmul.f32 %v891, %v896
      %899 = vrot.lane.b32.xlu0 %v788, 96
      %v900 = vpop.permute.xlu0 %899
      %902 = vrot.lane.b32.xlu0 %v789, 96
      %v903 = vpop.permute.xlu0 %902
      %v905 = vsel %vm790, %v900, 0
      %v908 = vsel %vm790, %v903, 0
      %910 = vmatprep.subr.bf16.mxu0 0
      %911 = vmatpush1.bf16.xpose.msra.mxu0 %v908
      %912 = vmatprep.subr.bf16.mxu0 0
      %913 = vmatpush1.bf16.xpose.msra.mxu0 0
      %914 = vmatprep.subr.bf16.mxu0 0
      %915 = vmatpush1.bf16.xpose.msra.mxu0 0
      %916 = vmatprep.subr.bf16.mxu0 0
      %917 = vmatpush1.bf16.xpose.msra.mxu0 0
      %918 = vmatprep.subr.bf16.mxu0 0
      %919 = vmatpush1.bf16.xpose.msra.mxu0 0
      %920 = vmatprep.subr.bf16.mxu0 0
      %921 = vmatpush1.bf16.xpose.msra.mxu0 0
      %922 = vmatprep.subr.bf16.mxu0 0
      %923 = vmatpush1.bf16.xpose.msra.mxu0 0
      %924 = vmatprep.subr.bf16.mxu0 0
      %925 = vmatpush1.bf16.xpose.msra.mxu0 0
      %926 = vmatprep.subr.bf16.mxu0 0
      %927 = vmatpush1.bf16.xpose.msra.mxu0 0
      %928 = vmatprep.subr.bf16.mxu0 0
      %929 = vmatpush1.bf16.xpose.msra.mxu0 0
      %930 = vmatprep.subr.bf16.mxu0 0
      %931 = vmatpush1.bf16.xpose.msra.mxu0 0
      %932 = vmatprep.subr.bf16.mxu0 0
      %933 = vmatpush1.bf16.xpose.msra.mxu0 0
      %934 = vmatprep.subr.bf16.mxu0 0
      %935 = vmatpush1.bf16.xpose.msra.mxu0 0
      %936 = vmatprep.subr.bf16.mxu0 0
      %937 = vmatpush1.bf16.xpose.msra.mxu0 0
      %938 = vmatprep.subr.bf16.mxu0 0
      %939 = vmatpush1.bf16.xpose.msra.mxu0 0
      %940 = vmatprep.subr.bf16.mxu0 0
      %941 = vmatpush1.bf16.xpose.msra.mxu0 0
      %942 = vmatprep.mubr.bf16.mxu0 0
      %943 = vmatmul.mubr.bf16.gmra.mrb[0].mxu0 %v905
      %v944 = vpop.f32.mrb[0].mxu0
      %v945 = vadd.f32 %v785, %v944
      %v946 = vpop.f32.mrb[0].mxu0
      %v947 = vpop.f32.mrb[0].mxu0
      %v948 = vpop.f32.mrb[0].mxu0
      %949 = vdwg.mxu0
      %v950 = vsel %vm837, %v945, -inf
      %951 = vmax.xlane.f32.xlu0 %v950
      %v952 = vpop.xlane.xlu0 %951
      %v953 = vsub.f32 %v945, %v952
      %v954 = vmul.f32 %v953, 1.442695
      %v955 = vpow.pop %v954
      %v956 = vsel %vm837, %v955, 0.0
      %957 = vadd.xlane.f32.xlu0 %v956
      %v958 = vpop.xlane.xlu0 %957
      %v959 = vpack.c.bf16 %v955, %v955
      %961 = vrot.lane.b32.xlu0 %v848, 96
      %v962 = vpop.permute.xlu0 %961
      %v964 = vsel %vm837, %v959, 0
      %v967 = vsel %vm852, %v962, 0
      %969 = vmatprep.subr.bf16.mxu0 0
      %970 = vmatpush1.bf16.msra.mxu0 %v967
      %971 = vmatprep.subr.bf16.mxu0 0
      %972 = vmatpush1.bf16.msra.mxu0 0
      %973 = vmatprep.subr.bf16.mxu0 0
      %974 = vmatpush1.bf16.msra.mxu0 0
      %975 = vmatprep.subr.bf16.mxu0 0
      %976 = vmatpush1.bf16.msra.mxu0 0
      %977 = vmatprep.subr.bf16.mxu0 0
      %978 = vmatpush1.bf16.msra.mxu0 0
      %979 = vmatprep.subr.bf16.mxu0 0
      %980 = vmatpush1.bf16.msra.mxu0 0
      %981 = vmatprep.subr.bf16.mxu0 0
      %982 = vmatpush1.bf16.msra.mxu0 0
      %983 = vmatprep.subr.bf16.mxu0 0
      %984 = vmatpush1.bf16.msra.mxu0 0
      %985 = vmatprep.subr.bf16.mxu0 0
      %986 = vmatpush1.bf16.msra.mxu0 0
      %987 = vmatprep.subr.bf16.mxu0 0
      %988 = vmatpush1.bf16.msra.mxu0 0
      %989 = vmatprep.subr.bf16.mxu0 0
      %990 = vmatpush1.bf16.msra.mxu0 0
      %991 = vmatprep.subr.bf16.mxu0 0
      %992 = vmatpush1.bf16.msra.mxu0 0
      %993 = vmatprep.subr.bf16.mxu0 0
      %994 = vmatpush1.bf16.msra.mxu0 0
      %995 = vmatprep.subr.bf16.mxu0 0
      %996 = vmatpush1.bf16.msra.mxu0 0
      %997 = vmatprep.subr.bf16.mxu0 0
      %998 = vmatpush1.bf16.msra.mxu0 0
      %999 = vmatprep.subr.bf16.mxu0 0
      %1000 = vmatpush1.bf16.msra.mxu0 0
      %1001 = vmatprep.mubr.bf16.mxu0 0
      %1002 = vmatmul.mubr.bf16.gmra.mrb[0].mxu0 %v964
      %v1003 = vpop.f32.mrb[0].mxu0
      %v1004 = vadd.f32 0.0, %v1003
      %v1005 = vpop.f32.mrb[0].mxu0
      %v1006 = vpop.f32.mrb[0].mxu0
      %v1007 = vpop.f32.mrb[0].mxu0
      %1008 = vdwg.mxu0
      %v1009 = vrcp.pop %v958
      %v1010 = vmul.f32 %v1004, %v1009
      %1011 = vrot.lane.b32.xlu0 %v788, 64
      %v1012 = vpop.permute.xlu0 %1011
      %1013 = vrot.lane.b32.xlu0 %v789, 64
      %v1014 = vpop.permute.xlu0 %1013
      %v1016 = vsel %vm790, %v1012, 0
      %v1019 = vsel %vm790, %v1014, 0
      %1021 = vmatprep.subr.bf16.mxu0 0
      %1022 = vmatpush1.bf16.xpose.msra.mxu0 %v1019
      %1023 = vmatprep.subr.bf16.mxu0 0
      %1024 = vmatpush1.bf16.xpose.msra.mxu0 0
      %1025 = vmatprep.subr.bf16.mxu0 0
      %1026 = vmatpush1.bf16.xpose.msra.mxu0 0
      %1027 = vmatprep.subr.bf16.mxu0 0
      %1028 = vmatpush1.bf16.xpose.msra.mxu0 0
      %1029 = vmatprep.subr.bf16.mxu0 0
      %1030 = vmatpush1.bf16.xpose.msra.mxu0 0
      %1031 = vmatprep.subr.bf16.mxu0 0
      %1032 = vmatpush1.bf16.xpose.msra.mxu0 0
      %1033 = vmatprep.subr.bf16.mxu0 0
      %1034 = vmatpush1.bf16.xpose.msra.mxu0 0
      %1035 = vmatprep.subr.bf16.mxu0 0
      %1036 = vmatpush1.bf16.xpose.msra.mxu0 0
      %1037 = vmatprep.subr.bf16.mxu0 0
      %1038 = vmatpush1.bf16.xpose.msra.mxu0 0
      %1039 = vmatprep.subr.bf16.mxu0 0
      %1040 = vmatpush1.bf16.xpose.msra.mxu0 0
      %1041 = vmatprep.subr.bf16.mxu0 0
      %1042 = vmatpush1.bf16.xpose.msra.mxu0 0
      %1043 = vmatprep.subr.bf16.mxu0 0
      %1044 = vmatpush1.bf16.xpose.msra.mxu0 0
      %1045 = vmatprep.subr.bf16.mxu0 0
      %1046 = vmatpush1.bf16.xpose.msra.mxu0 0
      %1047 = vmatprep.subr.bf16.mxu0 0
      %1048 = vmatpush1.bf16.xpose.msra.mxu0 0
      %1049 = vmatprep.subr.bf16.mxu0 0
      %1050 = vmatpush1.bf16.xpose.msra.mxu0 0
      %1051 = vmatprep.subr.bf16.mxu0 0
      %1052 = vmatpush1.bf16.xpose.msra.mxu0 0
      %1053 = vmatprep.mubr.bf16.mxu0 0
      %1054 = vmatmul.mubr.bf16.gmra.mrb[0].mxu0 %v1016
      %v1055 = vpop.f32.mrb[0].mxu0
      %v1056 = vadd.f32 %v786, %v1055
      %v1057 = vpop.f32.mrb[0].mxu0
      %v1058 = vpop.f32.mrb[0].mxu0
      %v1059 = vpop.f32.mrb[0].mxu0
      %1060 = vdwg.mxu0
      %v1061 = vsel %vm837, %v1056, -inf
      %1062 = vmax.xlane.f32.xlu0 %v1061
      %v1063 = vpop.xlane.xlu0 %1062
      %v1064 = vsub.f32 %v1056, %v1063
      %v1065 = vmul.f32 %v1064, 1.442695
      %v1066 = vpow.pop %v1065
      %v1067 = vsel %vm837, %v1066, 0.0
      %1068 = vadd.xlane.f32.xlu0 %v1067
      %v1069 = vpop.xlane.xlu0 %1068
      %v1070 = vpack.c.bf16 %v1066, %v1066
      %1071 = vrot.lane.b32.xlu0 %v848, 64
      %v1072 = vpop.permute.xlu0 %1071
      %v1074 = vsel %vm837, %v1070, 0
      %v1077 = vsel %vm852, %v1072, 0
      %1079 = vmatprep.subr.bf16.mxu0 0
      %1080 = vmatpush1.bf16.msra.mxu0 %v1077
      %1081 = vmatprep.subr.bf16.mxu0 0
      %1082 = vmatpush1.bf16.msra.mxu0 0
      %1083 = vmatprep.subr.bf16.mxu0 0
      %1084 = vmatpush1.bf16.msra.mxu0 0
      %1085 = vmatprep.subr.bf16.mxu0 0
      %1086 = vmatpush1.bf16.msra.mxu0 0
      %1087 = vmatprep.subr.bf16.mxu0 0
      %1088 = vmatpush1.bf16.msra.mxu0 0
      %1089 = vmatprep.subr.bf16.mxu0 0
      %1090 = vmatpush1.bf16.msra.mxu0 0
      %1091 = vmatprep.subr.bf16.mxu0 0
      %1092 = vmatpush1.bf16.msra.mxu0 0
      %1093 = vmatprep.subr.bf16.mxu0 0
      %1094 = vmatpush1.bf16.msra.mxu0 0
      %1095 = vmatprep.subr.bf16.mxu0 0
      %1096 = vmatpush1.bf16.msra.mxu0 0
      %1097 = vmatprep.subr.bf16.mxu0 0
      %1098 = vmatpush1.bf16.msra.mxu0 0
      %1099 = vmatprep.subr.bf16.mxu0 0
      %1100 = vmatpush1.bf16.msra.mxu0 0
      %1101 = vmatprep.subr.bf16.mxu0 0
      %1102 = vmatpush1.bf16.msra.mxu0 0
      %1103 = vmatprep.subr.bf16.mxu0 0
      %1104 = vmatpush1.bf16.msra.mxu0 0
      %1105 = vmatprep.subr.bf16.mxu0 0
      %1106 = vmatpush1.bf16.msra.mxu0 0
      %1107 = vmatprep.subr.bf16.mxu0 0
      %1108 = vmatpush1.bf16.msra.mxu0 0
      %1109 = vmatprep.subr.bf16.mxu0 0
      %1110 = vmatpush1.bf16.msra.mxu0 0
      %1111 = vmatprep.mubr.bf16.mxu0 0
      %1112 = vmatmul.mubr.bf16.gmra.mrb[0].mxu0 %v1074
      %v1113 = vpop.f32.mrb[0].mxu0
      %v1114 = vadd.f32 0.0, %v1113
      %v1115 = vpop.f32.mrb[0].mxu0
      %v1116 = vpop.f32.mrb[0].mxu0
      %v1117 = vpop.f32.mrb[0].mxu0
      %1118 = vdwg.mxu0
      %v1119 = vrcp.pop %v1069
      %v1120 = vmul.f32 %v1114, %v1119
      %1121 = vrot.lane.b32.xlu0 %v788, 32
      %v1122 = vpop.permute.xlu0 %1121
      %1123 = vrot.lane.b32.xlu0 %v789, 32
      %v1124 = vpop.permute.xlu0 %1123
      %v1126 = vsel %vm790, %v1122, 0
      %v1129 = vsel %vm790, %v1124, 0
      %1131 = vmatprep.subr.bf16.mxu0 0
      %1132 = vmatpush1.bf16.xpose.msra.mxu0 %v1129
      %1133 = vmatprep.subr.bf16.mxu0 0
      %1134 = vmatpush1.bf16.xpose.msra.mxu0 0
      %1135 = vmatprep.subr.bf16.mxu0 0
      %1136 = vmatpush1.bf16.xpose.msra.mxu0 0
      %1137 = vmatprep.subr.bf16.mxu0 0
      %1138 = vmatpush1.bf16.xpose.msra.mxu0 0
      %1139 = vmatprep.subr.bf16.mxu0 0
      %1140 = vmatpush1.bf16.xpose.msra.mxu0 0
      %1141 = vmatprep.subr.bf16.mxu0 0
      %1142 = vmatpush1.bf16.xpose.msra.mxu0 0
      %1143 = vmatprep.subr.bf16.mxu0 0
      %1144 = vmatpush1.bf16.xpose.msra.mxu0 0
      %1145 = vmatprep.subr.bf16.mxu0 0
      %1146 = vmatpush1.bf16.xpose.msra.mxu0 0
      %1147 = vmatprep.subr.bf16.mxu0 0
      %1148 = vmatpush1.bf16.xpose.msra.mxu0 0
      %1149 = vmatprep.subr.bf16.mxu0 0
      %1150 = vmatpush1.bf16.xpose.msra.mxu0 0
      %1151 = vmatprep.subr.bf16.mxu0 0
      %1152 = vmatpush1.bf16.xpose.msra.mxu0 0
      %1153 = vmatprep.subr.bf16.mxu0 0
      %1154 = vmatpush1.bf16.xpose.msra.mxu0 0
      %1155 = vmatprep.subr.bf16.mxu0 0
      %1156 = vmatpush1.bf16.xpose.msra.mxu0 0
      %1157 = vmatprep.subr.bf16.mxu0 0
      %1158 = vmatpush1.bf16.xpose.msra.mxu0 0
      %1159 = vmatprep.subr.bf16.mxu0 0
      %1160 = vmatpush1.bf16.xpose.msra.mxu0 0
      %1161 = vmatprep.subr.bf16.mxu0 0
      %1162 = vmatpush1.bf16.xpose.msra.mxu0 0
      %1163 = vmatprep.mubr.bf16.mxu0 0
      %1164 = vmatmul.mubr.bf16.gmra.mrb[0].mxu0 %v1126
      %v1165 = vpop.f32.mrb[0].mxu0
      %v1166 = vadd.f32 %v787, %v1165
      %v1167 = vpop.f32.mrb[0].mxu0
      %v1168 = vpop.f32.mrb[0].mxu0
      %v1169 = vpop.f32.mrb[0].mxu0
      %1170 = vdwg.mxu0
      %v1171 = vsel %vm837, %v1166, -inf
      %1172 = vmax.xlane.f32.xlu0 %v1171
      %v1173 = vpop.xlane.xlu0 %1172
      %v1174 = vsub.f32 %v1166, %v1173
      %v1175 = vmul.f32 %v1174, 1.442695
      %v1176 = vpow.pop %v1175
      %v1177 = vsel %vm837, %v1176, 0.0
      %1178 = vadd.xlane.f32.xlu0 %v1177
      %v1179 = vpop.xlane.xlu0 %1178
      %v1180 = vpack.c.bf16 %v1176, %v1176
      %1181 = vrot.lane.b32.xlu0 %v848, 32
      %v1182 = vpop.permute.xlu0 %1181
      %v1184 = vsel %vm837, %v1180, 0
      %v1187 = vsel %vm852, %v1182, 0
      %1189 = vmatprep.subr.bf16.mxu0 0
      %1190 = vmatpush1.bf16.msra.mxu0 %v1187
      %1191 = vmatprep.subr.bf16.mxu0 0
      %1192 = vmatpush1.bf16.msra.mxu0 0
      %1193 = vmatprep.subr.bf16.mxu0 0
      %1194 = vmatpush1.bf16.msra.mxu0 0
      %1195 = vmatprep.subr.bf16.mxu0 0
      %1196 = vmatpush1.bf16.msra.mxu0 0
      %1197 = vmatprep.subr.bf16.mxu0 0
      %1198 = vmatpush1.bf16.msra.mxu0 0
      %1199 = vmatprep.subr.bf16.mxu0 0
      %1200 = vmatpush1.bf16.msra.mxu0 0
      %1201 = vmatprep.subr.bf16.mxu0 0
      %1202 = vmatpush1.bf16.msra.mxu0 0
      %1203 = vmatprep.subr.bf16.mxu0 0
      %1204 = vmatpush1.bf16.msra.mxu0 0
      %1205 = vmatprep.subr.bf16.mxu0 0
      %1206 = vmatpush1.bf16.msra.mxu0 0
      %1207 = vmatprep.subr.bf16.mxu0 0
      %1208 = vmatpush1.bf16.msra.mxu0 0
      %1209 = vmatprep.subr.bf16.mxu0 0
      %1210 = vmatpush1.bf16.msra.mxu0 0
      %1211 = vmatprep.subr.bf16.mxu0 0
      %1212 = vmatpush1.bf16.msra.mxu0 0
      %1213 = vmatprep.subr.bf16.mxu0 0
      %1214 = vmatpush1.bf16.msra.mxu0 0
      %1215 = vmatprep.subr.bf16.mxu0 0
      %1216 = vmatpush1.bf16.msra.mxu0 0
      %1217 = vmatprep.subr.bf16.mxu0 0
      %1218 = vmatpush1.bf16.msra.mxu0 0
      %1219 = vmatprep.subr.bf16.mxu0 0
      %1220 = vmatpush1.bf16.msra.mxu0 0
      %1221 = vmatprep.mubr.bf16.mxu0 0
      %1222 = vmatmul.mubr.bf16.gmra.mrb[0].mxu0 %v1184
      %v1223 = vpop.f32.mrb[0].mxu0
      %v1224 = vadd.f32 0.0, %v1223
      %v1225 = vpop.f32.mrb[0].mxu0
      %v1226 = vpop.f32.mrb[0].mxu0
      %v1227 = vpop.f32.mrb[0].mxu0
      %1228 = vdwg.mxu0
      %v1229 = vrcp.pop %v1179
      %v1230 = vmul.f32 %v1224, %v1229
      %1232 = vrot.lane.b32.xlu0 %v1010, 32
      %v1233 = vpop.permute.xlu0 %1232
      %1236 = vrot.lane.b32.xlu0 %v1120, 64
      %v1237 = vpop.permute.xlu0 %1236
      %1240 = vrot.lane.b32.xlu0 %v1230, 96
      %v1241 = vpop.permute.xlu0 %1240
      %v1243 = vsel %vm790, %v897, %v1233
      %vm1244 = vcmask 523264
      %v1245 = vsel %vm1244, %v1243, %v1237
      %vm1246 = vcmask 785408
      %v1247 = vsel %vm1246, %v1245, %v1241
      %v1248 = vld [vmem:[%s7] sm:$0xf]
      %v1249 = vld [vmem:[%s7 + $0x4] sm:$0xf]
      %v1250 = vld [vmem:[%s7 + $0x8] sm:$0xf]
      %v1251 = vld [vmem:[%s7 + $0xc] sm:$0xf]
      %v1252 = vld [vmem:[%s7 + $0x10] sm:$0xf]
      %v1253 = vld [vmem:[%s7 + $0x14] sm:$0xf]
      %v1254 = vld [vmem:[%s7 + $0x18] sm:$0xf]
      %v1255 = vld [vmem:[%s7 + $0x1c] sm:$0xf]
      %v1256 = vld [vmem:[%s7 + $0x20] sm:$0xf]
      %v1257 = vld [vmem:[%s7 + $0x24] sm:$0xf]
      %v1258 = vld [vmem:[%s7 + $0x28] sm:$0xf]
      %v1259 = vld [vmem:[%s7 + $0x2c] sm:$0xf]
      %v1260 = vld [vmem:[%s7 + $0x30] sm:$0xf]
      %v1261 = vld [vmem:[%s7 + $0x34] sm:$0xf]
      %v1262 = vld [vmem:[%s7 + $0x38] sm:$0xf]
      %v1263 = vld [vmem:[%s7 + $0x3c] sm:$0xf]
      %v1264 = vpack.c.bf16 %v1247, %v1247
      %v1281 = vunpack.c.l.b16 %v1248
      %v1282 = vunpack.c.l.b16 %v1249
      %v1283 = vunpack.c.l.b16 %v1250
      %v1284 = vunpack.c.l.b16 %v1251
      %v1285 = vunpack.c.l.b16 %v1252
      %v1286 = vunpack.c.l.b16 %v1253
      %v1287 = vunpack.c.l.b16 %v1254
      %v1288 = vunpack.c.l.b16 %v1255
      %v1289 = vunpack.c.l.b16 %v1256
      %v1290 = vunpack.c.l.b16 %v1257
      %v1291 = vunpack.c.l.b16 %v1258
      %v1292 = vunpack.c.l.b16 %v1259
      %v1293 = vunpack.c.l.b16 %v1260
      %v1294 = vunpack.c.l.b16 %v1261
      %v1295 = vunpack.c.l.b16 %v1262
      %v1296 = vunpack.c.l.b16 %v1263
      %v1297 = vpack.c.b16 %v1282, %v1281
      %v1298 = vpack.c.b16 %v1284, %v1283
      %v1299 = vpack.c.b16 %v1286, %v1285
      %v1300 = vpack.c.b16 %v1288, %v1287
      %v1301 = vpack.c.b16 %v1290, %v1289
      %v1302 = vpack.c.b16 %v1292, %v1291
      %v1303 = vpack.c.b16 %v1294, %v1293
      %v1304 = vpack.c.b16 %v1296, %v1295
      %1313 = vmatprep.subr.bf16.mxu0 0
      %1314 = vmatpush1.bf16.msra.mxu0 %v1297
      %1315 = vmatprep.subr.bf16.mxu0 0
      %1316 = vmatpush1.bf16.msra.mxu0 %v1298
      %1317 = vmatprep.subr.bf16.mxu0 0
      %1318 = vmatpush1.bf16.msra.mxu0 %v1299
      %1319 = vmatprep.subr.bf16.mxu0 0
      %1320 = vmatpush1.bf16.msra.mxu0 %v1300
      %1321 = vmatprep.subr.bf16.mxu0 0
      %1322 = vmatpush1.bf16.msra.mxu0 %v1301
      %1323 = vmatprep.subr.bf16.mxu0 0
      %1324 = vmatpush1.bf16.msra.mxu0 %v1302
      %1325 = vmatprep.subr.bf16.mxu0 0
      %1326 = vmatpush1.bf16.msra.mxu0 %v1303
      %1327 = vmatprep.subr.bf16.mxu0 0
      %1328 = vmatpush1.bf16.msra.mxu0 %v1304
      %1329 = vmatprep.subr.bf16.mxu0 0
      %1330 = vmatpush1.bf16.msra.mxu0 0
      %1331 = vmatprep.subr.bf16.mxu0 0
      %1332 = vmatpush1.bf16.msra.mxu0 0
      %1333 = vmatprep.subr.bf16.mxu0 0
      %1334 = vmatpush1.bf16.msra.mxu0 0
      %1335 = vmatprep.subr.bf16.mxu0 0
      %1336 = vmatpush1.bf16.msra.mxu0 0
      %1337 = vmatprep.subr.bf16.mxu0 0
      %1338 = vmatpush1.bf16.msra.mxu0 0
      %1339 = vmatprep.subr.bf16.mxu0 0
      %1340 = vmatpush1.bf16.msra.mxu0 0
      %1341 = vmatprep.subr.bf16.mxu0 0
      %1342 = vmatpush1.bf16.msra.mxu0 0
      %1343 = vmatprep.subr.bf16.mxu0 0
      %1344 = vmatpush1.bf16.msra.mxu0 0
      %1345 = vmatprep.mubr.bf16.mxu0 0
      %1346 = vmatmul.mubr.bf16.gmra.mrb[0].mxu0 %v1264
      %v1347 = vpop.f32.mrb[0].mxu0
      %v1348 = vadd.f32 0.0, %v1347
      %v1349 = vpop.f32.mrb[0].mxu0
      %v1350 = vpop.f32.mrb[0].mxu0
      %v1351 = vpop.f32.mrb[0].mxu0
      %1352 = vdwg.mxu0
      %v1353 = vadd.f32 %v525, %v1348
      %v1354 = vld [vmem:[%s8] sm:$0x1]
      %v1355 = vmul.f32 %v1353, %v1353
      %1356 = vadd.xlane.f32.xlu0 %v1355
      %v1357 = vpop.xlane.xlu0 %1356
      %v1358 = vmul.f32 %v1357, %v530
      %v1359 = vadd.f32 %v1358, 1e-06
      %v1360 = vrsqrt.pop %v1359
      %v1361 = vmul.f32 %v1353, %v1360
      %v1363 = vlaneseq
      %v1364 = vshrl.u32 %v1363, 7
      %v1365 = vsub.s32 0, %v1364
      %v1366 = vrot.slane %v1354, %v1365
      %v1368 = vmul.f32 %v1361, %v1366
      %v1369 = vld [vmem:[%s9] sm:$0xf]
      %v1370 = vld [vmem:[%s9 + $0x4] sm:$0xf]
      %v1371 = vld [vmem:[%s9 + $0x8] sm:$0xf]
      %v1372 = vld [vmem:[%s9 + $0xc] sm:$0xf]
      %v1373 = vld [vmem:[%s9 + $0x10] sm:$0xf]
      %v1374 = vld [vmem:[%s9 + $0x14] sm:$0xf]
      %v1375 = vld [vmem:[%s9 + $0x18] sm:$0xf]
      %v1376 = vld [vmem:[%s9 + $0x1c] sm:$0xf]
      %v1377 = vld [vmem:[%s9 + $0x20] sm:$0xf]
      %v1378 = vld [vmem:[%s9 + $0x24] sm:$0xf]
      %v1379 = vld [vmem:[%s9 + $0x28] sm:$0xf]
      %v1380 = vld [vmem:[%s9 + $0x2c] sm:$0xf]
      %v1381 = vld [vmem:[%s9 + $0x30] sm:$0xf]
      %v1382 = vld [vmem:[%s9 + $0x34] sm:$0xf]
      %v1383 = vld [vmem:[%s9 + $0x38] sm:$0xf]
      %v1384 = vld [vmem:[%s9 + $0x3c] sm:$0xf]
      %v1385 = vpack.c.bf16 %v1368, %v1368
      %v1402 = vunpack.c.l.b16 %v1369
      %v1403 = vunpack.c.l.b16 %v1370
      %v1404 = vunpack.c.l.b16 %v1371
      %v1405 = vunpack.c.l.b16 %v1372
      %v1406 = vunpack.c.l.b16 %v1373
      %v1407 = vunpack.c.l.b16 %v1374
      %v1408 = vunpack.c.l.b16 %v1375
      %v1409 = vunpack.c.l.b16 %v1376
      %v1410 = vunpack.c.l.b16 %v1377
      %v1411 = vunpack.c.l.b16 %v1378
      %v1412 = vunpack.c.l.b16 %v1379
      %v1413 = vunpack.c.l.b16 %v1380
      %v1414 = vunpack.c.l.b16 %v1381
      %v1415 = vunpack.c.l.b16 %v1382
      %v1416 = vunpack.c.l.b16 %v1383
      %v1417 = vunpack.c.l.b16 %v1384
      %v1418 = vpack.c.b16 %v1403, %v1402
      %v1419 = vpack.c.b16 %v1405, %v1404
      %v1420 = vpack.c.b16 %v1407, %v1406
      %v1421 = vpack.c.b16 %v1409, %v1408
      %v1422 = vpack.c.b16 %v1411, %v1410
      %v1423 = vpack.c.b16 %v1413, %v1412
      %v1424 = vpack.c.b16 %v1415, %v1414
      %v1425 = vpack.c.b16 %v1417, %v1416
      %1434 = vmatprep.subr.bf16.mxu0 0
      %1435 = vmatpush1.bf16.msra.mxu0 %v1418
      %1436 = vmatprep.subr.bf16.mxu0 0
      %1437 = vmatpush1.bf16.msra.mxu0 %v1419
      %1438 = vmatprep.subr.bf16.mxu0 0
      %1439 = vmatpush1.bf16.msra.mxu0 %v1420
      %1440 = vmatprep.subr.bf16.mxu0 0
      %1441 = vmatpush1.bf16.msra.mxu0 %v1421
      %1442 = vmatprep.subr.bf16.mxu0 0
      %1443 = vmatpush1.bf16.msra.mxu0 %v1422
      %1444 = vmatprep.subr.bf16.mxu0 0
      %1445 = vmatpush1.bf16.msra.mxu0 %v1423
      %1446 = vmatprep.subr.bf16.mxu0 0
      %1447 = vmatpush1.bf16.msra.mxu0 %v1424
      %1448 = vmatprep.subr.bf16.mxu0 0
      %1449 = vmatpush1.bf16.msra.mxu0 %v1425
      %1450 = vmatprep.subr.bf16.mxu0 0
      %1451 = vmatpush1.bf16.msra.mxu0 0
      %1452 = vmatprep.subr.bf16.mxu0 0
      %1453 = vmatpush1.bf16.msra.mxu0 0
      %1454 = vmatprep.subr.bf16.mxu0 0
      %1455 = vmatpush1.bf16.msra.mxu0 0
      %1456 = vmatprep.subr.bf16.mxu0 0
      %1457 = vmatpush1.bf16.msra.mxu0 0
      %1458 = vmatprep.subr.bf16.mxu0 0
      %1459 = vmatpush1.bf16.msra.mxu0 0
      %1460 = vmatprep.subr.bf16.mxu0 0
      %1461 = vmatpush1.bf16.msra.mxu0 0
      %1462 = vmatprep.subr.bf16.mxu0 0
      %1463 = vmatpush1.bf16.msra.mxu0 0
      %1464 = vmatprep.subr.bf16.mxu0 0
      %1465 = vmatpush1.bf16.msra.mxu0 0
      %1466 = vmatprep.mubr.bf16.mxu0 0
      %1467 = vmatmul.mubr.bf16.gmra.mrb[0].mxu0 %v1385
      %v1468 = vpop.f32.mrb[0].mxu0
      %v1469 = vadd.f32 0.0, %v1468
      %v1470 = vpop.f32.mrb[0].mxu0
      %v1471 = vpop.f32.mrb[0].mxu0
      %v1472 = vpop.f32.mrb[0].mxu0
      %1473 = vdwg.mxu0
      %v1474 = vld [vmem:[%s516] sm:$0xff]
      %v1475 = vld [vmem:[%s516 + $0x8] sm:$0xff]
      %v1476 = vld [vmem:[%s4] sm:$0x1]
      %v1477 = vmul.f32 %v1474, %v1474
      %v1478 = vmul.f32 %v1475, %v1475
      %1479 = vadd.xlane.f32.xlu0 %v1477
      %v1480 = vpop.xlane.xlu0 %1479
      %1481 = vadd.xlane.f32.xlu0 %v1478
      %v1482 = vpop.xlane.xlu0 %1481
      %v1483 = vmul.f32 %v1480, %v530
      %v1484 = vmul.f32 %v1482, %v530
      %v1485 = vadd.f32 %v1483, 1e-06
      %v1486 = vadd.f32 %v1484, 1e-06
      %v1487 = vrsqrt.pop %v1485
      %v1488 = vrsqrt.pop %v1486
      %v1489 = vmul.f32 %v1474, %v1487
      %v1490 = vmul.f32 %v1475, %v1488
      %v1492 = vlaneseq
      %v1493 = vshrl.u32 %v1492, 7
      %v1494 = vsub.s32 0, %v1493
      %v1495 = vrot.slane %v1476, %v1494
      %v1497 = vmul.f32 %v1489, %v1495
      %v1498 = vmul.f32 %v1490, %v1495
      %v1499 = vld [vmem:[%s10] sm:$0xff]
      %v1500 = vld [vmem:[%s10 + $0x8] sm:$0xff]
      %v1501 = vld [vmem:[%s10 + $0x10] sm:$0xff]
      %v1502 = vld [vmem:[%s10 + $0x18] sm:$0xff]
      %v1503 = vld [vmem:[%s10 + $0x20] sm:$0xff]
      %v1504 = vld [vmem:[%s10 + $0x28] sm:$0xff]
      %v1505 = vld [vmem:[%s10 + $0x30] sm:$0xff]
      %v1506 = vld [vmem:[%s10 + $0x38] sm:$0xff]
      %v1507 = vld [vmem:[%s10 + $0x40] sm:$0xff]
      %v1508 = vld [vmem:[%s10 + $0x48] sm:$0xff]
      %v1509 = vld [vmem:[%s10 + $0x50] sm:$0xff]
      %v1510 = vld [vmem:[%s10 + $0x58] sm:$0xff]
      %v1511 = vld [vmem:[%s10 + $0x60] sm:$0xff]
      %v1512 = vld [vmem:[%s10 + $0x68] sm:$0xff]
      %v1513 = vld [vmem:[%s10 + $0x70] sm:$0xff]
      %v1514 = vld [vmem:[%s10 + $0x78] sm:$0xff]
      %v1515 = vpack.c.bf16 %v1498, %v1497
      %v1532 = vunpack.c.l.b16 %v1499
      %v1533 = vunpack.c.h.b16 %v1499
      %v1534 = vunpack.c.l.b16 %v1500
      %v1535 = vunpack.c.h.b16 %v1500
      %v1536 = vunpack.c.l.b16 %v1501
      %v1537 = vunpack.c.h.b16 %v1501
      %v1538 = vunpack.c.l.b16 %v1502
      %v1539 = vunpack.c.h.b16 %v1502
      %v1540 = vunpack.c.l.b16 %v1503
      %v1541 = vunpack.c.h.b16 %v1503
      %v1542 = vunpack.c.l.b16 %v1504
      %v1543 = vunpack.c.h.b16 %v1504
      %v1544 = vunpack.c.l.b16 %v1505
      %v1545 = vunpack.c.h.b16 %v1505
      %v1546 = vunpack.c.l.b16 %v1506
      %v1547 = vunpack.c.h.b16 %v1506
      %v1548 = vunpack.c.l.b16 %v1507
      %v1549 = vunpack.c.h.b16 %v1507
      %v1550 = vunpack.c.l.b16 %v1508
      %v1551 = vunpack.c.h.b16 %v1508
      %v1552 = vunpack.c.l.b16 %v1509
      %v1553 = vunpack.c.h.b16 %v1509
      %v1554 = vunpack.c.l.b16 %v1510
      %v1555 = vunpack.c.h.b16 %v1510
      %v1556 = vunpack.c.l.b16 %v1511
      %v1557 = vunpack.c.h.b16 %v1511
      %v1558 = vunpack.c.l.b16 %v1512
      %v1559 = vunpack.c.h.b16 %v1512
      %v1560 = vunpack.c.l.b16 %v1513
      %v1561 = vunpack.c.h.b16 %v1513
      %v1562 = vunpack.c.l.b16 %v1514
      %v1563 = vunpack.c.h.b16 %v1514
      %v1564 = vpack.c.b16 %v1534, %v1532
      %v1565 = vpack.c.b16 %v1535, %v1533
      %v1566 = vpack.c.b16 %v1538, %v1536
      %v1567 = vpack.c.b16 %v1539, %v1537
      %v1568 = vpack.c.b16 %v1542, %v1540
      %v1569 = vpack.c.b16 %v1543, %v1541
      %v1570 = vpack.c.b16 %v1546, %v1544
      %v1571 = vpack.c.b16 %v1547, %v1545
      %v1572 = vpack.c.b16 %v1550, %v1548
      %v1573 = vpack.c.b16 %v1551, %v1549
      %v1574 = vpack.c.b16 %v1554, %v1552
      %v1575 = vpack.c.b16 %v1555, %v1553
      %v1576 = vpack.c.b16 %v1558, %v1556
      %v1577 = vpack.c.b16 %v1559, %v1557
      %v1578 = vpack.c.b16 %v1562, %v1560
      %v1579 = vpack.c.b16 %v1563, %v1561
      %1596 = vmatprep.subr.bf16.mxu0 %v1565
      %1597 = vmatpush1.bf16.msra.mxu0 %v1564
      %1598 = vmatprep.subr.bf16.mxu0 %v1567
      %1599 = vmatpush1.bf16.msra.mxu0 %v1566
      %1600 = vmatprep.subr.bf16.mxu0 %v1569
      %1601 = vmatpush1.bf16.msra.mxu0 %v1568
      %1602 = vmatprep.subr.bf16.mxu0 %v1571
      %1603 = vmatpush1.bf16.msra.mxu0 %v1570
      %1604 = vmatprep.subr.bf16.mxu0 %v1573
      %1605 = vmatpush1.bf16.msra.mxu0 %v1572
      %1606 = vmatprep.subr.bf16.mxu0 %v1575
      %1607 = vmatpush1.bf16.msra.mxu0 %v1574
      %1608 = vmatprep.subr.bf16.mxu0 %v1577
      %1609 = vmatpush1.bf16.msra.mxu0 %v1576
      %1610 = vmatprep.subr.bf16.mxu0 %v1579
      %1611 = vmatpush1.bf16.msra.mxu0 %v1578
      %1612 = vmatprep.subr.bf16.mxu0 0
      %1613 = vmatpush1.bf16.msra.mxu0 0
      %1614 = vmatprep.subr.bf16.mxu0 0
      %1615 = vmatpush1.bf16.msra.mxu0 0
      %1616 = vmatprep.subr.bf16.mxu0 0
      %1617 = vmatpush1.bf16.msra.mxu0 0
      %1618 = vmatprep.subr.bf16.mxu0 0
      %1619 = vmatpush1.bf16.msra.mxu0 0
      %1620 = vmatprep.subr.bf16.mxu0 0
      %1621 = vmatpush1.bf16.msra.mxu0 0
      %1622 = vmatprep.subr.bf16.mxu0 0
      %1623 = vmatpush1.bf16.msra.mxu0 0
      %1624 = vmatprep.subr.bf16.mxu0 0
      %1625 = vmatpush1.bf16.msra.mxu0 0
      %1626 = vmatprep.subr.bf16.mxu0 0
      %1627 = vmatpush1.bf16.msra.mxu0 0
      %1628 = vmatprep.mubr.bf16.mxu0 0
      %1629 = vmatmul.mubr.bf16.gmra.mrb[0].mxu0 %v1515
      %v1630 = vpop.f32.mrb[0].mxu0
      %v1631 = vadd.f32 0.0, %v1630
      %v1632 = vpop.f32.mrb[0].mxu0
      %v1633 = vadd.f32 0.0, %v1632
      %v1634 = vpop.f32.mrb[0].mxu0
      %v1635 = vadd.f32 0.0, %v1634
      %v1636 = vpop.f32.mrb[0].mxu0
      %v1637 = vadd.f32 0.0, %v1636
      %1638 = vdwg.mxu0
      %v1639 = vld [vmem:[%s519] sm:$0x1]
      %v1640 = vpack.c.bf16 %v1469, %v1469
      %v1641 = vpack.c.bf16 %v1635, %v1631
      %v1643 = vlaneseq
      %v1644 = vshrl.u32 %v1643, 7
      %v1645 = vsub.s32 0, %v1644
      %v1646 = vrot.slane %v1639, %v1645
      %v1649 = vsel %vm790, %v1640, 0
      %v1652 = vsel %vm790, %v1641, 0
      %1654 = vmatprep.subr.bf16.mxu0 0
      %1655 = vmatpush1.bf16.xpose.msra.mxu0 %v1652
      %1656 = vmatprep.subr.bf16.mxu0 0
      %1657 = vmatpush1.bf16.xpose.msra.mxu0 0
      %1658 = vmatprep.subr.bf16.mxu0 0
      %1659 = vmatpush1.bf16.xpose.msra.mxu0 0
      %1660 = vmatprep.subr.bf16.mxu0 0
      %1661 = vmatpush1.bf16.xpose.msra.mxu0 0
      %1662 = vmatprep.subr.bf16.mxu0 0
      %1663 = vmatpush1.bf16.xpose.msra.mxu0 0
      %1664 = vmatprep.subr.bf16.mxu0 0
      %1665 = vmatpush1.bf16.xpose.msra.mxu0 0
      %1666 = vmatprep.subr.bf16.mxu0 0
      %1667 = vmatpush1.bf16.xpose.msra.mxu0 0
      %1668 = vmatprep.subr.bf16.mxu0 0
      %1669 = vmatpush1.bf16.xpose.msra.mxu0 0
      %1670 = vmatprep.subr.bf16.mxu0 0
      %1671 = vmatpush1.bf16.xpose.msra.mxu0 0
      %1672 = vmatprep.subr.bf16.mxu0 0
      %1673 = vmatpush1.bf16.xpose.msra.mxu0 0
      %1674 = vmatprep.subr.bf16.mxu0 0
      %1675 = vmatpush1.bf16.xpose.msra.mxu0 0
      %1676 = vmatprep.subr.bf16.mxu0 0
      %1677 = vmatpush1.bf16.xpose.msra.mxu0 0
      %1678 = vmatprep.subr.bf16.mxu0 0
      %1679 = vmatpush1.bf16.xpose.msra.mxu0 0
      %1680 = vmatprep.subr.bf16.mxu0 0
      %1681 = vmatpush1.bf16.xpose.msra.mxu0 0
      %1682 = vmatprep.subr.bf16.mxu0 0
      %1683 = vmatpush1.bf16.xpose.msra.mxu0 0
      %1684 = vmatprep.subr.bf16.mxu0 0
      %1685 = vmatpush1.bf16.xpose.msra.mxu0 0
      %1686 = vmatprep.mubr.bf16.mxu0 0
      %1687 = vmatmul.mubr.bf16.gmra.mrb[0].mxu0 %v1649
      %v1688 = vpop.f32.mrb[0].mxu0
      %v1689 = vadd.f32 %v1646, %v1688
      %v1690 = vpop.f32.mrb[0].mxu0
      %v1691 = vpop.f32.mrb[0].mxu0
      %v1692 = vpop.f32.mrb[0].mxu0
      %1693 = vdwg.mxu0
      %vm1694 = vcmask 130048
      %v1695 = vsel %vm1694, %v1689, -inf
      %1696 = vmax.xlane.f32.xlu0 %v1695
      %v1697 = vpop.xlane.xlu0 %1696
      %v1698 = vsub.f32 %v1689, %v1697
      %v1699 = vmul.f32 %v1698, 1.442695
      %v1700 = vpow.pop %v1699
      %v1701 = vsel %vm1694, %v1700, 0.0
      %1702 = vadd.xlane.f32.xlu0 %v1701
      %v1703 = vpop.xlane.xlu0 %1702
      %v1704 = vpack.c.bf16 %v1700, %v1700
      %v1705 = vpack.c.bf16 %v1637, %v1633
      %v1707 = vsel %vm1694, %v1704, 0
      %1709 = vmatprep.subr.bf16.mxu0 0
      %1710 = vmatpush1.bf16.msra.mxu0 %v1705
      %1711 = vmatprep.subr.bf16.mxu0 0
      %1712 = vmatpush1.bf16.msra.mxu0 0
      %1713 = vmatprep.subr.bf16.mxu0 0
      %1714 = vmatpush1.bf16.msra.mxu0 0
      %1715 = vmatprep.subr.bf16.mxu0 0
      %1716 = vmatpush1.bf16.msra.mxu0 0
      %1717 = vmatprep.subr.bf16.mxu0 0
      %1718 = vmatpush1.bf16.msra.mxu0 0
      %1719 = vmatprep.subr.bf16.mxu0 0
      %1720 = vmatpush1.bf16.msra.mxu0 0
      %1721 = vmatprep.subr.bf16.mxu0 0
      %1722 = vmatpush1.bf16.msra.mxu0 0
      %1723 = vmatprep.subr.bf16.mxu0 0
      %1724 = vmatpush1.bf16.msra.mxu0 0
      %1725 = vmatprep.subr.bf16.mxu0 0
      %1726 = vmatpush1.bf16.msra.mxu0 0
      %1727 = vmatprep.subr.bf16.mxu0 0
      %1728 = vmatpush1.bf16.msra.mxu0 0
      %1729 = vmatprep.subr.bf16.mxu0 0
      %1730 = vmatpush1.bf16.msra.mxu0 0
      %1731 = vmatprep.subr.bf16.mxu0 0
      %1732 = vmatpush1.bf16.msra.mxu0 0
      %1733 = vmatprep.subr.bf16.mxu0 0
      %1734 = vmatpush1.bf16.msra.mxu0 0
      %1735 = vmatprep.subr.bf16.mxu0 0
      %1736 = vmatpush1.bf16.msra.mxu0 0
      %1737 = vmatprep.subr.bf16.mxu0 0
      %1738 = vmatpush1.bf16.msra.mxu0 0
      %1739 = vmatprep.subr.bf16.mxu0 0
      %1740 = vmatpush1.bf16.msra.mxu0 0
      %1741 = vmatprep.mubr.bf16.mxu0 0
      %1742 = vmatmul.mubr.bf16.gmra.mrb[0].mxu0 %v1707
      %v1743 = vpop.f32.mrb[0].mxu0
      %v1744 = vadd.f32 0.0, %v1743
      %v1745 = vpop.f32.mrb[0].mxu0
      %v1746 = vpop.f32.mrb[0].mxu0
      %v1747 = vpop.f32.mrb[0].mxu0
      %1748 = vdwg.mxu0
      %v1749 = vrcp.pop %v1703
      %v1750 = vmul.f32 %v1744, %v1749
      %1752 = vrot.lane.b32.xlu0 %v1640, 96
      %v1753 = vpop.permute.xlu0 %1752
      %1755 = vrot.lane.b32.xlu0 %v1641, 96
      %v1756 = vpop.permute.xlu0 %1755
      %v1758 = vsel %vm790, %v1753, 0
      %v1761 = vsel %vm790, %v1756, 0
      %1763 = vmatprep.subr.bf16.mxu0 0
      %1764 = vmatpush1.bf16.xpose.msra.mxu0 %v1761
      %1765 = vmatprep.subr.bf16.mxu0 0
      %1766 = vmatpush1.bf16.xpose.msra.mxu0 0
      %1767 = vmatprep.subr.bf16.mxu0 0
      %1768 = vmatpush1.bf16.xpose.msra.mxu0 0
      %1769 = vmatprep.subr.bf16.mxu0 0
      %1770 = vmatpush1.bf16.xpose.msra.mxu0 0
      %1771 = vmatprep.subr.bf16.mxu0 0
      %1772 = vmatpush1.bf16.xpose.msra.mxu0 0
      %1773 = vmatprep.subr.bf16.mxu0 0
      %1774 = vmatpush1.bf16.xpose.msra.mxu0 0
      %1775 = vmatprep.subr.bf16.mxu0 0
      %1776 = vmatpush1.bf16.xpose.msra.mxu0 0
      %1777 = vmatprep.subr.bf16.mxu0 0
      %1778 = vmatpush1.bf16.xpose.msra.mxu0 0
      %1779 = vmatprep.subr.bf16.mxu0 0
      %1780 = vmatpush1.bf16.xpose.msra.mxu0 0
      %1781 = vmatprep.subr.bf16.mxu0 0
      %1782 = vmatpush1.bf16.xpose.msra.mxu0 0
      %1783 = vmatprep.subr.bf16.mxu0 0
      %1784 = vmatpush1.bf16.xpose.msra.mxu0 0
      %1785 = vmatprep.subr.bf16.mxu0 0
      %1786 = vmatpush1.bf16.xpose.msra.mxu0 0
      %1787 = vmatprep.subr.bf16.mxu0 0
      %1788 = vmatpush1.bf16.xpose.msra.mxu0 0
      %1789 = vmatprep.subr.bf16.mxu0 0
      %1790 = vmatpush1.bf16.xpose.msra.mxu0 0
      %1791 = vmatprep.subr.bf16.mxu0 0
      %1792 = vmatpush1.bf16.xpose.msra.mxu0 0
      %1793 = vmatprep.subr.bf16.mxu0 0
      %1794 = vmatpush1.bf16.xpose.msra.mxu0 0
      %1795 = vmatprep.mubr.bf16.mxu0 0
      %1796 = vmatmul.mubr.bf16.gmra.mrb[0].mxu0 %v1758
      %v1797 = vpop.f32.mrb[0].mxu0
      %v1798 = vadd.f32 %v1646, %v1797
      %v1799 = vpop.f32.mrb[0].mxu0
      %v1800 = vpop.f32.mrb[0].mxu0
      %v1801 = vpop.f32.mrb[0].mxu0
      %1802 = vdwg.mxu0
      %v1803 = vsel %vm1694, %v1798, -inf
      %1804 = vmax.xlane.f32.xlu0 %v1803
      %v1805 = vpop.xlane.xlu0 %1804
      %v1806 = vsub.f32 %v1798, %v1805
      %v1807 = vmul.f32 %v1806, 1.442695
      %v1808 = vpow.pop %v1807
      %v1809 = vsel %vm1694, %v1808, 0.0
      %1810 = vadd.xlane.f32.xlu0 %v1809
      %v1811 = vpop.xlane.xlu0 %1810
      %v1812 = vpack.c.bf16 %v1808, %v1808
      %1814 = vrot.lane.b32.xlu0 %v1705, 96
      %v1815 = vpop.permute.xlu0 %1814
      %v1818 = vsel %vm1694, %v1812, 0
      %1820 = vmatprep.subr.bf16.mxu0 0
      %1821 = vmatpush1.bf16.msra.mxu0 %v1815
      %1822 = vmatprep.subr.bf16.mxu0 0
      %1823 = vmatpush1.bf16.msra.mxu0 0
      %1824 = vmatprep.subr.bf16.mxu0 0
      %1825 = vmatpush1.bf16.msra.mxu0 0
      %1826 = vmatprep.subr.bf16.mxu0 0
      %1827 = vmatpush1.bf16.msra.mxu0 0
      %1828 = vmatprep.subr.bf16.mxu0 0
      %1829 = vmatpush1.bf16.msra.mxu0 0
      %1830 = vmatprep.subr.bf16.mxu0 0
      %1831 = vmatpush1.bf16.msra.mxu0 0
      %1832 = vmatprep.subr.bf16.mxu0 0
      %1833 = vmatpush1.bf16.msra.mxu0 0
      %1834 = vmatprep.subr.bf16.mxu0 0
      %1835 = vmatpush1.bf16.msra.mxu0 0
      %1836 = vmatprep.subr.bf16.mxu0 0
      %1837 = vmatpush1.bf16.msra.mxu0 0
      %1838 = vmatprep.subr.bf16.mxu0 0
      %1839 = vmatpush1.bf16.msra.mxu0 0
      %1840 = vmatprep.subr.bf16.mxu0 0
      %1841 = vmatpush1.bf16.msra.mxu0 0
      %1842 = vmatprep.subr.bf16.mxu0 0
      %1843 = vmatpush1.bf16.msra.mxu0 0
      %1844 = vmatprep.subr.bf16.mxu0 0
      %1845 = vmatpush1.bf16.msra.mxu0 0
      %1846 = vmatprep.subr.bf16.mxu0 0
      %1847 = vmatpush1.bf16.msra.mxu0 0
      %1848 = vmatprep.subr.bf16.mxu0 0
      %1849 = vmatpush1.bf16.msra.mxu0 0
      %1850 = vmatprep.subr.bf16.mxu0 0
      %1851 = vmatpush1.bf16.msra.mxu0 0
      %1852 = vmatprep.mubr.bf16.mxu0 0
      %1853 = vmatmul.mubr.bf16.gmra.mrb[0].mxu0 %v1818
      %v1854 = vpop.f32.mrb[0].mxu0
      %v1855 = vadd.f32 0.0, %v1854
      %v1856 = vpop.f32.mrb[0].mxu0
      %v1857 = vpop.f32.mrb[0].mxu0
      %v1858 = vpop.f32.mrb[0].mxu0
      %1859 = vdwg.mxu0
      %v1860 = vrcp.pop %v1811
      %v1861 = vmul.f32 %v1855, %v1860
      %1862 = vrot.lane.b32.xlu0 %v1640, 64
      %v1863 = vpop.permute.xlu0 %1862
      %1864 = vrot.lane.b32.xlu0 %v1641, 64
      %v1865 = vpop.permute.xlu0 %1864
      %v1867 = vsel %vm790, %v1863, 0
      %v1870 = vsel %vm790, %v1865, 0
      %1872 = vmatprep.subr.bf16.mxu0 0
      %1873 = vmatpush1.bf16.xpose.msra.mxu0 %v1870
      %1874 = vmatprep.subr.bf16.mxu0 0
      %1875 = vmatpush1.bf16.xpose.msra.mxu0 0
      %1876 = vmatprep.subr.bf16.mxu0 0
      %1877 = vmatpush1.bf16.xpose.msra.mxu0 0
      %1878 = vmatprep.subr.bf16.mxu0 0
      %1879 = vmatpush1.bf16.xpose.msra.mxu0 0
      %1880 = vmatprep.subr.bf16.mxu0 0
      %1881 = vmatpush1.bf16.xpose.msra.mxu0 0
      %1882 = vmatprep.subr.bf16.mxu0 0
      %1883 = vmatpush1.bf16.xpose.msra.mxu0 0
      %1884 = vmatprep.subr.bf16.mxu0 0
      %1885 = vmatpush1.bf16.xpose.msra.mxu0 0
      %1886 = vmatprep.subr.bf16.mxu0 0
      %1887 = vmatpush1.bf16.xpose.msra.mxu0 0
      %1888 = vmatprep.subr.bf16.mxu0 0
      %1889 = vmatpush1.bf16.xpose.msra.mxu0 0
      %1890 = vmatprep.subr.bf16.mxu0 0
      %1891 = vmatpush1.bf16.xpose.msra.mxu0 0
      %1892 = vmatprep.subr.bf16.mxu0 0
      %1893 = vmatpush1.bf16.xpose.msra.mxu0 0
      %1894 = vmatprep.subr.bf16.mxu0 0
      %1895 = vmatpush1.bf16.xpose.msra.mxu0 0
      %1896 = vmatprep.subr.bf16.mxu0 0
      %1897 = vmatpush1.bf16.xpose.msra.mxu0 0
      %1898 = vmatprep.subr.bf16.mxu0 0
      %1899 = vmatpush1.bf16.xpose.msra.mxu0 0
      %1900 = vmatprep.subr.bf16.mxu0 0
      %1901 = vmatpush1.bf16.xpose.msra.mxu0 0
      %1902 = vmatprep.subr.bf16.mxu0 0
      %1903 = vmatpush1.bf16.xpose.msra.mxu0 0
      %1904 = vmatprep.mubr.bf16.mxu0 0
      %1905 = vmatmul.mubr.bf16.gmra.mrb[0].mxu0 %v1867
      %v1906 = vpop.f32.mrb[0].mxu0
      %v1907 = vadd.f32 %v1646, %v1906
      %v1908 = vpop.f32.mrb[0].mxu0
      %v1909 = vpop.f32.mrb[0].mxu0
      %v1910 = vpop.f32.mrb[0].mxu0
      %1911 = vdwg.mxu0
      %v1912 = vsel %vm1694, %v1907, -inf
      %1913 = vmax.xlane.f32.xlu0 %v1912
      %v1914 = vpop.xlane.xlu0 %1913
      %v1915 = vsub.f32 %v1907, %v1914
      %v1916 = vmul.f32 %v1915, 1.442695
      %v1917 = vpow.pop %v1916
      %v1918 = vsel %vm1694, %v1917, 0.0
      %1919 = vadd.xlane.f32.xlu0 %v1918
      %v1920 = vpop.xlane.xlu0 %1919
      %v1921 = vpack.c.bf16 %v1917, %v1917
      %1922 = vrot.lane.b32.xlu0 %v1705, 64
      %v1923 = vpop.permute.xlu0 %1922
      %v1926 = vsel %vm1694, %v1921, 0
      %1928 = vmatprep.subr.bf16.mxu0 0
      %1929 = vmatpush1.bf16.msra.mxu0 %v1923
      %1930 = vmatprep.subr.bf16.mxu0 0
      %1931 = vmatpush1.bf16.msra.mxu0 0
      %1932 = vmatprep.subr.bf16.mxu0 0
      %1933 = vmatpush1.bf16.msra.mxu0 0
      %1934 = vmatprep.subr.bf16.mxu0 0
      %1935 = vmatpush1.bf16.msra.mxu0 0
      %1936 = vmatprep.subr.bf16.mxu0 0
      %1937 = vmatpush1.bf16.msra.mxu0 0
      %1938 = vmatprep.subr.bf16.mxu0 0
      %1939 = vmatpush1.bf16.msra.mxu0 0
      %1940 = vmatprep.subr.bf16.mxu0 0
      %1941 = vmatpush1.bf16.msra.mxu0 0
      %1942 = vmatprep.subr.bf16.mxu0 0
      %1943 = vmatpush1.bf16.msra.mxu0 0
      %1944 = vmatprep.subr.bf16.mxu0 0
      %1945 = vmatpush1.bf16.msra.mxu0 0
      %1946 = vmatprep.subr.bf16.mxu0 0
      %1947 = vmatpush1.bf16.msra.mxu0 0
      %1948 = vmatprep.subr.bf16.mxu0 0
      %1949 = vmatpush1.bf16.msra.mxu0 0
      %1950 = vmatprep.subr.bf16.mxu0 0
      %1951 = vmatpush1.bf16.msra.mxu0 0
      %1952 = vmatprep.subr.bf16.mxu0 0
      %1953 = vmatpush1.bf16.msra.mxu0 0
      %1954 = vmatprep.subr.bf16.mxu0 0
      %1955 = vmatpush1.bf16.msra.mxu0 0
      %1956 = vmatprep.subr.bf16.mxu0 0
      %1957 = vmatpush1.bf16.msra.mxu0 0
      %1958 = vmatprep.subr.bf16.mxu0 0
      %1959 = vmatpush1.bf16.msra.mxu0 0
      %1960 = vmatprep.mubr.bf16.mxu0 0
      %1961 = vmatmul.mubr.bf16.gmra.mrb[0].mxu0 %v1926
      %v1962 = vpop.f32.mrb[0].mxu0
      %v1963 = vadd.f32 0.0, %v1962
      %v1964 = vpop.f32.mrb[0].mxu0
      %v1965 = vpop.f32.mrb[0].mxu0
      %v1966 = vpop.f32.mrb[0].mxu0
      %1967 = vdwg.mxu0
      %v1968 = vrcp.pop %v1920
      %v1969 = vmul.f32 %v1963, %v1968
      %1970 = vrot.lane.b32.xlu0 %v1640, 32
      %v1971 = vpop.permute.xlu0 %1970
      %1972 = vrot.lane.b32.xlu0 %v1641, 32
      %v1973 = vpop.permute.xlu0 %1972
      %v1975 = vsel %vm790, %v1971, 0
      %v1978 = vsel %vm790, %v1973, 0
      %1980 = vmatprep.subr.bf16.mxu0 0
      %1981 = vmatpush1.bf16.xpose.msra.mxu0 %v1978
      %1982 = vmatprep.subr.bf16.mxu0 0
      %1983 = vmatpush1.bf16.xpose.msra.mxu0 0
      %1984 = vmatprep.subr.bf16.mxu0 0
      %1985 = vmatpush1.bf16.xpose.msra.mxu0 0
      %1986 = vmatprep.subr.bf16.mxu0 0
      %1987 = vmatpush1.bf16.xpose.msra.mxu0 0
      %1988 = vmatprep.subr.bf16.mxu0 0
      %1989 = vmatpush1.bf16.xpose.msra.mxu0 0
      %1990 = vmatprep.subr.bf16.mxu0 0
      %1991 = vmatpush1.bf16.xpose.msra.mxu0 0
      %1992 = vmatprep.subr.bf16.mxu0 0
      %1993 = vmatpush1.bf16.xpose.msra.mxu0 0
      %1994 = vmatprep.subr.bf16.mxu0 0
      %1995 = vmatpush1.bf16.xpose.msra.mxu0 0
      %1996 = vmatprep.subr.bf16.mxu0 0
      %1997 = vmatpush1.bf16.xpose.msra.mxu0 0
      %1998 = vmatprep.subr.bf16.mxu0 0
      %1999 = vmatpush1.bf16.xpose.msra.mxu0 0
      %2000 = vmatprep.subr.bf16.mxu0 0
      %2001 = vmatpush1.bf16.xpose.msra.mxu0 0
      %2002 = vmatprep.subr.bf16.mxu0 0
      %2003 = vmatpush1.bf16.xpose.msra.mxu0 0
      %2004 = vmatprep.subr.bf16.mxu0 0
      %2005 = vmatpush1.bf16.xpose.msra.mxu0 0
      %2006 = vmatprep.subr.bf16.mxu0 0
      %2007 = vmatpush1.bf16.xpose.msra.mxu0 0
      %2008 = vmatprep.subr.bf16.mxu0 0
      %2009 = vmatpush1.bf16.xpose.msra.mxu0 0
      %2010 = vmatprep.subr.bf16.mxu0 0
      %2011 = vmatpush1.bf16.xpose.msra.mxu0 0
      %2012 = vmatprep.mubr.bf16.mxu0 0
      %2013 = vmatmul.mubr.bf16.gmra.mrb[0].mxu0 %v1975
      %v2014 = vpop.f32.mrb[0].mxu0
      %v2015 = vadd.f32 %v1646, %v2014
      %v2016 = vpop.f32.mrb[0].mxu0
      %v2017 = vpop.f32.mrb[0].mxu0
      %v2018 = vpop.f32.mrb[0].mxu0
      %2019 = vdwg.mxu0
      %v2020 = vsel %vm1694, %v2015, -inf
      %2021 = vmax.xlane.f32.xlu0 %v2020
      %v2022 = vpop.xlane.xlu0 %2021
      %v2023 = vsub.f32 %v2015, %v2022
      %v2024 = vmul.f32 %v2023, 1.442695
      %v2025 = vpow.pop %v2024
      %v2026 = vsel %vm1694, %v2025, 0.0
      %2027 = vadd.xlane.f32.xlu0 %v2026
      %v2028 = vpop.xlane.xlu0 %2027
      %v2029 = vpack.c.bf16 %v2025, %v2025
      %2030 = vrot.lane.b32.xlu0 %v1705, 32
      %v2031 = vpop.permute.xlu0 %2030
      %v2034 = vsel %vm1694, %v2029, 0
      %2036 = vmatprep.subr.bf16.mxu0 0
      %2037 = vmatpush1.bf16.msra.mxu0 %v2031
      %2038 = vmatprep.subr.bf16.mxu0 0
      %2039 = vmatpush1.bf16.msra.mxu0 0
      %2040 = vmatprep.subr.bf16.mxu0 0
      %2041 = vmatpush1.bf16.msra.mxu0 0
      %2042 = vmatprep.subr.bf16.mxu0 0
      %2043 = vmatpush1.bf16.msra.mxu0 0
      %2044 = vmatprep.subr.bf16.mxu0 0
      %2045 = vmatpush1.bf16.msra.mxu0 0
      %2046 = vmatprep.subr.bf16.mxu0 0
      %2047 = vmatpush1.bf16.msra.mxu0 0
      %2048 = vmatprep.subr.bf16.mxu0 0
      %2049 = vmatpush1.bf16.msra.mxu0 0
      %2050 = vmatprep.subr.bf16.mxu0 0
      %2051 = vmatpush1.bf16.msra.mxu0 0
      %2052 = vmatprep.subr.bf16.mxu0 0
      %2053 = vmatpush1.bf16.msra.mxu0 0
      %2054 = vmatprep.subr.bf16.mxu0 0
      %2055 = vmatpush1.bf16.msra.mxu0 0
      %2056 = vmatprep.subr.bf16.mxu0 0
      %2057 = vmatpush1.bf16.msra.mxu0 0
      %2058 = vmatprep.subr.bf16.mxu0 0
      %2059 = vmatpush1.bf16.msra.mxu0 0
      %2060 = vmatprep.subr.bf16.mxu0 0
      %2061 = vmatpush1.bf16.msra.mxu0 0
      %2062 = vmatprep.subr.bf16.mxu0 0
      %2063 = vmatpush1.bf16.msra.mxu0 0
      %2064 = vmatprep.subr.bf16.mxu0 0
      %2065 = vmatpush1.bf16.msra.mxu0 0
      %2066 = vmatprep.subr.bf16.mxu0 0
      %2067 = vmatpush1.bf16.msra.mxu0 0
      %2068 = vmatprep.mubr.bf16.mxu0 0
      %2069 = vmatmul.mubr.bf16.gmra.mrb[0].mxu0 %v2034
      %v2070 = vpop.f32.mrb[0].mxu0
      %v2071 = vadd.f32 0.0, %v2070
      %v2072 = vpop.f32.mrb[0].mxu0
      %v2073 = vpop.f32.mrb[0].mxu0
      %v2074 = vpop.f32.mrb[0].mxu0
      %2075 = vdwg.mxu0
      %v2076 = vrcp.pop %v2028
      %v2077 = vmul.f32 %v2071, %v2076
      %2079 = vrot.lane.b32.xlu0 %v1861, 32
      %v2080 = vpop.permute.xlu0 %2079
      %2083 = vrot.lane.b32.xlu0 %v1969, 64
      %v2084 = vpop.permute.xlu0 %2083
      %2087 = vrot.lane.b32.xlu0 %v2077, 96
      %v2088 = vpop.permute.xlu0 %2087
      %v2090 = vsel %vm790, %v1750, %v2080
      %v2091 = vsel %vm1244, %v2090, %v2084
      %v2092 = vsel %vm1246, %v2091, %v2088
      %v2093 = vld [vmem:[%s11] sm:$0xf]
      %v2094 = vld [vmem:[%s11 + $0x4] sm:$0xf]
      %v2095 = vld [vmem:[%s11 + $0x8] sm:$0xf]
      %v2096 = vld [vmem:[%s11 + $0xc] sm:$0xf]
      %v2097 = vld [vmem:[%s11 + $0x10] sm:$0xf]
      %v2098 = vld [vmem:[%s11 + $0x14] sm:$0xf]
      %v2099 = vld [vmem:[%s11 + $0x18] sm:$0xf]
      %v2100 = vld [vmem:[%s11 + $0x1c] sm:$0xf]
      %v2101 = vld [vmem:[%s11 + $0x20] sm:$0xf]
      %v2102 = vld [vmem:[%s11 + $0x24] sm:$0xf]
      %v2103 = vld [vmem:[%s11 + $0x28] sm:$0xf]
      %v2104 = vld [vmem:[%s11 + $0x2c] sm:$0xf]
      %v2105 = vld [vmem:[%s11 + $0x30] sm:$0xf]
      %v2106 = vld [vmem:[%s11 + $0x34] sm:$0xf]
      %v2107 = vld [vmem:[%s11 + $0x38] sm:$0xf]
      %v2108 = vld [vmem:[%s11 + $0x3c] sm:$0xf]
      %v2109 = vpack.c.bf16 %v2092, %v2092
      %v2126 = vunpack.c.l.b16 %v2093
      %v2127 = vunpack.c.l.b16 %v2094
      %v2128 = vunpack.c.l.b16 %v2095
      %v2129 = vunpack.c.l.b16 %v2096
      %v2130 = vunpack.c.l.b16 %v2097
      %v2131 = vunpack.c.l.b16 %v2098
      %v2132 = vunpack.c.l.b16 %v2099
      %v2133 = vunpack.c.l.b16 %v2100
      %v2134 = vunpack.c.l.b16 %v2101
      %v2135 = vunpack.c.l.b16 %v2102
      %v2136 = vunpack.c.l.b16 %v2103
      %v2137 = vunpack.c.l.b16 %v2104
      %v2138 = vunpack.c.l.b16 %v2105
      %v2139 = vunpack.c.l.b16 %v2106
      %v2140 = vunpack.c.l.b16 %v2107
      %v2141 = vunpack.c.l.b16 %v2108
      %v2142 = vpack.c.b16 %v2127, %v2126
      %v2143 = vpack.c.b16 %v2129, %v2128
      %v2144 = vpack.c.b16 %v2131, %v2130
      %v2145 = vpack.c.b16 %v2133, %v2132
      %v2146 = vpack.c.b16 %v2135, %v2134
      %v2147 = vpack.c.b16 %v2137, %v2136
      %v2148 = vpack.c.b16 %v2139, %v2138
      %v2149 = vpack.c.b16 %v2141, %v2140
      %2158 = vmatprep.subr.bf16.mxu0 0
      %2159 = vmatpush1.bf16.msra.mxu0 %v2142
      %2160 = vmatprep.subr.bf16.mxu0 0
      %2161 = vmatpush1.bf16.msra.mxu0 %v2143
      %2162 = vmatprep.subr.bf16.mxu0 0
      %2163 = vmatpush1.bf16.msra.mxu0 %v2144
      %2164 = vmatprep.subr.bf16.mxu0 0
      %2165 = vmatpush1.bf16.msra.mxu0 %v2145
      %2166 = vmatprep.subr.bf16.mxu0 0
      %2167 = vmatpush1.bf16.msra.mxu0 %v2146
      %2168 = vmatprep.subr.bf16.mxu0 0
      %2169 = vmatpush1.bf16.msra.mxu0 %v2147
      %2170 = vmatprep.subr.bf16.mxu0 0
      %2171 = vmatpush1.bf16.msra.mxu0 %v2148
      %2172 = vmatprep.subr.bf16.mxu0 0
      %2173 = vmatpush1.bf16.msra.mxu0 %v2149
      %2174 = vmatprep.subr.bf16.mxu0 0
      %2175 = vmatpush1.bf16.msra.mxu0 0
      %2176 = vmatprep.subr.bf16.mxu0 0
      %2177 = vmatpush1.bf16.msra.mxu0 0
      %2178 = vmatprep.subr.bf16.mxu0 0
      %2179 = vmatpush1.bf16.msra.mxu0 0
      %2180 = vmatprep.subr.bf16.mxu0 0
      %2181 = vmatpush1.bf16.msra.mxu0 0
      %2182 = vmatprep.subr.bf16.mxu0 0
      %2183 = vmatpush1.bf16.msra.mxu0 0
      %2184 = vmatprep.subr.bf16.mxu0 0
      %2185 = vmatpush1.bf16.msra.mxu0 0
      %2186 = vmatprep.subr.bf16.mxu0 0
      %2187 = vmatpush1.bf16.msra.mxu0 0
      %2188 = vmatprep.subr.bf16.mxu0 0
      %2189 = vmatpush1.bf16.msra.mxu0 0
      %2190 = vmatprep.mubr.bf16.mxu0 0
      %2191 = vmatmul.mubr.bf16.gmra.mrb[0].mxu0 %v2109
      %v2192 = vpop.f32.mrb[0].mxu0
      %v2193 = vadd.f32 0.0, %v2192
      %v2194 = vpop.f32.mrb[0].mxu0
      %v2195 = vpop.f32.mrb[0].mxu0
      %v2196 = vpop.f32.mrb[0].mxu0
      %2197 = vdwg.mxu0
      %v2198 = vadd.f32 %v1353, %v2193
      %v2199 = vld [vmem:[%s12] sm:$0x1]
      %v2200 = vmul.f32 %v2198, %v2198
      %2201 = vadd.xlane.f32.xlu0 %v2200
      %v2202 = vpop.xlane.xlu0 %2201
      %v2203 = vmul.f32 %v2202, %v530
      %v2204 = vadd.f32 %v2203, 1e-06
      %v2205 = vrsqrt.pop %v2204
      %v2206 = vmul.f32 %v2198, %v2205
      %v2208 = vlaneseq
      %v2209 = vshrl.u32 %v2208, 7
      %v2210 = vsub.s32 0, %v2209
      %v2211 = vrot.slane %v2199, %v2210
      %v2213 = vmul.f32 %v2206, %v2211
      %v2214 = vld [vmem:[%s13] sm:$0xff]
      %v2215 = vld [vmem:[%s13 + $0x8] sm:$0xff]
      %v2216 = vld [vmem:[%s13 + $0x10] sm:$0xff]
      %v2217 = vld [vmem:[%s13 + $0x18] sm:$0xff]
      %v2218 = vld [vmem:[%s13 + $0x20] sm:$0xff]
      %v2219 = vld [vmem:[%s13 + $0x28] sm:$0xff]
      %v2220 = vld [vmem:[%s13 + $0x30] sm:$0xff]
      %v2221 = vld [vmem:[%s13 + $0x38] sm:$0xff]
      %v2222 = vld [vmem:[%s13 + $0x40] sm:$0xff]
      %v2223 = vld [vmem:[%s13 + $0x48] sm:$0xff]
      %v2224 = vld [vmem:[%s13 + $0x50] sm:$0xff]
      %v2225 = vld [vmem:[%s13 + $0x58] sm:$0xff]
      %v2226 = vld [vmem:[%s13 + $0x60] sm:$0xff]
      %v2227 = vld [vmem:[%s13 + $0x68] sm:$0xff]
      %v2228 = vld [vmem:[%s13 + $0x70] sm:$0xff]
      %v2229 = vld [vmem:[%s13 + $0x78] sm:$0xff]
      %v2230 = vpack.c.bf16 %v2213, %v2213
      %v2247 = vunpack.c.l.b16 %v2214
      %v2248 = vunpack.c.h.b16 %v2214
      %v2249 = vunpack.c.l.b16 %v2215
      %v2250 = vunpack.c.h.b16 %v2215
      %v2251 = vunpack.c.l.b16 %v2216
      %v2252 = vunpack.c.h.b16 %v2216
      %v2253 = vunpack.c.l.b16 %v2217
      %v2254 = vunpack.c.h.b16 %v2217
      %v2255 = vunpack.c.l.b16 %v2218
      %v2256 = vunpack.c.h.b16 %v2218
      %v2257 = vunpack.c.l.b16 %v2219
      %v2258 = vunpack.c.h.b16 %v2219
      %v2259 = vunpack.c.l.b16 %v2220
      %v2260 = vunpack.c.h.b16 %v2220
      %v2261 = vunpack.c.l.b16 %v2221
      %v2262 = vunpack.c.h.b16 %v2221
      %v2263 = vunpack.c.l.b16 %v2222
      %v2264 = vunpack.c.h.b16 %v2222
      %v2265 = vunpack.c.l.b16 %v2223
      %v2266 = vunpack.c.h.b16 %v2223
      %v2267 = vunpack.c.l.b16 %v2224
      %v2268 = vunpack.c.h.b16 %v2224
      %v2269 = vunpack.c.l.b16 %v2225
      %v2270 = vunpack.c.h.b16 %v2225
      %v2271 = vunpack.c.l.b16 %v2226
      %v2272 = vunpack.c.h.b16 %v2226
      %v2273 = vunpack.c.l.b16 %v2227
      %v2274 = vunpack.c.h.b16 %v2227
      %v2275 = vunpack.c.l.b16 %v2228
      %v2276 = vunpack.c.h.b16 %v2228
      %v2277 = vunpack.c.l.b16 %v2229
      %v2278 = vunpack.c.h.b16 %v2229
      %v2279 = vpack.c.b16 %v2249, %v2247
      %v2280 = vpack.c.b16 %v2250, %v2248
      %v2281 = vpack.c.b16 %v2253, %v2251
      %v2282 = vpack.c.b16 %v2254, %v2252
      %v2283 = vpack.c.b16 %v2257, %v2255
      %v2284 = vpack.c.b16 %v2258, %v2256
      %v2285 = vpack.c.b16 %v2261, %v2259
      %v2286 = vpack.c.b16 %v2262, %v2260
      %v2287 = vpack.c.b16 %v2265, %v2263
      %v2288 = vpack.c.b16 %v2266, %v2264
      %v2289 = vpack.c.b16 %v2269, %v2267
      %v2290 = vpack.c.b16 %v2270, %v2268
      %v2291 = vpack.c.b16 %v2273, %v2271
      %v2292 = vpack.c.b16 %v2274, %v2272
      %v2293 = vpack.c.b16 %v2277, %v2275
      %v2294 = vpack.c.b16 %v2278, %v2276
      %2311 = vmatprep.subr.bf16.mxu0 %v2280
      %2312 = vmatpush1.bf16.msra.mxu0 %v2279
      %2313 = vmatprep.subr.bf16.mxu0 %v2282
      %2314 = vmatpush1.bf16.msra.mxu0 %v2281
      %2315 = vmatprep.subr.bf16.mxu0 %v2284
      %2316 = vmatpush1.bf16.msra.mxu0 %v2283
      %2317 = vmatprep.subr.bf16.mxu0 %v2286
      %2318 = vmatpush1.bf16.msra.mxu0 %v2285
      %2319 = vmatprep.subr.bf16.mxu0 %v2288
      %2320 = vmatpush1.bf16.msra.mxu0 %v2287
      %2321 = vmatprep.subr.bf16.mxu0 %v2290
      %2322 = vmatpush1.bf16.msra.mxu0 %v2289
      %2323 = vmatprep.subr.bf16.mxu0 %v2292
      %2324 = vmatpush1.bf16.msra.mxu0 %v2291
      %2325 = vmatprep.subr.bf16.mxu0 %v2294
      %2326 = vmatpush1.bf16.msra.mxu0 %v2293
      %2327 = vmatprep.subr.bf16.mxu0 0
      %2328 = vmatpush1.bf16.msra.mxu0 0
      %2329 = vmatprep.subr.bf16.mxu0 0
      %2330 = vmatpush1.bf16.msra.mxu0 0
      %2331 = vmatprep.subr.bf16.mxu0 0
      %2332 = vmatpush1.bf16.msra.mxu0 0
      %2333 = vmatprep.subr.bf16.mxu0 0
      %2334 = vmatpush1.bf16.msra.mxu0 0
      %2335 = vmatprep.subr.bf16.mxu0 0
      %2336 = vmatpush1.bf16.msra.mxu0 0
      %2337 = vmatprep.subr.bf16.mxu0 0
      %2338 = vmatpush1.bf16.msra.mxu0 0
      %2339 = vmatprep.subr.bf16.mxu0 0
      %2340 = vmatpush1.bf16.msra.mxu0 0
      %2341 = vmatprep.subr.bf16.mxu0 0
      %2342 = vmatpush1.bf16.msra.mxu0 0
      %2343 = vmatprep.mubr.bf16.mxu0 0
      %2344 = vmatmul.mubr.bf16.gmra.mrb[0].mxu0 %v2230
      %v2345 = vpop.f32.mrb[0].mxu0
      %v2346 = vadd.f32 0.0, %v2345
      %v2347 = vpop.f32.mrb[0].mxu0
      %v2348 = vadd.f32 0.0, %v2347
      %v2349 = vpop.f32.mrb[0].mxu0
      %v2350 = vpop.f32.mrb[0].mxu0
      %2351 = vdwg.mxu0
      %v2352 = vmax.f32 %v2346, 0.0
      %v2353 = vmax.f32 %v2348, 0.0
      %v2354 = vld [vmem:[%s14] sm:$0xf]
      %v2355 = vld [vmem:[%s14 + $0x4] sm:$0xf]
      %v2356 = vld [vmem:[%s14 + $0x8] sm:$0xf]
      %v2357 = vld [vmem:[%s14 + $0xc] sm:$0xf]
      %v2358 = vld [vmem:[%s14 + $0x10] sm:$0xf]
      %v2359 = vld [vmem:[%s14 + $0x14] sm:$0xf]
      %v2360 = vld [vmem:[%s14 + $0x18] sm:$0xf]
      %v2361 = vld [vmem:[%s14 + $0x1c] sm:$0xf]
      %v2362 = vld [vmem:[%s14 + $0x20] sm:$0xf]
      %v2363 = vld [vmem:[%s14 + $0x24] sm:$0xf]
      %v2364 = vld [vmem:[%s14 + $0x28] sm:$0xf]
      %v2365 = vld [vmem:[%s14 + $0x2c] sm:$0xf]
      %v2366 = vld [vmem:[%s14 + $0x30] sm:$0xf]
      %v2367 = vld [vmem:[%s14 + $0x34] sm:$0xf]
      %v2368 = vld [vmem:[%s14 + $0x38] sm:$0xf]
      %v2369 = vld [vmem:[%s14 + $0x3c] sm:$0xf]
      %v2370 = vld [vmem:[%s14 + $0x40] sm:$0xf]
      %v2371 = vld [vmem:[%s14 + $0x44] sm:$0xf]
      %v2372 = vld [vmem:[%s14 + $0x48] sm:$0xf]
      %v2373 = vld [vmem:[%s14 + $0x4c] sm:$0xf]
      %v2374 = vld [vmem:[%s14 + $0x50] sm:$0xf]
      %v2375 = vld [vmem:[%s14 + $0x54] sm:$0xf]
      %v2376 = vld [vmem:[%s14 + $0x58] sm:$0xf]
      %v2377 = vld [vmem:[%s14 + $0x5c] sm:$0xf]
      %v2378 = vld [vmem:[%s14 + $0x60] sm:$0xf]
      %v2379 = vld [vmem:[%s14 + $0x64] sm:$0xf]
      %v2380 = vld [vmem:[%s14 + $0x68] sm:$0xf]
      %v2381 = vld [vmem:[%s14 + $0x6c] sm:$0xf]
      %v2382 = vld [vmem:[%s14 + $0x70] sm:$0xf]
      %v2383 = vld [vmem:[%s14 + $0x74] sm:$0xf]
      %v2384 = vld [vmem:[%s14 + $0x78] sm:$0xf]
      %v2385 = vld [vmem:[%s14 + $0x7c] sm:$0xf]
      %v2386 = vpack.c.bf16 %v2352, %v2352
      %v2387 = vpack.c.bf16 %v2353, %v2353
      %v2420 = vunpack.c.l.b16 %v2354
      %v2421 = vunpack.c.l.b16 %v2355
      %v2422 = vunpack.c.l.b16 %v2356
      %v2423 = vunpack.c.l.b16 %v2357
      %v2424 = vunpack.c.l.b16 %v2358
      %v2425 = vunpack.c.l.b16 %v2359
      %v2426 = vunpack.c.l.b16 %v2360
      %v2427 = vunpack.c.l.b16 %v2361
      %v2428 = vunpack.c.l.b16 %v2362
      %v2429 = vunpack.c.l.b16 %v2363
      %v2430 = vunpack.c.l.b16 %v2364
      %v2431 = vunpack.c.l.b16 %v2365
      %v2432 = vunpack.c.l.b16 %v2366
      %v2433 = vunpack.c.l.b16 %v2367
      %v2434 = vunpack.c.l.b16 %v2368
      %v2435 = vunpack.c.l.b16 %v2369
      %v2436 = vunpack.c.l.b16 %v2370
      %v2437 = vunpack.c.l.b16 %v2371
      %v2438 = vunpack.c.l.b16 %v2372
      %v2439 = vunpack.c.l.b16 %v2373
      %v2440 = vunpack.c.l.b16 %v2374
      %v2441 = vunpack.c.l.b16 %v2375
      %v2442 = vunpack.c.l.b16 %v2376
      %v2443 = vunpack.c.l.b16 %v2377
      %v2444 = vunpack.c.l.b16 %v2378
      %v2445 = vunpack.c.l.b16 %v2379
      %v2446 = vunpack.c.l.b16 %v2380
      %v2447 = vunpack.c.l.b16 %v2381
      %v2448 = vunpack.c.l.b16 %v2382
      %v2449 = vunpack.c.l.b16 %v2383
      %v2450 = vunpack.c.l.b16 %v2384
      %v2451 = vunpack.c.l.b16 %v2385
      %v2452 = vpack.c.b16 %v2421, %v2420
      %v2453 = vpack.c.b16 %v2423, %v2422
      %v2454 = vpack.c.b16 %v2425, %v2424
      %v2455 = vpack.c.b16 %v2427, %v2426
      %v2456 = vpack.c.b16 %v2429, %v2428
      %v2457 = vpack.c.b16 %v2431, %v2430
      %v2458 = vpack.c.b16 %v2433, %v2432
      %v2459 = vpack.c.b16 %v2435, %v2434
      %v2460 = vpack.c.b16 %v2437, %v2436
      %v2461 = vpack.c.b16 %v2439, %v2438
      %v2462 = vpack.c.b16 %v2441, %v2440
      %v2463 = vpack.c.b16 %v2443, %v2442
      %v2464 = vpack.c.b16 %v2445, %v2444
      %v2465 = vpack.c.b16 %v2447, %v2446
      %v2466 = vpack.c.b16 %v2449, %v2448
      %v2467 = vpack.c.b16 %v2451, %v2450
      %2484 = vmatprep.subr.bf16.mxu0 0
      %2485 = vmatpush1.bf16.msra.mxu0 %v2452
      %2486 = vmatprep.subr.bf16.mxu0 0
      %2487 = vmatpush1.bf16.msra.mxu0 %v2453
      %2488 = vmatprep.subr.bf16.mxu0 0
      %2489 = vmatpush1.bf16.msra.mxu0 %v2454
      %2490 = vmatprep.subr.bf16.mxu0 0
      %2491 = vmatpush1.bf16.msra.mxu0 %v2455
      %2492 = vmatprep.subr.bf16.mxu0 0
      %2493 = vmatpush1.bf16.msra.mxu0 %v2456
      %2494 = vmatprep.subr.bf16.mxu0 0
      %2495 = vmatpush1.bf16.msra.mxu0 %v2457
      %2496 = vmatprep.subr.bf16.mxu0 0
      %2497 = vmatpush1.bf16.msra.mxu0 %v2458
      %2498 = vmatprep.subr.bf16.mxu0 0
      %2499 = vmatpush1.bf16.msra.mxu0 %v2459
      %2500 = vmatprep.subr.bf16.mxu0 0
      %2501 = vmatpush1.bf16.msra.mxu0 %v2460
      %2502 = vmatprep.subr.bf16.mxu0 0
      %2503 = vmatpush1.bf16.msra.mxu0 %v2461
      %2504 = vmatprep.subr.bf16.mxu0 0
      %2505 = vmatpush1.bf16.msra.mxu0 %v2462
      %2506 = vmatprep.subr.bf16.mxu0 0
      %2507 = vmatpush1.bf16.msra.mxu0 %v2463
      %2508 = vmatprep.subr.bf16.mxu0 0
      %2509 = vmatpush1.bf16.msra.mxu0 %v2464
      %2510 = vmatprep.subr.bf16.mxu0 0
      %2511 = vmatpush1.bf16.msra.mxu0 %v2465
      %2512 = vmatprep.subr.bf16.mxu0 0
      %2513 = vmatpush1.bf16.msra.mxu0 %v2466
      %2514 = vmatprep.subr.bf16.mxu0 0
      %2515 = vmatpush1.bf16.msra.mxu0 %v2467
      %2516 = vmatprep.mubr.bf16.mxu0 %v2387
      %2517 = vmatmul.mubr.bf16.gmra.mrb[0].mxu0 %v2386
      %v2518 = vpop.f32.mrb[0].mxu0
      %v2519 = vadd.f32 0.0, %v2518
      %v2520 = vpop.f32.mrb[0].mxu0
      %v2521 = vpop.f32.mrb[0].mxu0
      %v2522 = vpop.f32.mrb[0].mxu0
      %2523 = vdwg.mxu0
      %v2524 = vadd.f32 %v2198, %v2519
      %2525 = vst [vmem:[%s523] sm:$0xff] %v2524
      %p2526 = scmp.lt.s32.totalorder %s26, 1
      %s2527 = scalar_select %p2526, %s26, 1
      %s2528 = smul.addr %s2527, 8
      %s2529 = scalar_lea.vmem %s15, %s2528
      // Predicated region
      $region81: #{generator_forward.7} parent=79 // pred_check
        %p2530 = pneg %p374
      $region82: #{generator_forward.7} parent=79 // pred_check_branch
        %2532 = sbr.rel (%p2530) target = $region84
      $region83: #{generator_forward.7} parent=79 // pred_region
        _
      $region84: #{generator_forward.7} parent=79 // pred_fallthru
        _
    $region80: #{generator_forward.7} parent=5 // pred_fallthru
      _
    %p2533 = scmp.le.s32.totalorder 2, %s21
    // Predicated region
    $region85: #{generator_forward.7} parent=5 // pred_check
      %p2534 = pneg %p2533
    $region86: #{generator_forward.7} parent=5 // pred_check_branch
      %2536 = sbr.rel (%p2534) target = $region88
    $region87: #{generator_forward.7} parent=5 // pred_region
      %s2537 = ssub.s32 %s21, 2
      // Predicated region
      $region89: #{generator_forward.7} parent=87 // pred_check
        %p2538 = pneg %p380
      $region90: #{generator_forward.7} parent=87 // pred_check_branch
        %2540 = sbr.rel (%p2538) target = $region92
      $region91: #{generator_forward.7} parent=87 // pred_region
        %p2541 = scmp.lt.s32.totalorder %s27, 1
        %s2542 = scalar_select %p2541, %s27, 1
        %s2543 = smul.addr %s2542, 8
        %s2544 = scalar_lea.vmem %s15, %s2543
      $region92: #{generator_forward.7} parent=87 // pred_fallthru
        _
    $region88: #{generator_forward.7} parent=5 // pred_fallthru
      _
  $region6: #{generator_forward.7} parent=0 // loop_footer
    %s25 = sadd.s32 1, %s21
  $region7: #{generator_forward.7} parent=0 // loop_footer_branch
    %20 = sbr.rel target = $region3
  $region8: #{generator_forward.7} parent=0 // loop_exit
    _

</llo_original>
